<compile_context>
chip_gen: v7x
topology: tpu7x:2x2x1
jax: 0.10.0
libtpu: 0.0.40
codegen_flags: <defaults>
</compile_context>

<pallas_src>
import jax
import jax.numpy as jnp
import numpy as np
from jax.experimental import pallas as pl
from jax.experimental.pallas import tpu as pltpu


def _round_up(x, m):
    return (x + m - 1) // m * m


# --------------------------------------------------------------------------
# Kernel
# --------------------------------------------------------------------------
def make_rnn_seq_kernel(vocab_size, hidden_pad, seq_len, unroll):
    """All `seq_len` GRU steps run inside ONE grid step; weights stay resident."""
    hp = hidden_pad

    def kernel(toks_ref,     # SMEM (T,)         int32 token ids (scalar prefetch)
               emb_ref,      # VMEM (Vp, Hp)     embedding table (compute dtype)
               h0_ref,       # VMEM (1, Hp)      initial hidden state (f32)
               wxh_ref,      # VMEM (2Hp, 4Hp)   fused [x|h] -> [r|z|n_in|n_h] weights
               bias_ref,     # VMEM (1, 4Hp)     [b_ir+b_hr | b_iz+b_hz | b_in | b_hn] (f32)
               wdec_ref,     # VMEM (Hp, Op)     decoder weight (compute dtype)
               bdec_ref,     # VMEM (1, Op)      decoder bias (f32)
               logits_ref,   # out  (T, Op)      all per-step logits (f32)
               hout_ref):    # out  (1, Hp)      final hidden state (f32)
        cdt = wxh_ref.dtype  # compute dtype of the matmul operands (f32 or bf16)

        def step(t, h):
            # Clamp token id so an out-of-range id can never read stray VMEM.
            tok = jnp.clip(toks_ref[t], 0, vocab_size - 1)
            x = emb_ref[pl.ds(tok, 1), :]                       # (1, Hp) embedding row

            # Single fused gate matmul: [x | h] @ [r | z | n_in | n_h].
            xh = jnp.concatenate([x, h.astype(cdt)], axis=-1)   # (1, 2Hp)
            g = jnp.dot(xh, wxh_ref[...],
                        preferred_element_type=jnp.float32)     # (1, 4Hp) f32
            g = g + bias_ref[...]

            # PyTorch GRU cell equations (gate elementwise math kept in f32).
            rz = jax.nn.sigmoid(g[:, :2 * hp])
            r = rz[:, :hp]
            z = rz[:, hp:]
            n = jnp.tanh(g[:, 2 * hp:3 * hp] + r * g[:, 3 * hp:])
            h_new = (1.0 - z) * n + z * h

            # Decoder (off the serial recurrence path -> overlaps when unrolled).
            dec = jnp.dot(h_new.astype(cdt), wdec_ref[...],
                          preferred_element_type=jnp.float32) + bdec_ref[...]
            logits_ref[pl.ds(t, 1), :] = dec
            return h_new

        h_final = jax.lax.fori_loop(0, seq_len, step, h0_ref[...], unroll=unroll)
        hout_ref[...] = h_final

    return kernel


# --------------------------------------------------------------------------
# Host wrappers
# --------------------------------------------------------------------------
def init_params(key, vocab_size, hidden_size, output_size):
    """'Torch-like' parameters: stacked [r,z,n] gate weights, pre-transposed
    so x @ w[g] == W_g x in torch."""
    ks = jax.random.split(key, 7)
    s = 1.0 / np.sqrt(hidden_size)
    emb = jax.random.normal(ks[0], (vocab_size, hidden_size), jnp.float32)
    wih = jax.random.uniform(ks[1], (3, hidden_size, hidden_size), jnp.float32, -s, s)
    whh = jax.random.uniform(ks[2], (3, hidden_size, hidden_size), jnp.float32, -s, s)
    bih = jax.random.uniform(ks[3], (3, 1, hidden_size), jnp.float32, -s, s)
    bhh = jax.random.uniform(ks[4], (3, 1, hidden_size), jnp.float32, -s, s)
    wdec = jax.random.uniform(ks[5], (hidden_size, output_size), jnp.float32, -s, s)
    bdec = jax.random.uniform(ks[6], (1, output_size), jnp.float32, -s, s)
    return emb, wih, whh, bih, bhh, wdec, bdec


def pack_params(params, compute_dtype=jnp.float32):
    """Pad H/O to multiples of 128 (lane-dense), stack wih/whh vertically and
    fuse gate columns as [r | z | n_input | n_hidden], and fold biases.
    Weights (matmul operands) are cast to `compute_dtype`; biases stay f32."""
    emb, wih, whh, bih, bhh, wdec, bdec = params
    V, H = emb.shape
    O = wdec.shape[1]
    Hp = _round_up(H, 128)
    Op = _round_up(O, 128)
    Vp = _round_up(V, 8)

    def pad2(a, rows, cols):
        return jnp.pad(a, ((0, rows - a.shape[0]), (0, cols - a.shape[1])))

    zeros_hp = jnp.zeros((Hp, Hp), jnp.float32)
    # Column blocks of the (2Hp, 4Hp) fused slab (top rows = x, bottom rows = h).
    col_r = jnp.concatenate([pad2(wih[0], Hp, Hp), pad2(whh[0], Hp, Hp)], axis=0)
    col_z = jnp.concatenate([pad2(wih[1], Hp, Hp), pad2(whh[1], Hp, Hp)], axis=0)
    col_ni = jnp.concatenate([pad2(wih[2], Hp, Hp), zeros_hp], axis=0)
    col_nh = jnp.concatenate([zeros_hp, pad2(whh[2], Hp, Hp)], axis=0)
    wxh = jnp.concatenate([col_r, col_z, col_ni, col_nh], axis=1)   # (2Hp, 4Hp)

    bias = jnp.concatenate([pad2(bih[0] + bhh[0], 1, Hp),
                            pad2(bih[1] + bhh[1], 1, Hp),
                            pad2(bih[2], 1, Hp),
                            pad2(bhh[2], 1, Hp)], axis=1)           # (1, 4Hp) f32

    emb_p = pad2(emb, Vp, Hp).astype(compute_dtype)                  # (Vp, Hp)
    wxh = wxh.astype(compute_dtype)
    wdec_p = pad2(wdec, Hp, Op).astype(compute_dtype)                # (Hp, Op)
    bdec_p = pad2(bdec, 1, Op)                                       # (1, Op) f32

    packed = (emb_p, wxh, bias, wdec_p, bdec_p)
    dims = (H, O, V, Hp, Op)
    return packed, dims


def rnn_forward_seq(tokens, hidden, packed_params, dims, *, unroll=True):
    """Run T GRU+decoder steps inside a single pallas_call / single grid step.

    tokens: (T,) int32, hidden: (1, 1, H).
    Returns (logits (T, O), hidden' (1, 1, H)).
    """
    emb_p, wxh, bias, wdec, bdec = packed_params
    H, O, V, Hp, Op = dims
    T = int(tokens.shape[0])

    toks = jnp.asarray(tokens, jnp.int32).reshape(T)
    h0 = jnp.zeros((1, Hp), jnp.float32).at[:, :H].set(
        hidden.reshape(1, H).astype(jnp.float32))

    kernel = make_rnn_seq_kernel(V, Hp, T, unroll)

    const = lambda g, tk: (0, 0)            # weights: DMA'd once, stay resident
    grid_spec = pltpu.PrefetchScalarGridSpec(
        num_scalar_prefetch=1,
        grid=(1,),                          # whole decode in one grid step
        in_specs=[
            pl.BlockSpec(emb_p.shape, const),    # embedding table
            pl.BlockSpec((1, Hp), const),        # h0
            pl.BlockSpec(wxh.shape, const),      # fused [x|h]->gates weights
            pl.BlockSpec(bias.shape, const),     # folded gate biases
            pl.BlockSpec(wdec.shape, const),     # decoder weight
            pl.BlockSpec(bdec.shape, const),     # decoder bias
        ],
        out_specs=(
            pl.BlockSpec((T, Op), const),        # all logits, one writeback
            pl.BlockSpec((1, Hp), const),        # final hidden
        ),
    )

    # Advisory cost estimate (helps XLA schedule this call in larger graphs).
    flops = T * (2 * (2 * Hp) * (4 * Hp) + 2 * Hp * Op)
    transcendentals = T * 3 * Hp
    bytes_accessed = (sum(int(np.prod(a.shape)) * a.dtype.itemsize
                          for a in (emb_p, wxh, bias, wdec, bdec))
                      + T * 4 + Hp * 4            # tokens + h0 in
                      + T * Op * 4 + Hp * 4)      # logits + hidden out
    cost = pl.CostEstimate(flops=flops, transcendentals=transcendentals,
                           bytes_accessed=bytes_accessed)

    logits_p, h_p = pl.pallas_call(
        kernel,
        grid_spec=grid_spec,
        out_shape=(jax.ShapeDtypeStruct((T, Op), jnp.float32),
                   jax.ShapeDtypeStruct((1, Hp), jnp.float32)),
        compiler_params=pltpu.CompilerParams(
            dimension_semantics=("arbitrary",)),   # sequential recurrence
        cost_estimate=cost,
    )(toks, emb_p, h0, wxh, bias, wdec, bdec)

    logits = logits_p[:, :O]
    h_new = h_p[:, :H].reshape(1, 1, H)
    return logits, h_new


def rnn_forward(token, hidden, packed_params, dims):
    """Exact module forward semantics: one token step -> (logits (1, O), hidden')."""
    toks = jnp.asarray(token, jnp.int32).reshape(1)
    return rnn_forward_seq(toks, hidden, packed_params, dims)


def rnn_forward_ref(token, hidden, params):
    """Plain-JAX reference mirroring the PyTorch module forward (one step)."""
    emb, wih, whh, bih, bhh, wdec, bdec = params
    H = emb.shape[1]
    x = emb[token].reshape(1, H)
    h = hidden.reshape(1, H)
    gi = [x @ wih[g] + bih[g] for g in range(3)]
    gh = [h @ whh[g] + bhh[g] for g in range(3)]
    r = jax.nn.sigmoid(gi[0] + gh[0])
    z = jax.nn.sigmoid(gi[1] + gh[1])
    n = jnp.tanh(gi[2] + r * gh[2])
    h_new = (1.0 - z) * n + z * h
    logits = h_new @ wdec + bdec
    return logits, h_new.reshape(1, 1, H)


# --------------------------------------------------------------------------
# Demo / correctness check
# --------------------------------------------------------------------------
if __name__ == "__main__":
    vocab_size = 64      # input_size == output_size (char-level RNN)
    hidden_size = 32
    output_size = 64
    seq_len = 8          # decode 8 tokens inside ONE grid step

    key = jax.random.PRNGKey(0)
    params = init_params(key, vocab_size, hidden_size, output_size)

    tokens = jax.random.randint(jax.random.PRNGKey(1), (seq_len,), 0,
                                vocab_size, dtype=jnp.int32)
    hidden0 = jnp.zeros((1, 1, hidden_size), jnp.float32)   # init_hidden()

    # Reference: loop the single-step module forward in plain JAX.
    h_ref = hidden0
    ref_logits = []
    for i in range(seq_len):
        lg, h_ref = rnn_forward_ref(tokens[i], h_ref, params)
        ref_logits.append(lg)
    ref_logits = jnp.concatenate(ref_logits, axis=0)

    # --- float32 path: tight tolerance -----------------------------------
    packed_f32, dims = pack_params(params, jnp.float32)
    logits, h_new = rnn_forward_seq(tokens, hidden0, packed_f32, dims)
    logits = jax.block_until_ready(logits)
    h_new = jax.block_until_ready(h_new)

    assert logits.shape == (seq_len, output_size)
    assert h_new.shape == (1, 1, hidden_size)
    np.testing.assert_allclose(np.asarray(logits), np.asarray(ref_logits),
                               rtol=5e-5, atol=5e-5)
    np.testing.assert_allclose(np.asarray(h_new), np.asarray(h_ref),
                               rtol=5e-5, atol=5e-5)

    # --- bfloat16 matmul-operand path: loose tolerance --------------------
    packed_bf16, dims_bf16 = pack_params(params, jnp.bfloat16)
    logits_bf, h_bf = rnn_forward_seq(tokens, hidden0, packed_bf16, dims_bf16)
    logits_bf = jax.block_until_ready(logits_bf)
    h_bf = jax.block_until_ready(h_bf)
    np.testing.assert_allclose(np.asarray(logits_bf), np.asarray(ref_logits),
                               rtol=1e-1, atol=1e-1)
    np.testing.assert_allclose(np.asarray(h_bf), np.asarray(h_ref),
                               rtol=1e-1, atol=1e-1)

    # --- single-token call: exactly the PyTorch module's forward signature
    lg1, h1 = rnn_forward(tokens[0], hidden0, packed_f32, dims)
    lg1 = jax.block_until_ready(lg1)
    lg1_ref, h1_ref = rnn_forward_ref(tokens[0], hidden0, params)
    assert lg1.shape == (1, output_size) and h1.shape == (1, 1, hidden_size)
    np.testing.assert_allclose(np.asarray(lg1), np.asarray(lg1_ref),
                               rtol=5e-5, atol=5e-5)
    np.testing.assert_allclose(np.asarray(h1), np.asarray(h1_ref),
                               rtol=5e-5, atol=5e-5)

    print("KERNEL_OK")
</pallas_src>

<mosaic_0001>
module attributes {stable_mosaic.version = 11 : i64} {
  func.func @kernel(%arg0: i32, %arg1: memref<8xi32, #tpu.memory_space<smem>>, %arg2: memref<64x128xf32, #tpu.memory_space<vmem>>, %arg3: memref<1x128xf32, #tpu.memory_space<vmem>>, %arg4: memref<256x512xf32, #tpu.memory_space<vmem>>, %arg5: memref<1x512xf32, #tpu.memory_space<vmem>>, %arg6: memref<128x128xf32, #tpu.memory_space<vmem>>, %arg7: memref<1x128xf32, #tpu.memory_space<vmem>>, %arg8: memref<8x128xf32, #tpu.memory_space<vmem>>, %arg9: memref<1x128xf32, #tpu.memory_space<vmem>>) attributes {dimension_semantics = [#tpu.dimension_semantics<arbitrary>], iteration_bounds = array<i64: 1>, scalar_prefetch = 1 : i64, scratch_operands = 0 : i64, tpu.core_type = #tpu.core_type<tc>, window_params = [{pipeline_mode = #tpu.pipeline_mode<synchronous>, transform_indices = @transform_0, window_bounds = array<i64: 64, 128>}, {pipeline_mode = #tpu.pipeline_mode<synchronous>, transform_indices = @transform_1, window_bounds = array<i64: 1, 128>}, {pipeline_mode = #tpu.pipeline_mode<synchronous>, transform_indices = @transform_2, window_bounds = array<i64: 256, 512>}, {pipeline_mode = #tpu.pipeline_mode<synchronous>, transform_indices = @transform_3, window_bounds = array<i64: 1, 512>}, {pipeline_mode = #tpu.pipeline_mode<synchronous>, transform_indices = @transform_4, window_bounds = array<i64: 128, 128>}, {pipeline_mode = #tpu.pipeline_mode<synchronous>, transform_indices = @transform_5, window_bounds = array<i64: 1, 128>}, {pipeline_mode = #tpu.pipeline_mode<synchronous>, transform_indices = @transform_6, window_bounds = array<i64: 8, 128>}, {pipeline_mode = #tpu.pipeline_mode<synchronous>, transform_indices = @transform_7, window_bounds = array<i64: 1, 128>}]} {
    %c0 = arith.constant 0 : index
    %c0_0 = arith.constant 0 : index
    %0 = vector.load %arg3[%c0, %c0_0] : memref<1x128xf32, #tpu.memory_space<vmem>>, vector<1x128xf32>
    %c0_i32 = arith.constant 0 : i32
    %1 = arith.index_cast %c0_i32 : i32 to index
    %2 = memref.load %arg1[%1] : memref<8xi32, #tpu.memory_space<smem>>
    %c0_i32_1 = arith.constant 0 : i32
    %c63_i32 = arith.constant 63 : i32
    %3 = arith.maxsi %c0_i32_1, %2 : i32
    %4 = arith.minsi %c63_i32, %3 : i32
    %5 = arith.index_cast %4 : i32 to index
    %c0_2 = arith.constant 0 : index
    %6 = vector.load %arg2[%5, %c0_2] : memref<64x128xf32, #tpu.memory_space<vmem>>, vector<1x128xf32>
    %7 = tpu.concatenate %6, %0 in 1 : vector<1x128xf32>, vector<1x128xf32> -> vector<1x256xf32>
    %c0_3 = arith.constant 0 : index
    %c0_4 = arith.constant 0 : index
    %8 = vector.load %arg4[%c0_3, %c0_4] : memref<256x512xf32, #tpu.memory_space<vmem>>, vector<256x512xf32>
    %cst = arith.constant dense<0.000000e+00> : vector<1x512xf32>
    %9 = tpu.matmul %7, %8, %cst {dimension_numbers = #tpu.dot_dimension_numbers<[1], [0], [0], [1], [0, 0, 1, 1], [], []>} : vector<1x256xf32>, vector<256x512xf32>, vector<1x512xf32> -> vector<1x512xf32>
    %c0_5 = arith.constant 0 : index
    %c0_6 = arith.constant 0 : index
    %10 = vector.load %arg5[%c0_5, %c0_6] : memref<1x512xf32, #tpu.memory_space<vmem>>, vector<1x512xf32>
    %11 = arith.addf %9, %10 : vector<1x512xf32>
    %12 = vector.extract_strided_slice %11 {offsets = [0, 0], sizes = [1, 256], strides = [1, 1]} : vector<1x512xf32> to vector<1x256xf32>
    %13 = arith.negf %12 : vector<1x256xf32>
    %14 = math.exp %13 : vector<1x256xf32>
    %cst_7 = arith.constant 1.000000e+00 : f32
    %15 = vector.broadcast %cst_7 : f32 to vector<1x256xf32>
    %16 = arith.addf %15, %14 : vector<1x256xf32>
    %17 = arith.divf %15, %16 : vector<1x256xf32>
    %18 = vector.extract_strided_slice %17 {offsets = [0, 0], sizes = [1, 128], strides = [1, 1]} : vector<1x256xf32> to vector<1x128xf32>
    %19 = vector.extract_strided_slice %17 {offsets = [0, 128], sizes = [1, 128], strides = [1, 1]} : vector<1x256xf32> to vector<1x128xf32>
    %20 = vector.extract_strided_slice %11 {offsets = [0, 256], sizes = [1, 128], strides = [1, 1]} : vector<1x512xf32> to vector<1x128xf32>
    %21 = vector.extract_strided_slice %11 {offsets = [0, 384], sizes = [1, 128], strides = [1, 1]} : vector<1x512xf32> to vector<1x128xf32>
    %22 = arith.mulf %18, %21 : vector<1x128xf32>
    %23 = arith.addf %20, %22 : vector<1x128xf32>
    %24 = math.tanh %23 : vector<1x128xf32>
    %cst_8 = arith.constant 1.000000e+00 : f32
    %25 = vector.broadcast %cst_8 : f32 to vector<1x128xf32>
    %26 = arith.subf %25, %19 : vector<1x128xf32>
    %27 = arith.mulf %26, %24 : vector<1x128xf32>
    %28 = arith.mulf %19, %0 : vector<1x128xf32>
    %29 = arith.addf %27, %28 : vector<1x128xf32>
    %c0_9 = arith.constant 0 : index
    %c0_10 = arith.constant 0 : index
    %30 = vector.load %arg6[%c0_9, %c0_10] : memref<128x128xf32, #tpu.memory_space<vmem>>, vector<128x128xf32>
    %cst_11 = arith.constant dense<0.000000e+00> : vector<1x128xf32>
    %31 = tpu.matmul %29, %30, %cst_11 {dimension_numbers = #tpu.dot_dimension_numbers<[1], [0], [0], [1], [0, 0, 1, 1], [], []>} : vector<1x128xf32>, vector<128x128xf32>, vector<1x128xf32> -> vector<1x128xf32>
    %c0_12 = arith.constant 0 : index
    %c0_13 = arith.constant 0 : index
    %32 = vector.load %arg7[%c0_12, %c0_13] : memref<1x128xf32, #tpu.memory_space<vmem>>, vector<1x128xf32>
    %33 = arith.addf %31, %32 : vector<1x128xf32>
    %34 = arith.index_cast %c0_i32 : i32 to index
    %c0_14 = arith.constant 0 : index
    %35 = vector.load %arg8[%34, %c0_14] : memref<8x128xf32, #tpu.memory_space<vmem>>, vector<1x128xf32>
    tpu.vector_store %arg8[%34, %c0_14], %33 {strides = array<i32>} : memref<8x128xf32, #tpu.memory_space<vmem>>, vector<1x128xf32>,
    %c1_i32 = arith.constant 1 : i32
    %36 = arith.index_cast %c1_i32 : i32 to index
    %37 = memref.load %arg1[%36] : memref<8xi32, #tpu.memory_space<smem>>
    %c0_i32_15 = arith.constant 0 : i32
    %c63_i32_16 = arith.constant 63 : i32
    %38 = arith.maxsi %c0_i32_15, %37 : i32
    %39 = arith.minsi %c63_i32_16, %38 : i32
    %40 = arith.index_cast %39 : i32 to index
    %c0_17 = arith.constant 0 : index
    %41 = vector.load %arg2[%40, %c0_17] : memref<64x128xf32, #tpu.memory_space<vmem>>, vector<1x128xf32>
    %42 = tpu.concatenate %41, %29 in 1 : vector<1x128xf32>, vector<1x128xf32> -> vector<1x256xf32>
    %c0_18 = arith.constant 0 : index
    %c0_19 = arith.constant 0 : index
    %43 = vector.load %arg4[%c0_18, %c0_19] : memref<256x512xf32, #tpu.memory_space<vmem>>, vector<256x512xf32>
    %cst_20 = arith.constant dense<0.000000e+00> : vector<1x512xf32>
    %44 = tpu.matmul %42, %43, %cst_20 {dimension_numbers = #tpu.dot_dimension_numbers<[1], [0], [0], [1], [0, 0, 1, 1], [], []>} : vector<1x256xf32>, vector<256x512xf32>, vector<1x512xf32> -> vector<1x512xf32>
    %c0_21 = arith.constant 0 : index
    %c0_22 = arith.constant 0 : index
    %45 = vector.load %arg5[%c0_21, %c0_22] : memref<1x512xf32, #tpu.memory_space<vmem>>, vector<1x512xf32>
    %46 = arith.addf %44, %45 : vector<1x512xf32>
    %47 = vector.extract_strided_slice %46 {offsets = [0, 0], sizes = [1, 256], strides = [1, 1]} : vector<1x512xf32> to vector<1x256xf32>
    %48 = arith.negf %47 : vector<1x256xf32>
    %49 = math.exp %48 : vector<1x256xf32>
    %cst_23 = arith.constant 1.000000e+00 : f32
    %50 = vector.broadcast %cst_23 : f32 to vector<1x256xf32>
    %51 = arith.addf %50, %49 : vector<1x256xf32>
    %52 = arith.divf %50, %51 : vector<1x256xf32>
    %53 = vector.extract_strided_slice %52 {offsets = [0, 0], sizes = [1, 128], strides = [1, 1]} : vector<1x256xf32> to vector<1x128xf32>
    %54 = vector.extract_strided_slice %52 {offsets = [0, 128], sizes = [1, 128], strides = [1, 1]} : vector<1x256xf32> to vector<1x128xf32>
    %55 = vector.extract_strided_slice %46 {offsets = [0, 256], sizes = [1, 128], strides = [1, 1]} : vector<1x512xf32> to vector<1x128xf32>
    %56 = vector.extract_strided_slice %46 {offsets = [0, 384], sizes = [1, 128], strides = [1, 1]} : vector<1x512xf32> to vector<1x128xf32>
    %57 = arith.mulf %53, %56 : vector<1x128xf32>
    %58 = arith.addf %55, %57 : vector<1x128xf32>
    %59 = math.tanh %58 : vector<1x128xf32>
    %cst_24 = arith.constant 1.000000e+00 : f32
    %60 = vector.broadcast %cst_24 : f32 to vector<1x128xf32>
    %61 = arith.subf %60, %54 : vector<1x128xf32>
    %62 = arith.mulf %61, %59 : vector<1x128xf32>
    %63 = arith.mulf %54, %29 : vector<1x128xf32>
    %64 = arith.addf %62, %63 : vector<1x128xf32>
    %c0_25 = arith.constant 0 : index
    %c0_26 = arith.constant 0 : index
    %65 = vector.load %arg6[%c0_25, %c0_26] : memref<128x128xf32, #tpu.memory_space<vmem>>, vector<128x128xf32>
    %cst_27 = arith.constant dense<0.000000e+00> : vector<1x128xf32>
    %66 = tpu.matmul %64, %65, %cst_27 {dimension_numbers = #tpu.dot_dimension_numbers<[1], [0], [0], [1], [0, 0, 1, 1], [], []>} : vector<1x128xf32>, vector<128x128xf32>, vector<1x128xf32> -> vector<1x128xf32>
    %c0_28 = arith.constant 0 : index
    %c0_29 = arith.constant 0 : index
    %67 = vector.load %arg7[%c0_28, %c0_29] : memref<1x128xf32, #tpu.memory_space<vmem>>, vector<1x128xf32>
    %68 = arith.addf %66, %67 : vector<1x128xf32>
    %69 = arith.index_cast %c1_i32 : i32 to index
    %c0_30 = arith.constant 0 : index
    %70 = vector.load %arg8[%69, %c0_30] : memref<8x128xf32, #tpu.memory_space<vmem>>, vector<1x128xf32>
    tpu.vector_store %arg8[%69, %c0_30], %68 {strides = array<i32>} : memref<8x128xf32, #tpu.memory_space<vmem>>, vector<1x128xf32>,
    %c2_i32 = arith.constant 2 : i32
    %71 = arith.index_cast %c2_i32 : i32 to index
    %72 = memref.load %arg1[%71] : memref<8xi32, #tpu.memory_space<smem>>
    %c0_i32_31 = arith.constant 0 : i32
    %c63_i32_32 = arith.constant 63 : i32
    %73 = arith.maxsi %c0_i32_31, %72 : i32
    %74 = arith.minsi %c63_i32_32, %73 : i32
    %75 = arith.index_cast %74 : i32 to index
    %c0_33 = arith.constant 0 : index
    %76 = vector.load %arg2[%75, %c0_33] : memref<64x128xf32, #tpu.memory_space<vmem>>, vector<1x128xf32>
    %77 = tpu.concatenate %76, %64 in 1 : vector<1x128xf32>, vector<1x128xf32> -> vector<1x256xf32>
    %c0_34 = arith.constant 0 : index
    %c0_35 = arith.constant 0 : index
    %78 = vector.load %arg4[%c0_34, %c0_35] : memref<256x512xf32, #tpu.memory_space<vmem>>, vector<256x512xf32>
    %cst_36 = arith.constant dense<0.000000e+00> : vector<1x512xf32>
    %79 = tpu.matmul %77, %78, %cst_36 {dimension_numbers = #tpu.dot_dimension_numbers<[1], [0], [0], [1], [0, 0, 1, 1], [], []>} : vector<1x256xf32>, vector<256x512xf32>, vector<1x512xf32> -> vector<1x512xf32>
    %c0_37 = arith.constant 0 : index
    %c0_38 = arith.constant 0 : index
    %80 = vector.load %arg5[%c0_37, %c0_38] : memref<1x512xf32, #tpu.memory_space<vmem>>, vector<1x512xf32>
    %81 = arith.addf %79, %80 : vector<1x512xf32>
    %82 = vector.extract_strided_slice %81 {offsets = [0, 0], sizes = [1, 256], strides = [1, 1]} : vector<1x512xf32> to vector<1x256xf32>
    %83 = arith.negf %82 : vector<1x256xf32>
    %84 = math.exp %83 : vector<1x256xf32>
    %cst_39 = arith.constant 1.000000e+00 : f32
    %85 = vector.broadcast %cst_39 : f32 to vector<1x256xf32>
    %86 = arith.addf %85, %84 : vector<1x256xf32>
    %87 = arith.divf %85, %86 : vector<1x256xf32>
    %88 = vector.extract_strided_slice %87 {offsets = [0, 0], sizes = [1, 128], strides = [1, 1]} : vector<1x256xf32> to vector<1x128xf32>
    %89 = vector.extract_strided_slice %87 {offsets = [0, 128], sizes = [1, 128], strides = [1, 1]} : vector<1x256xf32> to vector<1x128xf32>
    %90 = vector.extract_strided_slice %81 {offsets = [0, 256], sizes = [1, 128], strides = [1, 1]} : vector<1x512xf32> to vector<1x128xf32>
    %91 = vector.extract_strided_slice %81 {offsets = [0, 384], sizes = [1, 128], strides = [1, 1]} : vector<1x512xf32> to vector<1x128xf32>
    %92 = arith.mulf %88, %91 : vector<1x128xf32>
    %93 = arith.addf %90, %92 : vector<1x128xf32>
    %94 = math.tanh %93 : vector<1x128xf32>
    %cst_40 = arith.constant 1.000000e+00 : f32
    %95 = vector.broadcast %cst_40 : f32 to vector<1x128xf32>
    %96 = arith.subf %95, %89 : vector<1x128xf32>
    %97 = arith.mulf %96, %94 : vector<1x128xf32>
    %98 = arith.mulf %89, %64 : vector<1x128xf32>
    %99 = arith.addf %97, %98 : vector<1x128xf32>
    %c0_41 = arith.constant 0 : index
    %c0_42 = arith.constant 0 : index
    %100 = vector.load %arg6[%c0_41, %c0_42] : memref<128x128xf32, #tpu.memory_space<vmem>>, vector<128x128xf32>
    %cst_43 = arith.constant dense<0.000000e+00> : vector<1x128xf32>
    %101 = tpu.matmul %99, %100, %cst_43 {dimension_numbers = #tpu.dot_dimension_numbers<[1], [0], [0], [1], [0, 0, 1, 1], [], []>} : vector<1x128xf32>, vector<128x128xf32>, vector<1x128xf32> -> vector<1x128xf32>
    %c0_44 = arith.constant 0 : index
    %c0_45 = arith.constant 0 : index
    %102 = vector.load %arg7[%c0_44, %c0_45] : memref<1x128xf32, #tpu.memory_space<vmem>>, vector<1x128xf32>
    %103 = arith.addf %101, %102 : vector<1x128xf32>
    %104 = arith.index_cast %c2_i32 : i32 to index
    %c0_46 = arith.constant 0 : index
    %105 = vector.load %arg8[%104, %c0_46] : memref<8x128xf32, #tpu.memory_space<vmem>>, vector<1x128xf32>
    tpu.vector_store %arg8[%104, %c0_46], %103 {strides = array<i32>} : memref<8x128xf32, #tpu.memory_space<vmem>>, vector<1x128xf32>,
    %c3_i32 = arith.constant 3 : i32
    %106 = arith.index_cast %c3_i32 : i32 to index
    %107 = memref.load %arg1[%106] : memref<8xi32, #tpu.memory_space<smem>>
    %c0_i32_47 = arith.constant 0 : i32
    %c63_i32_48 = arith.constant 63 : i32
    %108 = arith.maxsi %c0_i32_47, %107 : i32
    %109 = arith.minsi %c63_i32_48, %108 : i32
    %110 = arith.index_cast %109 : i32 to index
    %c0_49 = arith.constant 0 : index
    %111 = vector.load %arg2[%110, %c0_49] : memref<64x128xf32, #tpu.memory_space<vmem>>, vector<1x128xf32>
    %112 = tpu.concatenate %111, %99 in 1 : vector<1x128xf32>, vector<1x128xf32> -> vector<1x256xf32>
    %c0_50 = arith.constant 0 : index
    %c0_51 = arith.constant 0 : index
    %113 = vector.load %arg4[%c0_50, %c0_51] : memref<256x512xf32, #tpu.memory_space<vmem>>, vector<256x512xf32>
    %cst_52 = arith.constant dense<0.000000e+00> : vector<1x512xf32>
    %114 = tpu.matmul %112, %113, %cst_52 {dimension_numbers = #tpu.dot_dimension_numbers<[1], [0], [0], [1], [0, 0, 1, 1], [], []>} : vector<1x256xf32>, vector<256x512xf32>, vector<1x512xf32> -> vector<1x512xf32>
    %c0_53 = arith.constant 0 : index
    %c0_54 = arith.constant 0 : index
    %115 = vector.load %arg5[%c0_53, %c0_54] : memref<1x512xf32, #tpu.memory_space<vmem>>, vector<1x512xf32>
    %116 = arith.addf %114, %115 : vector<1x512xf32>
    %117 = vector.extract_strided_slice %116 {offsets = [0, 0], sizes = [1, 256], strides = [1, 1]} : vector<1x512xf32> to vector<1x256xf32>
    %118 = arith.negf %117 : vector<1x256xf32>
    %119 = math.exp %118 : vector<1x256xf32>
    %cst_55 = arith.constant 1.000000e+00 : f32
    %120 = vector.broadcast %cst_55 : f32 to vector<1x256xf32>
    %121 = arith.addf %120, %119 : vector<1x256xf32>
    %122 = arith.divf %120, %121 : vector<1x256xf32>
    %123 = vector.extract_strided_slice %122 {offsets = [0, 0], sizes = [1, 128], strides = [1, 1]} : vector<1x256xf32> to vector<1x128xf32>
    %124 = vector.extract_strided_slice %122 {offsets = [0, 128], sizes = [1, 128], strides = [1, 1]} : vector<1x256xf32> to vector<1x128xf32>
    %125 = vector.extract_strided_slice %116 {offsets = [0, 256], sizes = [1, 128], strides = [1, 1]} : vector<1x512xf32> to vector<1x128xf32>
    %126 = vector.extract_strided_slice %116 {offsets = [0, 384], sizes = [1, 128], strides = [1, 1]} : vector<1x512xf32> to vector<1x128xf32>
    %127 = arith.mulf %123, %126 : vector<1x128xf32>
    %128 = arith.addf %125, %127 : vector<1x128xf32>
    %129 = math.tanh %128 : vector<1x128xf32>
    %cst_56 = arith.constant 1.000000e+00 : f32
    %130 = vector.broadcast %cst_56 : f32 to vector<1x128xf32>
    %131 = arith.subf %130, %124 : vector<1x128xf32>
    %132 = arith.mulf %131, %129 : vector<1x128xf32>
    %133 = arith.mulf %124, %99 : vector<1x128xf32>
    %134 = arith.addf %132, %133 : vector<1x128xf32>
    %c0_57 = arith.constant 0 : index
    %c0_58 = arith.constant 0 : index
    %135 = vector.load %arg6[%c0_57, %c0_58] : memref<128x128xf32, #tpu.memory_space<vmem>>, vector<128x128xf32>
    %cst_59 = arith.constant dense<0.000000e+00> : vector<1x128xf32>
    %136 = tpu.matmul %134, %135, %cst_59 {dimension_numbers = #tpu.dot_dimension_numbers<[1], [0], [0], [1], [0, 0, 1, 1], [], []>} : vector<1x128xf32>, vector<128x128xf32>, vector<1x128xf32> -> vector<1x128xf32>
    %c0_60 = arith.constant 0 : index
    %c0_61 = arith.constant 0 : index
    %137 = vector.load %arg7[%c0_60, %c0_61] : memref<1x128xf32, #tpu.memory_space<vmem>>, vector<1x128xf32>
    %138 = arith.addf %136, %137 : vector<1x128xf32>
    %139 = arith.index_cast %c3_i32 : i32 to index
    %c0_62 = arith.constant 0 : index
    %140 = vector.load %arg8[%139, %c0_62] : memref<8x128xf32, #tpu.memory_space<vmem>>, vector<1x128xf32>
    tpu.vector_store %arg8[%139, %c0_62], %138 {strides = array<i32>} : memref<8x128xf32, #tpu.memory_space<vmem>>, vector<1x128xf32>,
    %c4_i32 = arith.constant 4 : i32
    %141 = arith.index_cast %c4_i32 : i32 to index
    %142 = memref.load %arg1[%141] : memref<8xi32, #tpu.memory_space<smem>>
    %c0_i32_63 = arith.constant 0 : i32
    %c63_i32_64 = arith.constant 63 : i32
    %143 = arith.maxsi %c0_i32_63, %142 : i32
    %144 = arith.minsi %c63_i32_64, %143 : i32
    %145 = arith.index_cast %144 : i32 to index
    %c0_65 = arith.constant 0 : index
    %146 = vector.load %arg2[%145, %c0_65] : memref<64x128xf32, #tpu.memory_space<vmem>>, vector<1x128xf32>
    %147 = tpu.concatenate %146, %134 in 1 : vector<1x128xf32>, vector<1x128xf32> -> vector<1x256xf32>
    %c0_66 = arith.constant 0 : index
    %c0_67 = arith.constant 0 : index
    %148 = vector.load %arg4[%c0_66, %c0_67] : memref<256x512xf32, #tpu.memory_space<vmem>>, vector<256x512xf32>
    %cst_68 = arith.constant dense<0.000000e+00> : vector<1x512xf32>
    %149 = tpu.matmul %147, %148, %cst_68 {dimension_numbers = #tpu.dot_dimension_numbers<[1], [0], [0], [1], [0, 0, 1, 1], [], []>} : vector<1x256xf32>, vector<256x512xf32>, vector<1x512xf32> -> vector<1x512xf32>
    %c0_69 = arith.constant 0 : index
    %c0_70 = arith.constant 0 : index
    %150 = vector.load %arg5[%c0_69, %c0_70] : memref<1x512xf32, #tpu.memory_space<vmem>>, vector<1x512xf32>
    %151 = arith.addf %149, %150 : vector<1x512xf32>
    %152 = vector.extract_strided_slice %151 {offsets = [0, 0], sizes = [1, 256], strides = [1, 1]} : vector<1x512xf32> to vector<1x256xf32>
    %153 = arith.negf %152 : vector<1x256xf32>
    %154 = math.exp %153 : vector<1x256xf32>
    %cst_71 = arith.constant 1.000000e+00 : f32
    %155 = vector.broadcast %cst_71 : f32 to vector<1x256xf32>
    %156 = arith.addf %155, %154 : vector<1x256xf32>
    %157 = arith.divf %155, %156 : vector<1x256xf32>
    %158 = vector.extract_strided_slice %157 {offsets = [0, 0], sizes = [1, 128], strides = [1, 1]} : vector<1x256xf32> to vector<1x128xf32>
    %159 = vector.extract_strided_slice %157 {offsets = [0, 128], sizes = [1, 128], strides = [1, 1]} : vector<1x256xf32> to vector<1x128xf32>
    %160 = vector.extract_strided_slice %151 {offsets = [0, 256], sizes = [1, 128], strides = [1, 1]} : vector<1x512xf32> to vector<1x128xf32>
    %161 = vector.extract_strided_slice %151 {offsets = [0, 384], sizes = [1, 128], strides = [1, 1]} : vector<1x512xf32> to vector<1x128xf32>
    %162 = arith.mulf %158, %161 : vector<1x128xf32>
    %163 = arith.addf %160, %162 : vector<1x128xf32>
    %164 = math.tanh %163 : vector<1x128xf32>
    %cst_72 = arith.constant 1.000000e+00 : f32
    %165 = vector.broadcast %cst_72 : f32 to vector<1x128xf32>
    %166 = arith.subf %165, %159 : vector<1x128xf32>
    %167 = arith.mulf %166, %164 : vector<1x128xf32>
    %168 = arith.mulf %159, %134 : vector<1x128xf32>
    %169 = arith.addf %167, %168 : vector<1x128xf32>
    %c0_73 = arith.constant 0 : index
    %c0_74 = arith.constant 0 : index
    %170 = vector.load %arg6[%c0_73, %c0_74] : memref<128x128xf32, #tpu.memory_space<vmem>>, vector<128x128xf32>
    %cst_75 = arith.constant dense<0.000000e+00> : vector<1x128xf32>
    %171 = tpu.matmul %169, %170, %cst_75 {dimension_numbers = #tpu.dot_dimension_numbers<[1], [0], [0], [1], [0, 0, 1, 1], [], []>} : vector<1x128xf32>, vector<128x128xf32>, vector<1x128xf32> -> vector<1x128xf32>
    %c0_76 = arith.constant 0 : index
    %c0_77 = arith.constant 0 : index
    %172 = vector.load %arg7[%c0_76, %c0_77] : memref<1x128xf32, #tpu.memory_space<vmem>>, vector<1x128xf32>
    %173 = arith.addf %171, %172 : vector<1x128xf32>
    %174 = arith.index_cast %c4_i32 : i32 to index
    %c0_78 = arith.constant 0 : index
    %175 = vector.load %arg8[%174, %c0_78] : memref<8x128xf32, #tpu.memory_space<vmem>>, vector<1x128xf32>
    tpu.vector_store %arg8[%174, %c0_78], %173 {strides = array<i32>} : memref<8x128xf32, #tpu.memory_space<vmem>>, vector<1x128xf32>,
    %c5_i32 = arith.constant 5 : i32
    %176 = arith.index_cast %c5_i32 : i32 to index
    %177 = memref.load %arg1[%176] : memref<8xi32, #tpu.memory_space<smem>>
    %c0_i32_79 = arith.constant 0 : i32
    %c63_i32_80 = arith.constant 63 : i32
    %178 = arith.maxsi %c0_i32_79, %177 : i32
    %179 = arith.minsi %c63_i32_80, %178 : i32
    %180 = arith.index_cast %179 : i32 to index
    %c0_81 = arith.constant 0 : index
    %181 = vector.load %arg2[%180, %c0_81] : memref<64x128xf32, #tpu.memory_space<vmem>>, vector<1x128xf32>
    %182 = tpu.concatenate %181, %169 in 1 : vector<1x128xf32>, vector<1x128xf32> -> vector<1x256xf32>
    %c0_82 = arith.constant 0 : index
    %c0_83 = arith.constant 0 : index
    %183 = vector.load %arg4[%c0_82, %c0_83] : memref<256x512xf32, #tpu.memory_space<vmem>>, vector<256x512xf32>
    %cst_84 = arith.constant dense<0.000000e+00> : vector<1x512xf32>
    %184 = tpu.matmul %182, %183, %cst_84 {dimension_numbers = #tpu.dot_dimension_numbers<[1], [0], [0], [1], [0, 0, 1, 1], [], []>} : vector<1x256xf32>, vector<256x512xf32>, vector<1x512xf32> -> vector<1x512xf32>
    %c0_85 = arith.constant 0 : index
    %c0_86 = arith.constant 0 : index
    %185 = vector.load %arg5[%c0_85, %c0_86] : memref<1x512xf32, #tpu.memory_space<vmem>>, vector<1x512xf32>
    %186 = arith.addf %184, %185 : vector<1x512xf32>
    %187 = vector.extract_strided_slice %186 {offsets = [0, 0], sizes = [1, 256], strides = [1, 1]} : vector<1x512xf32> to vector<1x256xf32>
    %188 = arith.negf %187 : vector<1x256xf32>
    %189 = math.exp %188 : vector<1x256xf32>
    %cst_87 = arith.constant 1.000000e+00 : f32
    %190 = vector.broadcast %cst_87 : f32 to vector<1x256xf32>
    %191 = arith.addf %190, %189 : vector<1x256xf32>
    %192 = arith.divf %190, %191 : vector<1x256xf32>
    %193 = vector.extract_strided_slice %192 {offsets = [0, 0], sizes = [1, 128], strides = [1, 1]} : vector<1x256xf32> to vector<1x128xf32>
    %194 = vector.extract_strided_slice %192 {offsets = [0, 128], sizes = [1, 128], strides = [1, 1]} : vector<1x256xf32> to vector<1x128xf32>
    %195 = vector.extract_strided_slice %186 {offsets = [0, 256], sizes = [1, 128], strides = [1, 1]} : vector<1x512xf32> to vector<1x128xf32>
    %196 = vector.extract_strided_slice %186 {offsets = [0, 384], sizes = [1, 128], strides = [1, 1]} : vector<1x512xf32> to vector<1x128xf32>
    %197 = arith.mulf %193, %196 : vector<1x128xf32>
    %198 = arith.addf %195, %197 : vector<1x128xf32>
    %199 = math.tanh %198 : vector<1x128xf32>
    %cst_88 = arith.constant 1.000000e+00 : f32
    %200 = vector.broadcast %cst_88 : f32 to vector<1x128xf32>
    %201 = arith.subf %200, %194 : vector<1x128xf32>
    %202 = arith.mulf %201, %199 : vector<1x128xf32>
    %203 = arith.mulf %194, %169 : vector<1x128xf32>
    %204 = arith.addf %202, %203 : vector<1x128xf32>
    %c0_89 = arith.constant 0 : index
    %c0_90 = arith.constant 0 : index
    %205 = vector.load %arg6[%c0_89, %c0_90] : memref<128x128xf32, #tpu.memory_space<vmem>>, vector<128x128xf32>
    %cst_91 = arith.constant dense<0.000000e+00> : vector<1x128xf32>
    %206 = tpu.matmul %204, %205, %cst_91 {dimension_numbers = #tpu.dot_dimension_numbers<[1], [0], [0], [1], [0, 0, 1, 1], [], []>} : vector<1x128xf32>, vector<128x128xf32>, vector<1x128xf32> -> vector<1x128xf32>
    %c0_92 = arith.constant 0 : index
    %c0_93 = arith.constant 0 : index
    %207 = vector.load %arg7[%c0_92, %c0_93] : memref<1x128xf32, #tpu.memory_space<vmem>>, vector<1x128xf32>
    %208 = arith.addf %206, %207 : vector<1x128xf32>
    %209 = arith.index_cast %c5_i32 : i32 to index
    %c0_94 = arith.constant 0 : index
    %210 = vector.load %arg8[%209, %c0_94] : memref<8x128xf32, #tpu.memory_space<vmem>>, vector<1x128xf32>
    tpu.vector_store %arg8[%209, %c0_94], %208 {strides = array<i32>} : memref<8x128xf32, #tpu.memory_space<vmem>>, vector<1x128xf32>,
    %c6_i32 = arith.constant 6 : i32
    %211 = arith.index_cast %c6_i32 : i32 to index
    %212 = memref.load %arg1[%211] : memref<8xi32, #tpu.memory_space<smem>>
    %c0_i32_95 = arith.constant 0 : i32
    %c63_i32_96 = arith.constant 63 : i32
    %213 = arith.maxsi %c0_i32_95, %212 : i32
    %214 = arith.minsi %c63_i32_96, %213 : i32
    %215 = arith.index_cast %214 : i32 to index
    %c0_97 = arith.constant 0 : index
    %216 = vector.load %arg2[%215, %c0_97] : memref<64x128xf32, #tpu.memory_space<vmem>>, vector<1x128xf32>
    %217 = tpu.concatenate %216, %204 in 1 : vector<1x128xf32>, vector<1x128xf32> -> vector<1x256xf32>
    %c0_98 = arith.constant 0 : index
    %c0_99 = arith.constant 0 : index
    %218 = vector.load %arg4[%c0_98, %c0_99] : memref<256x512xf32, #tpu.memory_space<vmem>>, vector<256x512xf32>
    %cst_100 = arith.constant dense<0.000000e+00> : vector<1x512xf32>
    %219 = tpu.matmul %217, %218, %cst_100 {dimension_numbers = #tpu.dot_dimension_numbers<[1], [0], [0], [1], [0, 0, 1, 1], [], []>} : vector<1x256xf32>, vector<256x512xf32>, vector<1x512xf32> -> vector<1x512xf32>
    %c0_101 = arith.constant 0 : index
    %c0_102 = arith.constant 0 : index
    %220 = vector.load %arg5[%c0_101, %c0_102] : memref<1x512xf32, #tpu.memory_space<vmem>>, vector<1x512xf32>
    %221 = arith.addf %219, %220 : vector<1x512xf32>
    %222 = vector.extract_strided_slice %221 {offsets = [0, 0], sizes = [1, 256], strides = [1, 1]} : vector<1x512xf32> to vector<1x256xf32>
    %223 = arith.negf %222 : vector<1x256xf32>
    %224 = math.exp %223 : vector<1x256xf32>
    %cst_103 = arith.constant 1.000000e+00 : f32
    %225 = vector.broadcast %cst_103 : f32 to vector<1x256xf32>
    %226 = arith.addf %225, %224 : vector<1x256xf32>
    %227 = arith.divf %225, %226 : vector<1x256xf32>
    %228 = vector.extract_strided_slice %227 {offsets = [0, 0], sizes = [1, 128], strides = [1, 1]} : vector<1x256xf32> to vector<1x128xf32>
    %229 = vector.extract_strided_slice %227 {offsets = [0, 128], sizes = [1, 128], strides = [1, 1]} : vector<1x256xf32> to vector<1x128xf32>
    %230 = vector.extract_strided_slice %221 {offsets = [0, 256], sizes = [1, 128], strides = [1, 1]} : vector<1x512xf32> to vector<1x128xf32>
    %231 = vector.extract_strided_slice %221 {offsets = [0, 384], sizes = [1, 128], strides = [1, 1]} : vector<1x512xf32> to vector<1x128xf32>
    %232 = arith.mulf %228, %231 : vector<1x128xf32>
    %233 = arith.addf %230, %232 : vector<1x128xf32>
    %234 = math.tanh %233 : vector<1x128xf32>
    %cst_104 = arith.constant 1.000000e+00 : f32
    %235 = vector.broadcast %cst_104 : f32 to vector<1x128xf32>
    %236 = arith.subf %235, %229 : vector<1x128xf32>
    %237 = arith.mulf %236, %234 : vector<1x128xf32>
    %238 = arith.mulf %229, %204 : vector<1x128xf32>
    %239 = arith.addf %237, %238 : vector<1x128xf32>
    %c0_105 = arith.constant 0 : index
    %c0_106 = arith.constant 0 : index
    %240 = vector.load %arg6[%c0_105, %c0_106] : memref<128x128xf32, #tpu.memory_space<vmem>>, vector<128x128xf32>
    %cst_107 = arith.constant dense<0.000000e+00> : vector<1x128xf32>
    %241 = tpu.matmul %239, %240, %cst_107 {dimension_numbers = #tpu.dot_dimension_numbers<[1], [0], [0], [1], [0, 0, 1, 1], [], []>} : vector<1x128xf32>, vector<128x128xf32>, vector<1x128xf32> -> vector<1x128xf32>
    %c0_108 = arith.constant 0 : index
    %c0_109 = arith.constant 0 : index
    %242 = vector.load %arg7[%c0_108, %c0_109] : memref<1x128xf32, #tpu.memory_space<vmem>>, vector<1x128xf32>
    %243 = arith.addf %241, %242 : vector<1x128xf32>
    %244 = arith.index_cast %c6_i32 : i32 to index
    %c0_110 = arith.constant 0 : index
    %245 = vector.load %arg8[%244, %c0_110] : memref<8x128xf32, #tpu.memory_space<vmem>>, vector<1x128xf32>
    tpu.vector_store %arg8[%244, %c0_110], %243 {strides = array<i32>} : memref<8x128xf32, #tpu.memory_space<vmem>>, vector<1x128xf32>,
    %c7_i32 = arith.constant 7 : i32
    %246 = arith.index_cast %c7_i32 : i32 to index
    %247 = memref.load %arg1[%246] : memref<8xi32, #tpu.memory_space<smem>>
    %c0_i32_111 = arith.constant 0 : i32
    %c63_i32_112 = arith.constant 63 : i32
    %248 = arith.maxsi %c0_i32_111, %247 : i32
    %249 = arith.minsi %c63_i32_112, %248 : i32
    %250 = arith.index_cast %249 : i32 to index
    %c0_113 = arith.constant 0 : index
    %251 = vector.load %arg2[%250, %c0_113] : memref<64x128xf32, #tpu.memory_space<vmem>>, vector<1x128xf32>
    %252 = tpu.concatenate %251, %239 in 1 : vector<1x128xf32>, vector<1x128xf32> -> vector<1x256xf32>
    %c0_114 = arith.constant 0 : index
    %c0_115 = arith.constant 0 : index
    %253 = vector.load %arg4[%c0_114, %c0_115] : memref<256x512xf32, #tpu.memory_space<vmem>>, vector<256x512xf32>
    %cst_116 = arith.constant dense<0.000000e+00> : vector<1x512xf32>
    %254 = tpu.matmul %252, %253, %cst_116 {dimension_numbers = #tpu.dot_dimension_numbers<[1], [0], [0], [1], [0, 0, 1, 1], [], []>} : vector<1x256xf32>, vector<256x512xf32>, vector<1x512xf32> -> vector<1x512xf32>
    %c0_117 = arith.constant 0 : index
    %c0_118 = arith.constant 0 : index
    %255 = vector.load %arg5[%c0_117, %c0_118] : memref<1x512xf32, #tpu.memory_space<vmem>>, vector<1x512xf32>
    %256 = arith.addf %254, %255 : vector<1x512xf32>
    %257 = vector.extract_strided_slice %256 {offsets = [0, 0], sizes = [1, 256], strides = [1, 1]} : vector<1x512xf32> to vector<1x256xf32>
    %258 = arith.negf %257 : vector<1x256xf32>
    %259 = math.exp %258 : vector<1x256xf32>
    %cst_119 = arith.constant 1.000000e+00 : f32
    %260 = vector.broadcast %cst_119 : f32 to vector<1x256xf32>
    %261 = arith.addf %260, %259 : vector<1x256xf32>
    %262 = arith.divf %260, %261 : vector<1x256xf32>
    %263 = vector.extract_strided_slice %262 {offsets = [0, 0], sizes = [1, 128], strides = [1, 1]} : vector<1x256xf32> to vector<1x128xf32>
    %264 = vector.extract_strided_slice %262 {offsets = [0, 128], sizes = [1, 128], strides = [1, 1]} : vector<1x256xf32> to vector<1x128xf32>
    %265 = vector.extract_strided_slice %256 {offsets = [0, 256], sizes = [1, 128], strides = [1, 1]} : vector<1x512xf32> to vector<1x128xf32>
    %266 = vector.extract_strided_slice %256 {offsets = [0, 384], sizes = [1, 128], strides = [1, 1]} : vector<1x512xf32> to vector<1x128xf32>
    %267 = arith.mulf %263, %266 : vector<1x128xf32>
    %268 = arith.addf %265, %267 : vector<1x128xf32>
    %269 = math.tanh %268 : vector<1x128xf32>
    %cst_120 = arith.constant 1.000000e+00 : f32
    %270 = vector.broadcast %cst_120 : f32 to vector<1x128xf32>
    %271 = arith.subf %270, %264 : vector<1x128xf32>
    %272 = arith.mulf %271, %269 : vector<1x128xf32>
    %273 = arith.mulf %264, %239 : vector<1x128xf32>
    %274 = arith.addf %272, %273 : vector<1x128xf32>
    %c0_121 = arith.constant 0 : index
    %c0_122 = arith.constant 0 : index
    %275 = vector.load %arg6[%c0_121, %c0_122] : memref<128x128xf32, #tpu.memory_space<vmem>>, vector<128x128xf32>
    %cst_123 = arith.constant dense<0.000000e+00> : vector<1x128xf32>
    %276 = tpu.matmul %274, %275, %cst_123 {dimension_numbers = #tpu.dot_dimension_numbers<[1], [0], [0], [1], [0, 0, 1, 1], [], []>} : vector<1x128xf32>, vector<128x128xf32>, vector<1x128xf32> -> vector<1x128xf32>
    %c0_124 = arith.constant 0 : index
    %c0_125 = arith.constant 0 : index
    %277 = vector.load %arg7[%c0_124, %c0_125] : memref<1x128xf32, #tpu.memory_space<vmem>>, vector<1x128xf32>
    %278 = arith.addf %276, %277 : vector<1x128xf32>
    %279 = arith.index_cast %c7_i32 : i32 to index
    %c0_126 = arith.constant 0 : index
    %280 = vector.load %arg8[%279, %c0_126] : memref<8x128xf32, #tpu.memory_space<vmem>>, vector<1x128xf32>
    tpu.vector_store %arg8[%279, %c0_126], %278 {strides = array<i32>} : memref<8x128xf32, #tpu.memory_space<vmem>>, vector<1x128xf32>,
    %c8_i32 = arith.constant 8 : i32
    %c0_127 = arith.constant 0 : index
    %c0_128 = arith.constant 0 : index
    %281 = vector.load %arg9[%c0_127, %c0_128] : memref<1x128xf32, #tpu.memory_space<vmem>>, vector<1x128xf32>
    tpu.vector_store %arg9[%c0_127, %c0_128], %274 {strides = array<i32>} : memref<1x128xf32, #tpu.memory_space<vmem>>, vector<1x128xf32>,
    return
  }
  func.func @transform_0(%arg0: i32, %arg1: memref<8xi32, #tpu.memory_space<smem>>) -> (i32, i32) {
    %c0_i32 = arith.constant 0 : i32
    %c0_i32_0 = arith.constant 0 : i32
    %c0_i32_1 = arith.constant 0 : i32
    return %c0_i32, %c0_i32_0 : i32, i32
  }
  func.func @transform_1(%arg0: i32, %arg1: memref<8xi32, #tpu.memory_space<smem>>) -> (i32, i32) {
    %c0_i32 = arith.constant 0 : i32
    %c0_i32_0 = arith.constant 0 : i32
    %c0_i32_1 = arith.constant 0 : i32
    return %c0_i32, %c0_i32_0 : i32, i32
  }
  func.func @transform_2(%arg0: i32, %arg1: memref<8xi32, #tpu.memory_space<smem>>) -> (i32, i32) {
    %c0_i32 = arith.constant 0 : i32
    %c0_i32_0 = arith.constant 0 : i32
    %c0_i32_1 = arith.constant 0 : i32
    return %c0_i32, %c0_i32_0 : i32, i32
  }
  func.func @transform_3(%arg0: i32, %arg1: memref<8xi32, #tpu.memory_space<smem>>) -> (i32, i32) {
    %c0_i32 = arith.constant 0 : i32
    %c0_i32_0 = arith.constant 0 : i32
    %c0_i32_1 = arith.constant 0 : i32
    return %c0_i32, %c0_i32_0 : i32, i32
  }
  func.func @transform_4(%arg0: i32, %arg1: memref<8xi32, #tpu.memory_space<smem>>) -> (i32, i32) {
    %c0_i32 = arith.constant 0 : i32
    %c0_i32_0 = arith.constant 0 : i32
    %c0_i32_1 = arith.constant 0 : i32
    return %c0_i32, %c0_i32_0 : i32, i32
  }
  func.func @transform_5(%arg0: i32, %arg1: memref<8xi32, #tpu.memory_space<smem>>) -> (i32, i32) {
    %c0_i32 = arith.constant 0 : i32
    %c0_i32_0 = arith.constant 0 : i32
    %c0_i32_1 = arith.constant 0 : i32
    return %c0_i32, %c0_i32_0 : i32, i32
  }
  func.func @transform_6(%arg0: i32, %arg1: memref<8xi32, #tpu.memory_space<smem>>) -> (i32, i32) {
    %c0_i32 = arith.constant 0 : i32
    %c0_i32_0 = arith.constant 0 : i32
    %c0_i32_1 = arith.constant 0 : i32
    return %c0_i32, %c0_i32_0 : i32, i32
  }
  func.func @transform_7(%arg0: i32, %arg1: memref<8xi32, #tpu.memory_space<smem>>) -> (i32, i32) {
    %c0_i32 = arith.constant 0 : i32
    %c0_i32_0 = arith.constant 0 : i32
    %c0_i32_1 = arith.constant 0 : i32
    return %c0_i32, %c0_i32_0 : i32, i32
  }
}

</mosaic_0001>

<llo_original>
// kernel: tpu_custom_call.1
$region0: #{tpu_custom_call.1}
  #allocation0 [shape = 'u32[]', space=smem, size = 0x4, offset = 0x4, fixed_abs, tag = 'smem constant byte address 0x4 - core index']
  #allocation1 [shape = 'u32[144,128]{1,0:T(1,128)}', space=vmem, size = 0x12000, scoped, tag = 'internal scratch']
  #allocation2 [shape = 's32[1]{0}', space=sflag, size = 0x4, scoped, tag = 'scoped memory for tpu_custom_call.1']
  #allocation3 [shape = 'u8[512]{0}', space=smem, size = 0x200, scoped, tag = 'prefetched SMEM operand 0']
  %s0 = inlined_call_operand.hbm [shape: s32[8], index: 0, kind: input, shape index: {}]
  %s1 = inlined_call_operand.hbm [shape: f32[64,128], index: 1, kind: input, shape index: {}]
  %s2 = inlined_call_operand.vmem [shape: f32[1,128], index: 2, kind: input, shape index: {}]
  %s3 = inlined_call_operand.hbm [shape: f32[256,512], index: 3, kind: input, shape index: {}]
  %s4 = inlined_call_operand.vmem [shape: f32[1,512], index: 4, kind: input, shape index: {}]
  %s5 = inlined_call_operand.hbm [shape: f32[128,128], index: 5, kind: input, shape index: {}]
  %s6 = inlined_call_operand.vmem [shape: f32[1,128], index: 6, kind: input, shape index: {}]
  %s7 = inlined_call_operand.hbm [shape: f32[8,128], index: 7, kind: output, shape index: {0}]
  %s8 = inlined_call_operand.hbm [shape: f32[1,128], index: 8, kind: output, shape index: {1}]
  %9 = xla_tuple %s7, %s8
  %s10 = sld [smem:[#allocation0]]
  $region54: #{tpu_custom_call.1} parent=0
    _
  %s12 = ssub.s32 1, %s10
  %s13 = scalar_select 0, %s12, %s10
  %15 = dma.hbm_to_smem %s0, 16, [#allocation3], [#allocation2]
  %16 = dma.done [#allocation2], 16
  %17 = sfence
  $region1: #{tpu_custom_call.1} parent=0
    #allocation4 [shape = 'u8[32768]{0}', space=vmem, size = 0x8000, scoped, tag = 'input window, operand 1, single buffered']
    #allocation5 [shape = 's32[1]{0}', space=sflag, size = 0x4, scoped, tag = 'scoped memory for tpu_custom_call.1']
    #allocation6 [shape = 's32[1]{0}', space=sflag, size = 0x4, scoped, tag = 'scoped memory for tpu_custom_call.1']
    #allocation7 [shape = 'u8[524288]{0}', space=vmem, size = 0x80000, scoped, tag = 'input window, operand 3, single buffered']
    #allocation8 [shape = 's32[1]{0}', space=sflag, size = 0x4, scoped, tag = 'scoped memory for tpu_custom_call.1']
    #allocation9 [shape = 'u8[65536]{0}', space=vmem, size = 0x10000, scoped, tag = 'input window, operand 5, single buffered']
    #allocation10 [shape = 'u8[4096]{0}', space=vmem, size = 0x1000, scoped, tag = 'output window, operand 0, single buffered']
    #allocation11 [shape = 'u8[512]{0}', space=vmem, size = 0x400, scoped, tag = 'output window, operand 1, single buffered']
    #allocation12 [shape = 's32[1]{0}', space=sflag, size = 0x4, scoped, tag = 'scoped memory for tpu_custom_call.1']
    %18 = vsyncpa [#allocation5], 0
    %19 = vsyncpa [#allocation8], 0
    %20 = vsyncpa [#allocation6], 0
    %21 = vsyncpa [#allocation12], 0
    // Predicated region
    $region2: #{tpu_custom_call.1} parent=1 // pred_check
      _
    $region3: #{tpu_custom_call.1} parent=1 // pred_check_branch
      %23 = sbr.rel (0) target = $region5
    $region4: #{tpu_custom_call.1} parent=1 // pred_region
      %s25 = ssub.s32 1024, 1024
      %26 = vsyncadd [#allocation5], %s25
      %s27 = sshll.u32 [#allocation4], 4
      %s28 = int_to_ptr.vmem [resolvable:$true] %s27
      %33 = dma.hbm_to_vmem [thread:$0]  %s1, 1024, %s28, [#allocation5], 128, 128, 8
    $region5: #{tpu_custom_call.1} parent=1 // pred_fallthru
      _
    // Predicated region
    $region6: #{tpu_custom_call.1} parent=1 // pred_check
      _
    $region7: #{tpu_custom_call.1} parent=1 // pred_check_branch
      %35 = sbr.rel (0) target = $region9
    $region8: #{tpu_custom_call.1} parent=1 // pred_region
      _
    $region9: #{tpu_custom_call.1} parent=1 // pred_fallthru
      _
    // Predicated region
    $region10: #{tpu_custom_call.1} parent=1 // pred_check
      _
    $region11: #{tpu_custom_call.1} parent=1 // pred_check_branch
      %37 = sbr.rel (0) target = $region13
    $region12: #{tpu_custom_call.1} parent=1 // pred_region
      %s39 = ssub.s32 16384, 16384
      %40 = vsyncadd [#allocation8], %s39
      %s41 = sshll.u32 [#allocation7], 4
      %s42 = int_to_ptr.vmem [resolvable:$true] %s41
      %47 = dma.hbm_to_vmem [thread:$0]  %s3, 16384, %s42, [#allocation8], 512, 512, 32
    $region13: #{tpu_custom_call.1} parent=1 // pred_fallthru
      _
    // Predicated region
    $region14: #{tpu_custom_call.1} parent=1 // pred_check
      _
    $region15: #{tpu_custom_call.1} parent=1 // pred_check_branch
      %49 = sbr.rel (0) target = $region17
    $region16: #{tpu_custom_call.1} parent=1 // pred_region
      _
    $region17: #{tpu_custom_call.1} parent=1 // pred_fallthru
      _
    // Predicated region
    $region18: #{tpu_custom_call.1} parent=1 // pred_check
      _
    $region19: #{tpu_custom_call.1} parent=1 // pred_check_branch
      %51 = sbr.rel (0) target = $region21
    $region20: #{tpu_custom_call.1} parent=1 // pred_region
      %s53 = ssub.s32 2048, 2048
      %54 = vsyncadd [#allocation8], %s53
      %s55 = sshll.u32 [#allocation9], 4
      %s56 = int_to_ptr.vmem [resolvable:$true] %s55
      %61 = dma.hbm_to_vmem [thread:$0]  %s5, 2048, %s56, [#allocation8], 128, 128, 8
    $region21: #{tpu_custom_call.1} parent=1 // pred_fallthru
      _
    // Predicated region
    $region22: #{tpu_custom_call.1} parent=1 // pred_check
      _
    $region23: #{tpu_custom_call.1} parent=1 // pred_check_branch
      %63 = sbr.rel (0) target = $region25
    $region24: #{tpu_custom_call.1} parent=1 // pred_region
      _
    $region25: #{tpu_custom_call.1} parent=1 // pred_fallthru
      _
    // Predicated region
    $region26: #{tpu_custom_call.1} parent=1 // pred_check
      _
    $region27: #{tpu_custom_call.1} parent=1 // pred_check_branch
      %65 = sbr.rel (0) target = $region29
    $region28: #{tpu_custom_call.1} parent=1 // pred_region
      %66 = dma.done [#allocation5], 1024
    $region29: #{tpu_custom_call.1} parent=1 // pred_fallthru
      _
    // Predicated region
    $region30: #{tpu_custom_call.1} parent=1 // pred_check
      _
    $region31: #{tpu_custom_call.1} parent=1 // pred_check_branch
      %68 = sbr.rel (0) target = $region33
    $region32: #{tpu_custom_call.1} parent=1 // pred_region
      %69 = dma.done [#allocation8], 16384
    $region33: #{tpu_custom_call.1} parent=1 // pred_fallthru
      _
    // Predicated region
    $region34: #{tpu_custom_call.1} parent=1 // pred_check
      _
    $region35: #{tpu_custom_call.1} parent=1 // pred_check_branch
      %71 = sbr.rel (0) target = $region37
    $region36: #{tpu_custom_call.1} parent=1 // pred_region
      %72 = dma.done [#allocation8], 2048
    $region37: #{tpu_custom_call.1} parent=1 // pred_fallthru
      _
    %v73 = vld [vmem:[%s2] sm:$0x1]
    %s74 = sld [smem:[#allocation3]]
    %p75 = scmp.gt.s32.totalorder %s74, 0
    %s76 = scalar_select %p75, %s74, 0
    %p77 = scmp.lt.s32.totalorder %s76, 63
    %s78 = scalar_select %p77, %s76, 63
    %s79 = scalar_lea.vmem [#allocation4], %s78
    %v80 = vld [vmem:[%s79] sm:$0x1]
    %v81 = vld [vmem:[#allocation7] sm:$0xff]
    %v82 = vld [vmem:[#allocation7 + $0x8] sm:$0xff]
    %v83 = vld [vmem:[#allocation7 + $0x10] sm:$0xff]
    %v84 = vld [vmem:[#allocation7 + $0x18] sm:$0xff]
    %v85 = vld [vmem:[#allocation7 + $0x20] sm:$0xff]
    %v86 = vld [vmem:[#allocation7 + $0x28] sm:$0xff]
    %v87 = vld [vmem:[#allocation7 + $0x30] sm:$0xff]
    %v88 = vld [vmem:[#allocation7 + $0x38] sm:$0xff]
    %v89 = vld [vmem:[#allocation7 + $0x40] sm:$0xff]
    %v90 = vld [vmem:[#allocation7 + $0x48] sm:$0xff]
    %v91 = vld [vmem:[#allocation7 + $0x50] sm:$0xff]
    %v92 = vld [vmem:[#allocation7 + $0x58] sm:$0xff]
    %v93 = vld [vmem:[#allocation7 + $0x60] sm:$0xff]
    %v94 = vld [vmem:[#allocation7 + $0x68] sm:$0xff]
    %v95 = vld [vmem:[#allocation7 + $0x70] sm:$0xff]
    %v96 = vld [vmem:[#allocation7 + $0x78] sm:$0xff]
    %v97 = vld [vmem:[#allocation7 + $0x80] sm:$0xff]
    %v98 = vld [vmem:[#allocation7 + $0x88] sm:$0xff]
    %v99 = vld [vmem:[#allocation7 + $0x90] sm:$0xff]
    %v100 = vld [vmem:[#allocation7 + $0x98] sm:$0xff]
    %v101 = vld [vmem:[#allocation7 + $0xa0] sm:$0xff]
    %v102 = vld [vmem:[#allocation7 + $0xa8] sm:$0xff]
    %v103 = vld [vmem:[#allocation7 + $0xb0] sm:$0xff]
    %v104 = vld [vmem:[#allocation7 + $0xb8] sm:$0xff]
    %v105 = vld [vmem:[#allocation7 + $0xc0] sm:$0xff]
    %v106 = vld [vmem:[#allocation7 + $0xc8] sm:$0xff]
    %v107 = vld [vmem:[#allocation7 + $0xd0] sm:$0xff]
    %v108 = vld [vmem:[#allocation7 + $0xd8] sm:$0xff]
    %v109 = vld [vmem:[#allocation7 + $0xe0] sm:$0xff]
    %v110 = vld [vmem:[#allocation7 + $0xe8] sm:$0xff]
    %v111 = vld [vmem:[#allocation7 + $0xf0] sm:$0xff]
    %v112 = vld [vmem:[#allocation7 + $0xf8] sm:$0xff]
    %v113 = vld [vmem:[#allocation7 + $0x100] sm:$0xff]
    %v114 = vld [vmem:[#allocation7 + $0x108] sm:$0xff]
    %v115 = vld [vmem:[#allocation7 + $0x110] sm:$0xff]
    %v116 = vld [vmem:[#allocation7 + $0x118] sm:$0xff]
    %v117 = vld [vmem:[#allocation7 + $0x120] sm:$0xff]
    %v118 = vld [vmem:[#allocation7 + $0x128] sm:$0xff]
    %v119 = vld [vmem:[#allocation7 + $0x130] sm:$0xff]
    %v120 = vld [vmem:[#allocation7 + $0x138] sm:$0xff]
    %v121 = vld [vmem:[#allocation7 + $0x140] sm:$0xff]
    %v122 = vld [vmem:[#allocation7 + $0x148] sm:$0xff]
    %v123 = vld [vmem:[#allocation7 + $0x150] sm:$0xff]
    %v124 = vld [vmem:[#allocation7 + $0x158] sm:$0xff]
    %v125 = vld [vmem:[#allocation7 + $0x160] sm:$0xff]
    %v126 = vld [vmem:[#allocation7 + $0x168] sm:$0xff]
    %v127 = vld [vmem:[#allocation7 + $0x170] sm:$0xff]
    %v128 = vld [vmem:[#allocation7 + $0x178] sm:$0xff]
    %v129 = vld [vmem:[#allocation7 + $0x180] sm:$0xff]
    %v130 = vld [vmem:[#allocation7 + $0x188] sm:$0xff]
    %v131 = vld [vmem:[#allocation7 + $0x190] sm:$0xff]
    %v132 = vld [vmem:[#allocation7 + $0x198] sm:$0xff]
    %v133 = vld [vmem:[#allocation7 + $0x1a0] sm:$0xff]
    %v134 = vld [vmem:[#allocation7 + $0x1a8] sm:$0xff]
    %v135 = vld [vmem:[#allocation7 + $0x1b0] sm:$0xff]
    %v136 = vld [vmem:[#allocation7 + $0x1b8] sm:$0xff]
    %v137 = vld [vmem:[#allocation7 + $0x1c0] sm:$0xff]
    %v138 = vld [vmem:[#allocation7 + $0x1c8] sm:$0xff]
    %v139 = vld [vmem:[#allocation7 + $0x1d0] sm:$0xff]
    %v140 = vld [vmem:[#allocation7 + $0x1d8] sm:$0xff]
    %v141 = vld [vmem:[#allocation7 + $0x1e0] sm:$0xff]
    %v142 = vld [vmem:[#allocation7 + $0x1e8] sm:$0xff]
    %v143 = vld [vmem:[#allocation7 + $0x1f0] sm:$0xff]
    %v144 = vld [vmem:[#allocation7 + $0x1f8] sm:$0xff]
    %v145 = vld [vmem:[#allocation7 + $0x200] sm:$0xff]
    %v146 = vld [vmem:[#allocation7 + $0x208] sm:$0xff]
    %v147 = vld [vmem:[#allocation7 + $0x210] sm:$0xff]
    %v148 = vld [vmem:[#allocation7 + $0x218] sm:$0xff]
    %v149 = vld [vmem:[#allocation7 + $0x220] sm:$0xff]
    %v150 = vld [vmem:[#allocation7 + $0x228] sm:$0xff]
    %v151 = vld [vmem:[#allocation7 + $0x230] sm:$0xff]
    %v152 = vld [vmem:[#allocation7 + $0x238] sm:$0xff]
    %v153 = vld [vmem:[#allocation7 + $0x240] sm:$0xff]
    %v154 = vld [vmem:[#allocation7 + $0x248] sm:$0xff]
    %v155 = vld [vmem:[#allocation7 + $0x250] sm:$0xff]
    %v156 = vld [vmem:[#allocation7 + $0x258] sm:$0xff]
    %v157 = vld [vmem:[#allocation7 + $0x260] sm:$0xff]
    %v158 = vld [vmem:[#allocation7 + $0x268] sm:$0xff]
    %v159 = vld [vmem:[#allocation7 + $0x270] sm:$0xff]
    %v160 = vld [vmem:[#allocation7 + $0x278] sm:$0xff]
    %v161 = vld [vmem:[#allocation7 + $0x280] sm:$0xff]
    %v162 = vld [vmem:[#allocation7 + $0x288] sm:$0xff]
    %v163 = vld [vmem:[#allocation7 + $0x290] sm:$0xff]
    %v164 = vld [vmem:[#allocation7 + $0x298] sm:$0xff]
    %v165 = vld [vmem:[#allocation7 + $0x2a0] sm:$0xff]
    %v166 = vld [vmem:[#allocation7 + $0x2a8] sm:$0xff]
    %v167 = vld [vmem:[#allocation7 + $0x2b0] sm:$0xff]
    %v168 = vld [vmem:[#allocation7 + $0x2b8] sm:$0xff]
    %v169 = vld [vmem:[#allocation7 + $0x2c0] sm:$0xff]
    %v170 = vld [vmem:[#allocation7 + $0x2c8] sm:$0xff]
    %v171 = vld [vmem:[#allocation7 + $0x2d0] sm:$0xff]
    %v172 = vld [vmem:[#allocation7 + $0x2d8] sm:$0xff]
    %v173 = vld [vmem:[#allocation7 + $0x2e0] sm:$0xff]
    %v174 = vld [vmem:[#allocation7 + $0x2e8] sm:$0xff]
    %v175 = vld [vmem:[#allocation7 + $0x2f0] sm:$0xff]
    %v176 = vld [vmem:[#allocation7 + $0x2f8] sm:$0xff]
    %v177 = vld [vmem:[#allocation7 + $0x300] sm:$0xff]
    %v178 = vld [vmem:[#allocation7 + $0x308] sm:$0xff]
    %v179 = vld [vmem:[#allocation7 + $0x310] sm:$0xff]
    %v180 = vld [vmem:[#allocation7 + $0x318] sm:$0xff]
    %v181 = vld [vmem:[#allocation7 + $0x320] sm:$0xff]
    %v182 = vld [vmem:[#allocation7 + $0x328] sm:$0xff]
    %v183 = vld [vmem:[#allocation7 + $0x330] sm:$0xff]
    %v184 = vld [vmem:[#allocation7 + $0x338] sm:$0xff]
    %v185 = vld [vmem:[#allocation7 + $0x340] sm:$0xff]
    %v186 = vld [vmem:[#allocation7 + $0x348] sm:$0xff]
    %v187 = vld [vmem:[#allocation7 + $0x350] sm:$0xff]
    %v188 = vld [vmem:[#allocation7 + $0x358] sm:$0xff]
    %v189 = vld [vmem:[#allocation7 + $0x360] sm:$0xff]
    %v190 = vld [vmem:[#allocation7 + $0x368] sm:$0xff]
    %v191 = vld [vmem:[#allocation7 + $0x370] sm:$0xff]
    %v192 = vld [vmem:[#allocation7 + $0x378] sm:$0xff]
    %v193 = vld [vmem:[#allocation7 + $0x380] sm:$0xff]
    %v194 = vld [vmem:[#allocation7 + $0x388] sm:$0xff]
    %v195 = vld [vmem:[#allocation7 + $0x390] sm:$0xff]
    %v196 = vld [vmem:[#allocation7 + $0x398] sm:$0xff]
    %v197 = vld [vmem:[#allocation7 + $0x3a0] sm:$0xff]
    %v198 = vld [vmem:[#allocation7 + $0x3a8] sm:$0xff]
    %v199 = vld [vmem:[#allocation7 + $0x3b0] sm:$0xff]
    %v200 = vld [vmem:[#allocation7 + $0x3b8] sm:$0xff]
    %v201 = vld [vmem:[#allocation7 + $0x3c0] sm:$0xff]
    %v202 = vld [vmem:[#allocation7 + $0x3c8] sm:$0xff]
    %v203 = vld [vmem:[#allocation7 + $0x3d0] sm:$0xff]
    %v204 = vld [vmem:[#allocation7 + $0x3d8] sm:$0xff]
    %v205 = vld [vmem:[#allocation7 + $0x3e0] sm:$0xff]
    %v206 = vld [vmem:[#allocation7 + $0x3e8] sm:$0xff]
    %v207 = vld [vmem:[#allocation7 + $0x3f0] sm:$0xff]
    %v208 = vld [vmem:[#allocation7 + $0x3f8] sm:$0xff]
    %v209 = vld [vmem:[%s4] sm:$0xf]
    %v211 = vlaneseq
    %v212 = vshrl.u32 %v211, 7
    %v213 = vsub.s32 0, %v212
    %v214 = vrot.slane %v209, %v213
    %v215 = vlaneseq
    %v216 = vshrl.u32 %v215, 7
    %v217 = vsub.s32 1, %v216
    %v218 = vrot.slane %v209, %v217
    %v219 = vlaneseq
    %v220 = vshrl.u32 %v219, 7
    %v221 = vsub.s32 2, %v220
    %v222 = vrot.slane %v209, %v221
    %v223 = vlaneseq
    %v224 = vshrl.u32 %v223, 7
    %v225 = vsub.s32 3, %v224
    %v226 = vrot.slane %v209, %v225
    %231 = vmatprep.subr.mxu0 %v82
    %232 = vmatpush1.msra.mxu0 %v81
    %233 = vmatprep.subr.mxu0 %v86
    %234 = vmatpush1.msra.mxu0 %v85
    %235 = vmatprep.subr.mxu0 %v90
    %236 = vmatpush1.msra.mxu0 %v89
    %237 = vmatprep.subr.mxu0 %v94
    %238 = vmatpush1.msra.mxu0 %v93
    %239 = vmatprep.subr.mxu0 %v98
    %240 = vmatpush1.msra.mxu0 %v97
    %241 = vmatprep.subr.mxu0 %v102
    %242 = vmatpush1.msra.mxu0 %v101
    %243 = vmatprep.subr.mxu0 %v106
    %244 = vmatpush1.msra.mxu0 %v105
    %245 = vmatprep.subr.mxu0 %v110
    %246 = vmatpush1.msra.mxu0 %v109
    %247 = vmatprep.subr.mxu0 %v114
    %248 = vmatpush1.msra.mxu0 %v113
    %249 = vmatprep.subr.mxu0 %v118
    %250 = vmatpush1.msra.mxu0 %v117
    %251 = vmatprep.subr.mxu0 %v122
    %252 = vmatpush1.msra.mxu0 %v121
    %253 = vmatprep.subr.mxu0 %v126
    %254 = vmatpush1.msra.mxu0 %v125
    %255 = vmatprep.subr.mxu0 %v130
    %256 = vmatpush1.msra.mxu0 %v129
    %257 = vmatprep.subr.mxu0 %v134
    %258 = vmatpush1.msra.mxu0 %v133
    %259 = vmatprep.subr.mxu0 %v138
    %260 = vmatpush1.msra.mxu0 %v137
    %261 = vmatprep.subr.mxu0 %v142
    %262 = vmatpush1.msra.mxu0 %v141
    %263 = vmatprep.subr.mxu0 %v146
    %264 = vmatpush1.msra.mxu0 %v145
    %265 = vmatprep.subr.mxu0 %v150
    %266 = vmatpush1.msra.mxu0 %v149
    %267 = vmatprep.subr.mxu0 %v154
    %268 = vmatpush1.msra.mxu0 %v153
    %269 = vmatprep.subr.mxu0 %v158
    %270 = vmatpush1.msra.mxu0 %v157
    %271 = vmatprep.subr.mxu0 %v162
    %272 = vmatpush1.msra.mxu0 %v161
    %273 = vmatprep.subr.mxu0 %v166
    %274 = vmatpush1.msra.mxu0 %v165
    %275 = vmatprep.subr.mxu0 %v170
    %276 = vmatpush1.msra.mxu0 %v169
    %277 = vmatprep.subr.mxu0 %v174
    %278 = vmatpush1.msra.mxu0 %v173
    %279 = vmatprep.subr.mxu0 %v178
    %280 = vmatpush1.msra.mxu0 %v177
    %281 = vmatprep.subr.mxu0 %v182
    %282 = vmatpush1.msra.mxu0 %v181
    %283 = vmatprep.subr.mxu0 %v186
    %284 = vmatpush1.msra.mxu0 %v185
    %285 = vmatprep.subr.mxu0 %v190
    %286 = vmatpush1.msra.mxu0 %v189
    %287 = vmatprep.subr.mxu0 %v194
    %288 = vmatpush1.msra.mxu0 %v193
    %289 = vmatprep.subr.mxu0 %v198
    %290 = vmatpush1.msra.mxu0 %v197
    %291 = vmatprep.subr.mxu0 %v202
    %292 = vmatpush1.msra.mxu0 %v201
    %293 = vmatprep.subr.mxu0 %v206
    %294 = vmatpush1.msra.mxu0 %v205
    %295 = vmatprep.mubr.f32.mxu0 %v73
    %296 = vmatmul.mubr.f32.gmra.mrb[0].mxu0 %v80
    %v297 = vpop.f32.mrb[0].mxu0
    %v298 = vadd.f32 %v214, %v297
    %v299 = vpop.f32.mrb[0].mxu0
    %v300 = vadd.f32 %v218, %v299
    %301 = vdwg.mxu0
    %302 = vmatprep.subr.mxu0 %v84
    %303 = vmatpush1.msra.mxu0 %v83
    %304 = vmatprep.subr.mxu0 %v88
    %305 = vmatpush1.msra.mxu0 %v87
    %306 = vmatprep.subr.mxu0 %v92
    %307 = vmatpush1.msra.mxu0 %v91
    %308 = vmatprep.subr.mxu0 %v96
    %309 = vmatpush1.msra.mxu0 %v95
    %310 = vmatprep.subr.mxu0 %v100
    %311 = vmatpush1.msra.mxu0 %v99
    %312 = vmatprep.subr.mxu0 %v104
    %313 = vmatpush1.msra.mxu0 %v103
    %314 = vmatprep.subr.mxu0 %v108
    %315 = vmatpush1.msra.mxu0 %v107
    %316 = vmatprep.subr.mxu0 %v112
    %317 = vmatpush1.msra.mxu0 %v111
    %318 = vmatprep.subr.mxu0 %v116
    %319 = vmatpush1.msra.mxu0 %v115
    %320 = vmatprep.subr.mxu0 %v120
    %321 = vmatpush1.msra.mxu0 %v119
    %322 = vmatprep.subr.mxu0 %v124
    %323 = vmatpush1.msra.mxu0 %v123
    %324 = vmatprep.subr.mxu0 %v128
    %325 = vmatpush1.msra.mxu0 %v127
    %326 = vmatprep.subr.mxu0 %v132
    %327 = vmatpush1.msra.mxu0 %v131
    %328 = vmatprep.subr.mxu0 %v136
    %329 = vmatpush1.msra.mxu0 %v135
    %330 = vmatprep.subr.mxu0 %v140
    %331 = vmatpush1.msra.mxu0 %v139
    %332 = vmatprep.subr.mxu0 %v144
    %333 = vmatpush1.msra.mxu0 %v143
    %334 = vmatprep.subr.mxu0 %v148
    %335 = vmatpush1.msra.mxu0 %v147
    %336 = vmatprep.subr.mxu0 %v152
    %337 = vmatpush1.msra.mxu0 %v151
    %338 = vmatprep.subr.mxu0 %v156
    %339 = vmatpush1.msra.mxu0 %v155
    %340 = vmatprep.subr.mxu0 %v160
    %341 = vmatpush1.msra.mxu0 %v159
    %342 = vmatprep.subr.mxu0 %v164
    %343 = vmatpush1.msra.mxu0 %v163
    %344 = vmatprep.subr.mxu0 %v168
    %345 = vmatpush1.msra.mxu0 %v167
    %346 = vmatprep.subr.mxu0 %v172
    %347 = vmatpush1.msra.mxu0 %v171
    %348 = vmatprep.subr.mxu0 %v176
    %349 = vmatpush1.msra.mxu0 %v175
    %350 = vmatprep.subr.mxu0 %v180
    %351 = vmatpush1.msra.mxu0 %v179
    %352 = vmatprep.subr.mxu0 %v184
    %353 = vmatpush1.msra.mxu0 %v183
    %354 = vmatprep.subr.mxu0 %v188
    %355 = vmatpush1.msra.mxu0 %v187
    %356 = vmatprep.subr.mxu0 %v192
    %357 = vmatpush1.msra.mxu0 %v191
    %358 = vmatprep.subr.mxu0 %v196
    %359 = vmatpush1.msra.mxu0 %v195
    %360 = vmatprep.subr.mxu0 %v200
    %361 = vmatpush1.msra.mxu0 %v199
    %362 = vmatprep.subr.mxu0 %v204
    %363 = vmatpush1.msra.mxu0 %v203
    %364 = vmatprep.subr.mxu0 %v208
    %365 = vmatpush1.msra.mxu0 %v207
    %366 = vmatprep.mubr.f32.mxu0 %v73
    %367 = vmatmul.mubr.f32.gmra.mrb[0].mxu0 %v80
    %v368 = vpop.f32.mrb[0].mxu0
    %v369 = vadd.f32 %v222, %v368
    %v370 = vpop.f32.mrb[0].mxu0
    %v371 = vadd.f32 %v226, %v370
    %372 = vdwg.mxu0
    %v373 = vxor.u32 %v298, 2147483648
    %v374 = vxor.u32 %v300, 2147483648
    %v375 = vmul.f32 %v373, 1.442695
    %v376 = vpow.pop %v375
    %v377 = vmul.f32 %v374, 1.442695
    %v378 = vpow.pop %v377
    %v379 = vadd.f32 %v376, 1.0
    %v380 = vadd.f32 %v378, 1.0
    %v381 = vrcp.pop %v379
    %v382 = vmul.f32 1.0, %v381
    %v383 = vrcp.pop %v380
    %v384 = vmul.f32 1.0, %v383
    %v385 = vmul.f32 %v382, %v371
    %v386 = vadd.f32 %v369, %v385
    %v387 = vtanh.pop %v386
    %v388 = vsub.f32 1.0, %v384
    %v389 = vmul.f32 %v388, %v387
    %v390 = vmul.f32 %v384, %v73
    %v391 = vadd.f32 %v389, %v390
    %v392 = vld [vmem:[#allocation9] sm:$0xff]
    %v393 = vld [vmem:[#allocation9 + $0x8] sm:$0xff]
    %v394 = vld [vmem:[#allocation9 + $0x10] sm:$0xff]
    %v395 = vld [vmem:[#allocation9 + $0x18] sm:$0xff]
    %v396 = vld [vmem:[#allocation9 + $0x20] sm:$0xff]
    %v397 = vld [vmem:[#allocation9 + $0x28] sm:$0xff]
    %v398 = vld [vmem:[#allocation9 + $0x30] sm:$0xff]
    %v399 = vld [vmem:[#allocation9 + $0x38] sm:$0xff]
    %v400 = vld [vmem:[#allocation9 + $0x40] sm:$0xff]
    %v401 = vld [vmem:[#allocation9 + $0x48] sm:$0xff]
    %v402 = vld [vmem:[#allocation9 + $0x50] sm:$0xff]
    %v403 = vld [vmem:[#allocation9 + $0x58] sm:$0xff]
    %v404 = vld [vmem:[#allocation9 + $0x60] sm:$0xff]
    %v405 = vld [vmem:[#allocation9 + $0x68] sm:$0xff]
    %v406 = vld [vmem:[#allocation9 + $0x70] sm:$0xff]
    %v407 = vld [vmem:[#allocation9 + $0x78] sm:$0xff]
    %v408 = vld [vmem:[%s6] sm:$0x1]
    %409 = vmatprep.subr.mxu0 0.0
    %410 = vmatpush1.msra.mxu0 %v392
    %411 = vmatprep.subr.mxu0 0.0
    %412 = vmatpush1.msra.mxu0 %v393
    %413 = vmatprep.subr.mxu0 0.0
    %414 = vmatpush1.msra.mxu0 %v394
    %415 = vmatprep.subr.mxu0 0.0
    %416 = vmatpush1.msra.mxu0 %v395
    %417 = vmatprep.subr.mxu0 0.0
    %418 = vmatpush1.msra.mxu0 %v396
    %419 = vmatprep.subr.mxu0 0.0
    %420 = vmatpush1.msra.mxu0 %v397
    %421 = vmatprep.subr.mxu0 0.0
    %422 = vmatpush1.msra.mxu0 %v398
    %423 = vmatprep.subr.mxu0 0.0
    %424 = vmatpush1.msra.mxu0 %v399
    %425 = vmatprep.subr.mxu0 0.0
    %426 = vmatpush1.msra.mxu0 %v400
    %427 = vmatprep.subr.mxu0 0.0
    %428 = vmatpush1.msra.mxu0 %v401
    %429 = vmatprep.subr.mxu0 0.0
    %430 = vmatpush1.msra.mxu0 %v402
    %431 = vmatprep.subr.mxu0 0.0
    %432 = vmatpush1.msra.mxu0 %v403
    %433 = vmatprep.subr.mxu0 0.0
    %434 = vmatpush1.msra.mxu0 %v404
    %435 = vmatprep.subr.mxu0 0.0
    %436 = vmatpush1.msra.mxu0 %v405
    %437 = vmatprep.subr.mxu0 0.0
    %438 = vmatpush1.msra.mxu0 %v406
    %439 = vmatprep.subr.mxu0 0.0
    %440 = vmatpush1.msra.mxu0 %v407
    %441 = vmatprep.subr.mxu0 0.0
    %442 = vmatpush1.msra.mxu0 0.0
    %443 = vmatprep.subr.mxu0 0.0
    %444 = vmatpush1.msra.mxu0 0.0
    %445 = vmatprep.subr.mxu0 0.0
    %446 = vmatpush1.msra.mxu0 0.0
    %447 = vmatprep.subr.mxu0 0.0
    %448 = vmatpush1.msra.mxu0 0.0
    %449 = vmatprep.subr.mxu0 0.0
    %450 = vmatpush1.msra.mxu0 0.0
    %451 = vmatprep.subr.mxu0 0.0
    %452 = vmatpush1.msra.mxu0 0.0
    %453 = vmatprep.subr.mxu0 0.0
    %454 = vmatpush1.msra.mxu0 0.0
    %455 = vmatprep.subr.mxu0 0.0
    %456 = vmatpush1.msra.mxu0 0.0
    %457 = vmatprep.subr.mxu0 0.0
    %458 = vmatpush1.msra.mxu0 0.0
    %459 = vmatprep.subr.mxu0 0.0
    %460 = vmatpush1.msra.mxu0 0.0
    %461 = vmatprep.subr.mxu0 0.0
    %462 = vmatpush1.msra.mxu0 0.0
    %463 = vmatprep.subr.mxu0 0.0
    %464 = vmatpush1.msra.mxu0 0.0
    %465 = vmatprep.subr.mxu0 0.0
    %466 = vmatpush1.msra.mxu0 0.0
    %467 = vmatprep.subr.mxu0 0.0
    %468 = vmatpush1.msra.mxu0 0.0
    %469 = vmatprep.subr.mxu0 0.0
    %470 = vmatpush1.msra.mxu0 0.0
    %471 = vmatprep.subr.mxu0 0.0
    %472 = vmatpush1.msra.mxu0 0.0
    %473 = vmatprep.mubr.f32.mxu0 0.0
    %474 = vmatmul.mubr.f32.gmra.mrb[0].mxu0 %v391
    %v475 = vpop.f32.mrb[0].mxu0
    %v476 = vadd.f32 %v408, %v475
    %v477 = vpop.f32.mrb[0].mxu0
    %478 = vdwg.mxu0
    %479 = vst [vmem:[#allocation10] sm:$0x1] %v476
    %s480 = sld [smem:[#allocation3 + $0x1]]
    %p481 = scmp.gt.s32.totalorder %s480, 0
    %s482 = scalar_select %p481, %s480, 0
    %p483 = scmp.lt.s32.totalorder %s482, 63
    %s484 = scalar_select %p483, %s482, 63
    %s485 = scalar_lea.vmem [#allocation4], %s484
    %v486 = vld [vmem:[%s485] sm:$0x1]
    %v487 = vld [vmem:[#allocation7] sm:$0xff]
    %v488 = vld [vmem:[#allocation7 + $0x8] sm:$0xff]
    %v489 = vld [vmem:[#allocation7 + $0x10] sm:$0xff]
    %v490 = vld [vmem:[#allocation7 + $0x18] sm:$0xff]
    %v491 = vld [vmem:[#allocation7 + $0x20] sm:$0xff]
    %v492 = vld [vmem:[#allocation7 + $0x28] sm:$0xff]
    %v493 = vld [vmem:[#allocation7 + $0x30] sm:$0xff]
    %v494 = vld [vmem:[#allocation7 + $0x38] sm:$0xff]
    %v495 = vld [vmem:[#allocation7 + $0x40] sm:$0xff]
    %v496 = vld [vmem:[#allocation7 + $0x48] sm:$0xff]
    %v497 = vld [vmem:[#allocation7 + $0x50] sm:$0xff]
    %v498 = vld [vmem:[#allocation7 + $0x58] sm:$0xff]
    %v499 = vld [vmem:[#allocation7 + $0x60] sm:$0xff]
    %v500 = vld [vmem:[#allocation7 + $0x68] sm:$0xff]
    %v501 = vld [vmem:[#allocation7 + $0x70] sm:$0xff]
    %v502 = vld [vmem:[#allocation7 + $0x78] sm:$0xff]
    %v503 = vld [vmem:[#allocation7 + $0x80] sm:$0xff]
    %v504 = vld [vmem:[#allocation7 + $0x88] sm:$0xff]
    %v505 = vld [vmem:[#allocation7 + $0x90] sm:$0xff]
    %v506 = vld [vmem:[#allocation7 + $0x98] sm:$0xff]
    %v507 = vld [vmem:[#allocation7 + $0xa0] sm:$0xff]
    %v508 = vld [vmem:[#allocation7 + $0xa8] sm:$0xff]
    %v509 = vld [vmem:[#allocation7 + $0xb0] sm:$0xff]
    %v510 = vld [vmem:[#allocation7 + $0xb8] sm:$0xff]
    %v511 = vld [vmem:[#allocation7 + $0xc0] sm:$0xff]
    %v512 = vld [vmem:[#allocation7 + $0xc8] sm:$0xff]
    %v513 = vld [vmem:[#allocation7 + $0xd0] sm:$0xff]
    %v514 = vld [vmem:[#allocation7 + $0xd8] sm:$0xff]
    %v515 = vld [vmem:[#allocation7 + $0xe0] sm:$0xff]
    %v516 = vld [vmem:[#allocation7 + $0xe8] sm:$0xff]
    %v517 = vld [vmem:[#allocation7 + $0xf0] sm:$0xff]
    %v518 = vld [vmem:[#allocation7 + $0xf8] sm:$0xff]
    %v519 = vld [vmem:[#allocation7 + $0x100] sm:$0xff]
    %v520 = vld [vmem:[#allocation7 + $0x108] sm:$0xff]
    %v521 = vld [vmem:[#allocation7 + $0x110] sm:$0xff]
    %v522 = vld [vmem:[#allocation7 + $0x118] sm:$0xff]
    %v523 = vld [vmem:[#allocation7 + $0x120] sm:$0xff]
    %v524 = vld [vmem:[#allocation7 + $0x128] sm:$0xff]
    %v525 = vld [vmem:[#allocation7 + $0x130] sm:$0xff]
    %v526 = vld [vmem:[#allocation7 + $0x138] sm:$0xff]
    %v527 = vld [vmem:[#allocation7 + $0x140] sm:$0xff]
    %v528 = vld [vmem:[#allocation7 + $0x148] sm:$0xff]
    %v529 = vld [vmem:[#allocation7 + $0x150] sm:$0xff]
    %v530 = vld [vmem:[#allocation7 + $0x158] sm:$0xff]
    %v531 = vld [vmem:[#allocation7 + $0x160] sm:$0xff]
    %v532 = vld [vmem:[#allocation7 + $0x168] sm:$0xff]
    %v533 = vld [vmem:[#allocation7 + $0x170] sm:$0xff]
    %v534 = vld [vmem:[#allocation7 + $0x178] sm:$0xff]
    %v535 = vld [vmem:[#allocation7 + $0x180] sm:$0xff]
    %v536 = vld [vmem:[#allocation7 + $0x188] sm:$0xff]
    %v537 = vld [vmem:[#allocation7 + $0x190] sm:$0xff]
    %v538 = vld [vmem:[#allocation7 + $0x198] sm:$0xff]
    %v539 = vld [vmem:[#allocation7 + $0x1a0] sm:$0xff]
    %v540 = vld [vmem:[#allocation7 + $0x1a8] sm:$0xff]
    %v541 = vld [vmem:[#allocation7 + $0x1b0] sm:$0xff]
    %v542 = vld [vmem:[#allocation7 + $0x1b8] sm:$0xff]
    %v543 = vld [vmem:[#allocation7 + $0x1c0] sm:$0xff]
    %v544 = vld [vmem:[#allocation7 + $0x1c8] sm:$0xff]
    %v545 = vld [vmem:[#allocation7 + $0x1d0] sm:$0xff]
    %v546 = vld [vmem:[#allocation7 + $0x1d8] sm:$0xff]
    %v547 = vld [vmem:[#allocation7 + $0x1e0] sm:$0xff]
    %v548 = vld [vmem:[#allocation7 + $0x1e8] sm:$0xff]
    %v549 = vld [vmem:[#allocation7 + $0x1f0] sm:$0xff]
    %v550 = vld [vmem:[#allocation7 + $0x1f8] sm:$0xff]
    %v551 = vld [vmem:[#allocation7 + $0x200] sm:$0xff]
    %v552 = vld [vmem:[#allocation7 + $0x208] sm:$0xff]
    %v553 = vld [vmem:[#allocation7 + $0x210] sm:$0xff]
    %v554 = vld [vmem:[#allocation7 + $0x218] sm:$0xff]
    %v555 = vld [vmem:[#allocation7 + $0x220] sm:$0xff]
    %v556 = vld [vmem:[#allocation7 + $0x228] sm:$0xff]
    %v557 = vld [vmem:[#allocation7 + $0x230] sm:$0xff]
    %v558 = vld [vmem:[#allocation7 + $0x238] sm:$0xff]
    %v559 = vld [vmem:[#allocation7 + $0x240] sm:$0xff]
    %v560 = vld [vmem:[#allocation7 + $0x248] sm:$0xff]
    %v561 = vld [vmem:[#allocation7 + $0x250] sm:$0xff]
    %v562 = vld [vmem:[#allocation7 + $0x258] sm:$0xff]
    %v563 = vld [vmem:[#allocation7 + $0x260] sm:$0xff]
    %v564 = vld [vmem:[#allocation7 + $0x268] sm:$0xff]
    %v565 = vld [vmem:[#allocation7 + $0x270] sm:$0xff]
    %v566 = vld [vmem:[#allocation7 + $0x278] sm:$0xff]
    %v567 = vld [vmem:[#allocation7 + $0x280] sm:$0xff]
    %v568 = vld [vmem:[#allocation7 + $0x288] sm:$0xff]
    %v569 = vld [vmem:[#allocation7 + $0x290] sm:$0xff]
    %v570 = vld [vmem:[#allocation7 + $0x298] sm:$0xff]
    %v571 = vld [vmem:[#allocation7 + $0x2a0] sm:$0xff]
    %v572 = vld [vmem:[#allocation7 + $0x2a8] sm:$0xff]
    %v573 = vld [vmem:[#allocation7 + $0x2b0] sm:$0xff]
    %v574 = vld [vmem:[#allocation7 + $0x2b8] sm:$0xff]
    %v575 = vld [vmem:[#allocation7 + $0x2c0] sm:$0xff]
    %v576 = vld [vmem:[#allocation7 + $0x2c8] sm:$0xff]
    %v577 = vld [vmem:[#allocation7 + $0x2d0] sm:$0xff]
    %v578 = vld [vmem:[#allocation7 + $0x2d8] sm:$0xff]
    %v579 = vld [vmem:[#allocation7 + $0x2e0] sm:$0xff]
    %v580 = vld [vmem:[#allocation7 + $0x2e8] sm:$0xff]
    %v581 = vld [vmem:[#allocation7 + $0x2f0] sm:$0xff]
    %v582 = vld [vmem:[#allocation7 + $0x2f8] sm:$0xff]
    %v583 = vld [vmem:[#allocation7 + $0x300] sm:$0xff]
    %v584 = vld [vmem:[#allocation7 + $0x308] sm:$0xff]
    %v585 = vld [vmem:[#allocation7 + $0x310] sm:$0xff]
    %v586 = vld [vmem:[#allocation7 + $0x318] sm:$0xff]
    %v587 = vld [vmem:[#allocation7 + $0x320] sm:$0xff]
    %v588 = vld [vmem:[#allocation7 + $0x328] sm:$0xff]
    %v589 = vld [vmem:[#allocation7 + $0x330] sm:$0xff]
    %v590 = vld [vmem:[#allocation7 + $0x338] sm:$0xff]
    %v591 = vld [vmem:[#allocation7 + $0x340] sm:$0xff]
    %v592 = vld [vmem:[#allocation7 + $0x348] sm:$0xff]
    %v593 = vld [vmem:[#allocation7 + $0x350] sm:$0xff]
    %v594 = vld [vmem:[#allocation7 + $0x358] sm:$0xff]
    %v595 = vld [vmem:[#allocation7 + $0x360] sm:$0xff]
    %v596 = vld [vmem:[#allocation7 + $0x368] sm:$0xff]
    %v597 = vld [vmem:[#allocation7 + $0x370] sm:$0xff]
    %v598 = vld [vmem:[#allocation7 + $0x378] sm:$0xff]
    %v599 = vld [vmem:[#allocation7 + $0x380] sm:$0xff]
    %v600 = vld [vmem:[#allocation7 + $0x388] sm:$0xff]
    %v601 = vld [vmem:[#allocation7 + $0x390] sm:$0xff]
    %v602 = vld [vmem:[#allocation7 + $0x398] sm:$0xff]
    %v603 = vld [vmem:[#allocation7 + $0x3a0] sm:$0xff]
    %v604 = vld [vmem:[#allocation7 + $0x3a8] sm:$0xff]
    %v605 = vld [vmem:[#allocation7 + $0x3b0] sm:$0xff]
    %v606 = vld [vmem:[#allocation7 + $0x3b8] sm:$0xff]
    %v607 = vld [vmem:[#allocation7 + $0x3c0] sm:$0xff]
    %v608 = vld [vmem:[#allocation7 + $0x3c8] sm:$0xff]
    %v609 = vld [vmem:[#allocation7 + $0x3d0] sm:$0xff]
    %v610 = vld [vmem:[#allocation7 + $0x3d8] sm:$0xff]
    %v611 = vld [vmem:[#allocation7 + $0x3e0] sm:$0xff]
    %v612 = vld [vmem:[#allocation7 + $0x3e8] sm:$0xff]
    %v613 = vld [vmem:[#allocation7 + $0x3f0] sm:$0xff]
    %v614 = vld [vmem:[#allocation7 + $0x3f8] sm:$0xff]
    %v615 = vld [vmem:[%s4] sm:$0xf]
    %v617 = vlaneseq
    %v618 = vshrl.u32 %v617, 7
    %v619 = vsub.s32 0, %v618
    %v620 = vrot.slane %v615, %v619
    %v621 = vlaneseq
    %v622 = vshrl.u32 %v621, 7
    %v623 = vsub.s32 1, %v622
    %v624 = vrot.slane %v615, %v623
    %v625 = vlaneseq
    %v626 = vshrl.u32 %v625, 7
    %v627 = vsub.s32 2, %v626
    %v628 = vrot.slane %v615, %v627
    %v629 = vlaneseq
    %v630 = vshrl.u32 %v629, 7
    %v631 = vsub.s32 3, %v630
    %v632 = vrot.slane %v615, %v631
    %637 = vmatprep.subr.mxu0 %v488
    %638 = vmatpush1.msra.mxu0 %v487
    %639 = vmatprep.subr.mxu0 %v492
    %640 = vmatpush1.msra.mxu0 %v491
    %641 = vmatprep.subr.mxu0 %v496
    %642 = vmatpush1.msra.mxu0 %v495
    %643 = vmatprep.subr.mxu0 %v500
    %644 = vmatpush1.msra.mxu0 %v499
    %645 = vmatprep.subr.mxu0 %v504
    %646 = vmatpush1.msra.mxu0 %v503
    %647 = vmatprep.subr.mxu0 %v508
    %648 = vmatpush1.msra.mxu0 %v507
    %649 = vmatprep.subr.mxu0 %v512
    %650 = vmatpush1.msra.mxu0 %v511
    %651 = vmatprep.subr.mxu0 %v516
    %652 = vmatpush1.msra.mxu0 %v515
    %653 = vmatprep.subr.mxu0 %v520
    %654 = vmatpush1.msra.mxu0 %v519
    %655 = vmatprep.subr.mxu0 %v524
    %656 = vmatpush1.msra.mxu0 %v523
    %657 = vmatprep.subr.mxu0 %v528
    %658 = vmatpush1.msra.mxu0 %v527
    %659 = vmatprep.subr.mxu0 %v532
    %660 = vmatpush1.msra.mxu0 %v531
    %661 = vmatprep.subr.mxu0 %v536
    %662 = vmatpush1.msra.mxu0 %v535
    %663 = vmatprep.subr.mxu0 %v540
    %664 = vmatpush1.msra.mxu0 %v539
    %665 = vmatprep.subr.mxu0 %v544
    %666 = vmatpush1.msra.mxu0 %v543
    %667 = vmatprep.subr.mxu0 %v548
    %668 = vmatpush1.msra.mxu0 %v547
    %669 = vmatprep.subr.mxu0 %v552
    %670 = vmatpush1.msra.mxu0 %v551
    %671 = vmatprep.subr.mxu0 %v556
    %672 = vmatpush1.msra.mxu0 %v555
    %673 = vmatprep.subr.mxu0 %v560
    %674 = vmatpush1.msra.mxu0 %v559
    %675 = vmatprep.subr.mxu0 %v564
    %676 = vmatpush1.msra.mxu0 %v563
    %677 = vmatprep.subr.mxu0 %v568
    %678 = vmatpush1.msra.mxu0 %v567
    %679 = vmatprep.subr.mxu0 %v572
    %680 = vmatpush1.msra.mxu0 %v571
    %681 = vmatprep.subr.mxu0 %v576
    %682 = vmatpush1.msra.mxu0 %v575
    %683 = vmatprep.subr.mxu0 %v580
    %684 = vmatpush1.msra.mxu0 %v579
    %685 = vmatprep.subr.mxu0 %v584
    %686 = vmatpush1.msra.mxu0 %v583
    %687 = vmatprep.subr.mxu0 %v588
    %688 = vmatpush1.msra.mxu0 %v587
    %689 = vmatprep.subr.mxu0 %v592
    %690 = vmatpush1.msra.mxu0 %v591
    %691 = vmatprep.subr.mxu0 %v596
    %692 = vmatpush1.msra.mxu0 %v595
    %693 = vmatprep.subr.mxu0 %v600
    %694 = vmatpush1.msra.mxu0 %v599
    %695 = vmatprep.subr.mxu0 %v604
    %696 = vmatpush1.msra.mxu0 %v603
    %697 = vmatprep.subr.mxu0 %v608
    %698 = vmatpush1.msra.mxu0 %v607
    %699 = vmatprep.subr.mxu0 %v612
    %700 = vmatpush1.msra.mxu0 %v611
    %701 = vmatprep.mubr.f32.mxu0 %v391
    %702 = vmatmul.mubr.f32.gmra.mrb[0].mxu0 %v486
    %v703 = vpop.f32.mrb[0].mxu0
    %v704 = vadd.f32 %v620, %v703
    %v705 = vpop.f32.mrb[0].mxu0
    %v706 = vadd.f32 %v624, %v705
    %707 = vdwg.mxu0
    %708 = vmatprep.subr.mxu0 %v490
    %709 = vmatpush1.msra.mxu0 %v489
    %710 = vmatprep.subr.mxu0 %v494
    %711 = vmatpush1.msra.mxu0 %v493
    %712 = vmatprep.subr.mxu0 %v498
    %713 = vmatpush1.msra.mxu0 %v497
    %714 = vmatprep.subr.mxu0 %v502
    %715 = vmatpush1.msra.mxu0 %v501
    %716 = vmatprep.subr.mxu0 %v506
    %717 = vmatpush1.msra.mxu0 %v505
    %718 = vmatprep.subr.mxu0 %v510
    %719 = vmatpush1.msra.mxu0 %v509
    %720 = vmatprep.subr.mxu0 %v514
    %721 = vmatpush1.msra.mxu0 %v513
    %722 = vmatprep.subr.mxu0 %v518
    %723 = vmatpush1.msra.mxu0 %v517
    %724 = vmatprep.subr.mxu0 %v522
    %725 = vmatpush1.msra.mxu0 %v521
    %726 = vmatprep.subr.mxu0 %v526
    %727 = vmatpush1.msra.mxu0 %v525
    %728 = vmatprep.subr.mxu0 %v530
    %729 = vmatpush1.msra.mxu0 %v529
    %730 = vmatprep.subr.mxu0 %v534
    %731 = vmatpush1.msra.mxu0 %v533
    %732 = vmatprep.subr.mxu0 %v538
    %733 = vmatpush1.msra.mxu0 %v537
    %734 = vmatprep.subr.mxu0 %v542
    %735 = vmatpush1.msra.mxu0 %v541
    %736 = vmatprep.subr.mxu0 %v546
    %737 = vmatpush1.msra.mxu0 %v545
    %738 = vmatprep.subr.mxu0 %v550
    %739 = vmatpush1.msra.mxu0 %v549
    %740 = vmatprep.subr.mxu0 %v554
    %741 = vmatpush1.msra.mxu0 %v553
    %742 = vmatprep.subr.mxu0 %v558
    %743 = vmatpush1.msra.mxu0 %v557
    %744 = vmatprep.subr.mxu0 %v562
    %745 = vmatpush1.msra.mxu0 %v561
    %746 = vmatprep.subr.mxu0 %v566
    %747 = vmatpush1.msra.mxu0 %v565
    %748 = vmatprep.subr.mxu0 %v570
    %749 = vmatpush1.msra.mxu0 %v569
    %750 = vmatprep.subr.mxu0 %v574
    %751 = vmatpush1.msra.mxu0 %v573
    %752 = vmatprep.subr.mxu0 %v578
    %753 = vmatpush1.msra.mxu0 %v577
    %754 = vmatprep.subr.mxu0 %v582
    %755 = vmatpush1.msra.mxu0 %v581
    %756 = vmatprep.subr.mxu0 %v586
    %757 = vmatpush1.msra.mxu0 %v585
    %758 = vmatprep.subr.mxu0 %v590
    %759 = vmatpush1.msra.mxu0 %v589
    %760 = vmatprep.subr.mxu0 %v594
    %761 = vmatpush1.msra.mxu0 %v593
    %762 = vmatprep.subr.mxu0 %v598
    %763 = vmatpush1.msra.mxu0 %v597
    %764 = vmatprep.subr.mxu0 %v602
    %765 = vmatpush1.msra.mxu0 %v601
    %766 = vmatprep.subr.mxu0 %v606
    %767 = vmatpush1.msra.mxu0 %v605
    %768 = vmatprep.subr.mxu0 %v610
    %769 = vmatpush1.msra.mxu0 %v609
    %770 = vmatprep.subr.mxu0 %v614
    %771 = vmatpush1.msra.mxu0 %v613
    %772 = vmatprep.mubr.f32.mxu0 %v391
    %773 = vmatmul.mubr.f32.gmra.mrb[0].mxu0 %v486
    %v774 = vpop.f32.mrb[0].mxu0
    %v775 = vadd.f32 %v628, %v774
    %v776 = vpop.f32.mrb[0].mxu0
    %v777 = vadd.f32 %v632, %v776
    %778 = vdwg.mxu0
    %v779 = vxor.u32 %v704, 2147483648
    %v780 = vxor.u32 %v706, 2147483648
    %v781 = vmul.f32 %v779, 1.442695
    %v782 = vpow.pop %v781
    %v783 = vmul.f32 %v780, 1.442695
    %v784 = vpow.pop %v783
    %v785 = vadd.f32 %v782, 1.0
    %v786 = vadd.f32 %v784, 1.0
    %v787 = vrcp.pop %v785
    %v788 = vmul.f32 1.0, %v787
    %v789 = vrcp.pop %v786
    %v790 = vmul.f32 1.0, %v789
    %v791 = vmul.f32 %v788, %v777
    %v792 = vadd.f32 %v775, %v791
    %v793 = vtanh.pop %v792
    %v794 = vsub.f32 1.0, %v790
    %v795 = vmul.f32 %v794, %v793
    %v796 = vmul.f32 %v790, %v391
    %v797 = vadd.f32 %v795, %v796
    %v798 = vld [vmem:[#allocation9] sm:$0xff]
    %v799 = vld [vmem:[#allocation9 + $0x8] sm:$0xff]
    %v800 = vld [vmem:[#allocation9 + $0x10] sm:$0xff]
    %v801 = vld [vmem:[#allocation9 + $0x18] sm:$0xff]
    %v802 = vld [vmem:[#allocation9 + $0x20] sm:$0xff]
    %v803 = vld [vmem:[#allocation9 + $0x28] sm:$0xff]
    %v804 = vld [vmem:[#allocation9 + $0x30] sm:$0xff]
    %v805 = vld [vmem:[#allocation9 + $0x38] sm:$0xff]
    %v806 = vld [vmem:[#allocation9 + $0x40] sm:$0xff]
    %v807 = vld [vmem:[#allocation9 + $0x48] sm:$0xff]
    %v808 = vld [vmem:[#allocation9 + $0x50] sm:$0xff]
    %v809 = vld [vmem:[#allocation9 + $0x58] sm:$0xff]
    %v810 = vld [vmem:[#allocation9 + $0x60] sm:$0xff]
    %v811 = vld [vmem:[#allocation9 + $0x68] sm:$0xff]
    %v812 = vld [vmem:[#allocation9 + $0x70] sm:$0xff]
    %v813 = vld [vmem:[#allocation9 + $0x78] sm:$0xff]
    %v814 = vld [vmem:[%s6] sm:$0x1]
    %815 = vmatprep.subr.mxu0 0.0
    %816 = vmatpush1.msra.mxu0 %v798
    %817 = vmatprep.subr.mxu0 0.0
    %818 = vmatpush1.msra.mxu0 %v799
    %819 = vmatprep.subr.mxu0 0.0
    %820 = vmatpush1.msra.mxu0 %v800
    %821 = vmatprep.subr.mxu0 0.0
    %822 = vmatpush1.msra.mxu0 %v801
    %823 = vmatprep.subr.mxu0 0.0
    %824 = vmatpush1.msra.mxu0 %v802
    %825 = vmatprep.subr.mxu0 0.0
    %826 = vmatpush1.msra.mxu0 %v803
    %827 = vmatprep.subr.mxu0 0.0
    %828 = vmatpush1.msra.mxu0 %v804
    %829 = vmatprep.subr.mxu0 0.0
    %830 = vmatpush1.msra.mxu0 %v805
    %831 = vmatprep.subr.mxu0 0.0
    %832 = vmatpush1.msra.mxu0 %v806
    %833 = vmatprep.subr.mxu0 0.0
    %834 = vmatpush1.msra.mxu0 %v807
    %835 = vmatprep.subr.mxu0 0.0
    %836 = vmatpush1.msra.mxu0 %v808
    %837 = vmatprep.subr.mxu0 0.0
    %838 = vmatpush1.msra.mxu0 %v809
    %839 = vmatprep.subr.mxu0 0.0
    %840 = vmatpush1.msra.mxu0 %v810
    %841 = vmatprep.subr.mxu0 0.0
    %842 = vmatpush1.msra.mxu0 %v811
    %843 = vmatprep.subr.mxu0 0.0
    %844 = vmatpush1.msra.mxu0 %v812
    %845 = vmatprep.subr.mxu0 0.0
    %846 = vmatpush1.msra.mxu0 %v813
    %847 = vmatprep.subr.mxu0 0.0
    %848 = vmatpush1.msra.mxu0 0.0
    %849 = vmatprep.subr.mxu0 0.0
    %850 = vmatpush1.msra.mxu0 0.0
    %851 = vmatprep.subr.mxu0 0.0
    %852 = vmatpush1.msra.mxu0 0.0
    %853 = vmatprep.subr.mxu0 0.0
    %854 = vmatpush1.msra.mxu0 0.0
    %855 = vmatprep.subr.mxu0 0.0
    %856 = vmatpush1.msra.mxu0 0.0
    %857 = vmatprep.subr.mxu0 0.0
    %858 = vmatpush1.msra.mxu0 0.0
    %859 = vmatprep.subr.mxu0 0.0
    %860 = vmatpush1.msra.mxu0 0.0
    %861 = vmatprep.subr.mxu0 0.0
    %862 = vmatpush1.msra.mxu0 0.0
    %863 = vmatprep.subr.mxu0 0.0
    %864 = vmatpush1.msra.mxu0 0.0
    %865 = vmatprep.subr.mxu0 0.0
    %866 = vmatpush1.msra.mxu0 0.0
    %867 = vmatprep.subr.mxu0 0.0
    %868 = vmatpush1.msra.mxu0 0.0
    %869 = vmatprep.subr.mxu0 0.0
    %870 = vmatpush1.msra.mxu0 0.0
    %871 = vmatprep.subr.mxu0 0.0
    %872 = vmatpush1.msra.mxu0 0.0
    %873 = vmatprep.subr.mxu0 0.0
    %874 = vmatpush1.msra.mxu0 0.0
    %875 = vmatprep.subr.mxu0 0.0
    %876 = vmatpush1.msra.mxu0 0.0
    %877 = vmatprep.subr.mxu0 0.0
    %878 = vmatpush1.msra.mxu0 0.0
    %879 = vmatprep.mubr.f32.mxu0 0.0
    %880 = vmatmul.mubr.f32.gmra.mrb[0].mxu0 %v797
    %v881 = vpop.f32.mrb[0].mxu0
    %v882 = vadd.f32 %v814, %v881
    %v883 = vpop.f32.mrb[0].mxu0
    %884 = vdwg.mxu0
    %885 = vst [vmem:[#allocation10 + $0x1] sm:$0x1] %v882
    %s886 = sld [smem:[#allocation3 + $0x2]]
    %p887 = scmp.gt.s32.totalorder %s886, 0
    %s888 = scalar_select %p887, %s886, 0
    %p889 = scmp.lt.s32.totalorder %s888, 63
    %s890 = scalar_select %p889, %s888, 63
    %s891 = scalar_lea.vmem [#allocation4], %s890
    %v892 = vld [vmem:[%s891] sm:$0x1]
    %v893 = vld [vmem:[#allocation7] sm:$0xff]
    %v894 = vld [vmem:[#allocation7 + $0x8] sm:$0xff]
    %v895 = vld [vmem:[#allocation7 + $0x10] sm:$0xff]
    %v896 = vld [vmem:[#allocation7 + $0x18] sm:$0xff]
    %v897 = vld [vmem:[#allocation7 + $0x20] sm:$0xff]
    %v898 = vld [vmem:[#allocation7 + $0x28] sm:$0xff]
    %v899 = vld [vmem:[#allocation7 + $0x30] sm:$0xff]
    %v900 = vld [vmem:[#allocation7 + $0x38] sm:$0xff]
    %v901 = vld [vmem:[#allocation7 + $0x40] sm:$0xff]
    %v902 = vld [vmem:[#allocation7 + $0x48] sm:$0xff]
    %v903 = vld [vmem:[#allocation7 + $0x50] sm:$0xff]
    %v904 = vld [vmem:[#allocation7 + $0x58] sm:$0xff]
    %v905 = vld [vmem:[#allocation7 + $0x60] sm:$0xff]
    %v906 = vld [vmem:[#allocation7 + $0x68] sm:$0xff]
    %v907 = vld [vmem:[#allocation7 + $0x70] sm:$0xff]
    %v908 = vld [vmem:[#allocation7 + $0x78] sm:$0xff]
    %v909 = vld [vmem:[#allocation7 + $0x80] sm:$0xff]
    %v910 = vld [vmem:[#allocation7 + $0x88] sm:$0xff]
    %v911 = vld [vmem:[#allocation7 + $0x90] sm:$0xff]
    %v912 = vld [vmem:[#allocation7 + $0x98] sm:$0xff]
    %v913 = vld [vmem:[#allocation7 + $0xa0] sm:$0xff]
    %v914 = vld [vmem:[#allocation7 + $0xa8] sm:$0xff]
    %v915 = vld [vmem:[#allocation7 + $0xb0] sm:$0xff]
    %v916 = vld [vmem:[#allocation7 + $0xb8] sm:$0xff]
    %v917 = vld [vmem:[#allocation7 + $0xc0] sm:$0xff]
    %v918 = vld [vmem:[#allocation7 + $0xc8] sm:$0xff]
    %v919 = vld [vmem:[#allocation7 + $0xd0] sm:$0xff]
    %v920 = vld [vmem:[#allocation7 + $0xd8] sm:$0xff]
    %v921 = vld [vmem:[#allocation7 + $0xe0] sm:$0xff]
    %v922 = vld [vmem:[#allocation7 + $0xe8] sm:$0xff]
    %v923 = vld [vmem:[#allocation7 + $0xf0] sm:$0xff]
    %v924 = vld [vmem:[#allocation7 + $0xf8] sm:$0xff]
    %v925 = vld [vmem:[#allocation7 + $0x100] sm:$0xff]
    %v926 = vld [vmem:[#allocation7 + $0x108] sm:$0xff]
    %v927 = vld [vmem:[#allocation7 + $0x110] sm:$0xff]
    %v928 = vld [vmem:[#allocation7 + $0x118] sm:$0xff]
    %v929 = vld [vmem:[#allocation7 + $0x120] sm:$0xff]
    %v930 = vld [vmem:[#allocation7 + $0x128] sm:$0xff]
    %v931 = vld [vmem:[#allocation7 + $0x130] sm:$0xff]
    %v932 = vld [vmem:[#allocation7 + $0x138] sm:$0xff]
    %v933 = vld [vmem:[#allocation7 + $0x140] sm:$0xff]
    %v934 = vld [vmem:[#allocation7 + $0x148] sm:$0xff]
    %v935 = vld [vmem:[#allocation7 + $0x150] sm:$0xff]
    %v936 = vld [vmem:[#allocation7 + $0x158] sm:$0xff]
    %v937 = vld [vmem:[#allocation7 + $0x160] sm:$0xff]
    %v938 = vld [vmem:[#allocation7 + $0x168] sm:$0xff]
    %v939 = vld [vmem:[#allocation7 + $0x170] sm:$0xff]
    %v940 = vld [vmem:[#allocation7 + $0x178] sm:$0xff]
    %v941 = vld [vmem:[#allocation7 + $0x180] sm:$0xff]
    %v942 = vld [vmem:[#allocation7 + $0x188] sm:$0xff]
    %v943 = vld [vmem:[#allocation7 + $0x190] sm:$0xff]
    %v944 = vld [vmem:[#allocation7 + $0x198] sm:$0xff]
    %v945 = vld [vmem:[#allocation7 + $0x1a0] sm:$0xff]
    %v946 = vld [vmem:[#allocation7 + $0x1a8] sm:$0xff]
    %v947 = vld [vmem:[#allocation7 + $0x1b0] sm:$0xff]
    %v948 = vld [vmem:[#allocation7 + $0x1b8] sm:$0xff]
    %v949 = vld [vmem:[#allocation7 + $0x1c0] sm:$0xff]
    %v950 = vld [vmem:[#allocation7 + $0x1c8] sm:$0xff]
    %v951 = vld [vmem:[#allocation7 + $0x1d0] sm:$0xff]
    %v952 = vld [vmem:[#allocation7 + $0x1d8] sm:$0xff]
    %v953 = vld [vmem:[#allocation7 + $0x1e0] sm:$0xff]
    %v954 = vld [vmem:[#allocation7 + $0x1e8] sm:$0xff]
    %v955 = vld [vmem:[#allocation7 + $0x1f0] sm:$0xff]
    %v956 = vld [vmem:[#allocation7 + $0x1f8] sm:$0xff]
    %v957 = vld [vmem:[#allocation7 + $0x200] sm:$0xff]
    %v958 = vld [vmem:[#allocation7 + $0x208] sm:$0xff]
    %v959 = vld [vmem:[#allocation7 + $0x210] sm:$0xff]
    %v960 = vld [vmem:[#allocation7 + $0x218] sm:$0xff]
    %v961 = vld [vmem:[#allocation7 + $0x220] sm:$0xff]
    %v962 = vld [vmem:[#allocation7 + $0x228] sm:$0xff]
    %v963 = vld [vmem:[#allocation7 + $0x230] sm:$0xff]
    %v964 = vld [vmem:[#allocation7 + $0x238] sm:$0xff]
    %v965 = vld [vmem:[#allocation7 + $0x240] sm:$0xff]
    %v966 = vld [vmem:[#allocation7 + $0x248] sm:$0xff]
    %v967 = vld [vmem:[#allocation7 + $0x250] sm:$0xff]
    %v968 = vld [vmem:[#allocation7 + $0x258] sm:$0xff]
    %v969 = vld [vmem:[#allocation7 + $0x260] sm:$0xff]
    %v970 = vld [vmem:[#allocation7 + $0x268] sm:$0xff]
    %v971 = vld [vmem:[#allocation7 + $0x270] sm:$0xff]
    %v972 = vld [vmem:[#allocation7 + $0x278] sm:$0xff]
    %v973 = vld [vmem:[#allocation7 + $0x280] sm:$0xff]
    %v974 = vld [vmem:[#allocation7 + $0x288] sm:$0xff]
    %v975 = vld [vmem:[#allocation7 + $0x290] sm:$0xff]
    %v976 = vld [vmem:[#allocation7 + $0x298] sm:$0xff]
    %v977 = vld [vmem:[#allocation7 + $0x2a0] sm:$0xff]
    %v978 = vld [vmem:[#allocation7 + $0x2a8] sm:$0xff]
    %v979 = vld [vmem:[#allocation7 + $0x2b0] sm:$0xff]
    %v980 = vld [vmem:[#allocation7 + $0x2b8] sm:$0xff]
    %v981 = vld [vmem:[#allocation7 + $0x2c0] sm:$0xff]
    %v982 = vld [vmem:[#allocation7 + $0x2c8] sm:$0xff]
    %v983 = vld [vmem:[#allocation7 + $0x2d0] sm:$0xff]
    %v984 = vld [vmem:[#allocation7 + $0x2d8] sm:$0xff]
    %v985 = vld [vmem:[#allocation7 + $0x2e0] sm:$0xff]
    %v986 = vld [vmem:[#allocation7 + $0x2e8] sm:$0xff]
    %v987 = vld [vmem:[#allocation7 + $0x2f0] sm:$0xff]
    %v988 = vld [vmem:[#allocation7 + $0x2f8] sm:$0xff]
    %v989 = vld [vmem:[#allocation7 + $0x300] sm:$0xff]
    %v990 = vld [vmem:[#allocation7 + $0x308] sm:$0xff]
    %v991 = vld [vmem:[#allocation7 + $0x310] sm:$0xff]
    %v992 = vld [vmem:[#allocation7 + $0x318] sm:$0xff]
    %v993 = vld [vmem:[#allocation7 + $0x320] sm:$0xff]
    %v994 = vld [vmem:[#allocation7 + $0x328] sm:$0xff]
    %v995 = vld [vmem:[#allocation7 + $0x330] sm:$0xff]
    %v996 = vld [vmem:[#allocation7 + $0x338] sm:$0xff]
    %v997 = vld [vmem:[#allocation7 + $0x340] sm:$0xff]
    %v998 = vld [vmem:[#allocation7 + $0x348] sm:$0xff]
    %v999 = vld [vmem:[#allocation7 + $0x350] sm:$0xff]
    %v1000 = vld [vmem:[#allocation7 + $0x358] sm:$0xff]
    %v1001 = vld [vmem:[#allocation7 + $0x360] sm:$0xff]
    %v1002 = vld [vmem:[#allocation7 + $0x368] sm:$0xff]
    %v1003 = vld [vmem:[#allocation7 + $0x370] sm:$0xff]
    %v1004 = vld [vmem:[#allocation7 + $0x378] sm:$0xff]
    %v1005 = vld [vmem:[#allocation7 + $0x380] sm:$0xff]
    %v1006 = vld [vmem:[#allocation7 + $0x388] sm:$0xff]
    %v1007 = vld [vmem:[#allocation7 + $0x390] sm:$0xff]
    %v1008 = vld [vmem:[#allocation7 + $0x398] sm:$0xff]
    %v1009 = vld [vmem:[#allocation7 + $0x3a0] sm:$0xff]
    %v1010 = vld [vmem:[#allocation7 + $0x3a8] sm:$0xff]
    %v1011 = vld [vmem:[#allocation7 + $0x3b0] sm:$0xff]
    %v1012 = vld [vmem:[#allocation7 + $0x3b8] sm:$0xff]
    %v1013 = vld [vmem:[#allocation7 + $0x3c0] sm:$0xff]
    %v1014 = vld [vmem:[#allocation7 + $0x3c8] sm:$0xff]
    %v1015 = vld [vmem:[#allocation7 + $0x3d0] sm:$0xff]
    %v1016 = vld [vmem:[#allocation7 + $0x3d8] sm:$0xff]
    %v1017 = vld [vmem:[#allocation7 + $0x3e0] sm:$0xff]
    %v1018 = vld [vmem:[#allocation7 + $0x3e8] sm:$0xff]
    %v1019 = vld [vmem:[#allocation7 + $0x3f0] sm:$0xff]
    %v1020 = vld [vmem:[#allocation7 + $0x3f8] sm:$0xff]
    %v1021 = vld [vmem:[%s4] sm:$0xf]
    %v1023 = vlaneseq
    %v1024 = vshrl.u32 %v1023, 7
    %v1025 = vsub.s32 0, %v1024
    %v1026 = vrot.slane %v1021, %v1025
    %v1027 = vlaneseq
    %v1028 = vshrl.u32 %v1027, 7
    %v1029 = vsub.s32 1, %v1028
    %v1030 = vrot.slane %v1021, %v1029
    %v1031 = vlaneseq
    %v1032 = vshrl.u32 %v1031, 7
    %v1033 = vsub.s32 2, %v1032
    %v1034 = vrot.slane %v1021, %v1033
    %v1035 = vlaneseq
    %v1036 = vshrl.u32 %v1035, 7
    %v1037 = vsub.s32 3, %v1036
    %v1038 = vrot.slane %v1021, %v1037
    %1043 = vmatprep.subr.mxu0 %v894
    %1044 = vmatpush1.msra.mxu0 %v893
    %1045 = vmatprep.subr.mxu0 %v898
    %1046 = vmatpush1.msra.mxu0 %v897
    %1047 = vmatprep.subr.mxu0 %v902
    %1048 = vmatpush1.msra.mxu0 %v901
    %1049 = vmatprep.subr.mxu0 %v906
    %1050 = vmatpush1.msra.mxu0 %v905
    %1051 = vmatprep.subr.mxu0 %v910
    %1052 = vmatpush1.msra.mxu0 %v909
    %1053 = vmatprep.subr.mxu0 %v914
    %1054 = vmatpush1.msra.mxu0 %v913
    %1055 = vmatprep.subr.mxu0 %v918
    %1056 = vmatpush1.msra.mxu0 %v917
    %1057 = vmatprep.subr.mxu0 %v922
    %1058 = vmatpush1.msra.mxu0 %v921
    %1059 = vmatprep.subr.mxu0 %v926
    %1060 = vmatpush1.msra.mxu0 %v925
    %1061 = vmatprep.subr.mxu0 %v930
    %1062 = vmatpush1.msra.mxu0 %v929
    %1063 = vmatprep.subr.mxu0 %v934
    %1064 = vmatpush1.msra.mxu0 %v933
    %1065 = vmatprep.subr.mxu0 %v938
    %1066 = vmatpush1.msra.mxu0 %v937
    %1067 = vmatprep.subr.mxu0 %v942
    %1068 = vmatpush1.msra.mxu0 %v941
    %1069 = vmatprep.subr.mxu0 %v946
    %1070 = vmatpush1.msra.mxu0 %v945
    %1071 = vmatprep.subr.mxu0 %v950
    %1072 = vmatpush1.msra.mxu0 %v949
    %1073 = vmatprep.subr.mxu0 %v954
    %1074 = vmatpush1.msra.mxu0 %v953
    %1075 = vmatprep.subr.mxu0 %v958
    %1076 = vmatpush1.msra.mxu0 %v957
    %1077 = vmatprep.subr.mxu0 %v962
    %1078 = vmatpush1.msra.mxu0 %v961
    %1079 = vmatprep.subr.mxu0 %v966
    %1080 = vmatpush1.msra.mxu0 %v965
    %1081 = vmatprep.subr.mxu0 %v970
    %1082 = vmatpush1.msra.mxu0 %v969
    %1083 = vmatprep.subr.mxu0 %v974
    %1084 = vmatpush1.msra.mxu0 %v973
    %1085 = vmatprep.subr.mxu0 %v978
    %1086 = vmatpush1.msra.mxu0 %v977
    %1087 = vmatprep.subr.mxu0 %v982
    %1088 = vmatpush1.msra.mxu0 %v981
    %1089 = vmatprep.subr.mxu0 %v986
    %1090 = vmatpush1.msra.mxu0 %v985
    %1091 = vmatprep.subr.mxu0 %v990
    %1092 = vmatpush1.msra.mxu0 %v989
    %1093 = vmatprep.subr.mxu0 %v994
    %1094 = vmatpush1.msra.mxu0 %v993
    %1095 = vmatprep.subr.mxu0 %v998
    %1096 = vmatpush1.msra.mxu0 %v997
    %1097 = vmatprep.subr.mxu0 %v1002
    %1098 = vmatpush1.msra.mxu0 %v1001
    %1099 = vmatprep.subr.mxu0 %v1006
    %1100 = vmatpush1.msra.mxu0 %v1005
    %1101 = vmatprep.subr.mxu0 %v1010
    %1102 = vmatpush1.msra.mxu0 %v1009
    %1103 = vmatprep.subr.mxu0 %v1014
    %1104 = vmatpush1.msra.mxu0 %v1013
    %1105 = vmatprep.subr.mxu0 %v1018
    %1106 = vmatpush1.msra.mxu0 %v1017
    %1107 = vmatprep.mubr.f32.mxu0 %v797
    %1108 = vmatmul.mubr.f32.gmra.mrb[0].mxu0 %v892
    %v1109 = vpop.f32.mrb[0].mxu0
    %v1110 = vadd.f32 %v1026, %v1109
    %v1111 = vpop.f32.mrb[0].mxu0
    %v1112 = vadd.f32 %v1030, %v1111
    %1113 = vdwg.mxu0
    %1114 = vmatprep.subr.mxu0 %v896
    %1115 = vmatpush1.msra.mxu0 %v895
    %1116 = vmatprep.subr.mxu0 %v900
    %1117 = vmatpush1.msra.mxu0 %v899
    %1118 = vmatprep.subr.mxu0 %v904
    %1119 = vmatpush1.msra.mxu0 %v903
    %1120 = vmatprep.subr.mxu0 %v908
    %1121 = vmatpush1.msra.mxu0 %v907
    %1122 = vmatprep.subr.mxu0 %v912
    %1123 = vmatpush1.msra.mxu0 %v911
    %1124 = vmatprep.subr.mxu0 %v916
    %1125 = vmatpush1.msra.mxu0 %v915
    %1126 = vmatprep.subr.mxu0 %v920
    %1127 = vmatpush1.msra.mxu0 %v919
    %1128 = vmatprep.subr.mxu0 %v924
    %1129 = vmatpush1.msra.mxu0 %v923
    %1130 = vmatprep.subr.mxu0 %v928
    %1131 = vmatpush1.msra.mxu0 %v927
    %1132 = vmatprep.subr.mxu0 %v932
    %1133 = vmatpush1.msra.mxu0 %v931
    %1134 = vmatprep.subr.mxu0 %v936
    %1135 = vmatpush1.msra.mxu0 %v935
    %1136 = vmatprep.subr.mxu0 %v940
    %1137 = vmatpush1.msra.mxu0 %v939
    %1138 = vmatprep.subr.mxu0 %v944
    %1139 = vmatpush1.msra.mxu0 %v943
    %1140 = vmatprep.subr.mxu0 %v948
    %1141 = vmatpush1.msra.mxu0 %v947
    %1142 = vmatprep.subr.mxu0 %v952
    %1143 = vmatpush1.msra.mxu0 %v951
    %1144 = vmatprep.subr.mxu0 %v956
    %1145 = vmatpush1.msra.mxu0 %v955
    %1146 = vmatprep.subr.mxu0 %v960
    %1147 = vmatpush1.msra.mxu0 %v959
    %1148 = vmatprep.subr.mxu0 %v964
    %1149 = vmatpush1.msra.mxu0 %v963
    %1150 = vmatprep.subr.mxu0 %v968
    %1151 = vmatpush1.msra.mxu0 %v967
    %1152 = vmatprep.subr.mxu0 %v972
    %1153 = vmatpush1.msra.mxu0 %v971
    %1154 = vmatprep.subr.mxu0 %v976
    %1155 = vmatpush1.msra.mxu0 %v975
    %1156 = vmatprep.subr.mxu0 %v980
    %1157 = vmatpush1.msra.mxu0 %v979
    %1158 = vmatprep.subr.mxu0 %v984
    %1159 = vmatpush1.msra.mxu0 %v983
    %1160 = vmatprep.subr.mxu0 %v988
    %1161 = vmatpush1.msra.mxu0 %v987
    %1162 = vmatprep.subr.mxu0 %v992
    %1163 = vmatpush1.msra.mxu0 %v991
    %1164 = vmatprep.subr.mxu0 %v996
    %1165 = vmatpush1.msra.mxu0 %v995
    %1166 = vmatprep.subr.mxu0 %v1000
    %1167 = vmatpush1.msra.mxu0 %v999
    %1168 = vmatprep.subr.mxu0 %v1004
    %1169 = vmatpush1.msra.mxu0 %v1003
    %1170 = vmatprep.subr.mxu0 %v1008
    %1171 = vmatpush1.msra.mxu0 %v1007
    %1172 = vmatprep.subr.mxu0 %v1012
    %1173 = vmatpush1.msra.mxu0 %v1011
    %1174 = vmatprep.subr.mxu0 %v1016
    %1175 = vmatpush1.msra.mxu0 %v1015
    %1176 = vmatprep.subr.mxu0 %v1020
    %1177 = vmatpush1.msra.mxu0 %v1019
    %1178 = vmatprep.mubr.f32.mxu0 %v797
    %1179 = vmatmul.mubr.f32.gmra.mrb[0].mxu0 %v892
    %v1180 = vpop.f32.mrb[0].mxu0
    %v1181 = vadd.f32 %v1034, %v1180
    %v1182 = vpop.f32.mrb[0].mxu0
    %v1183 = vadd.f32 %v1038, %v1182
    %1184 = vdwg.mxu0
    %v1185 = vxor.u32 %v1110, 2147483648
    %v1186 = vxor.u32 %v1112, 2147483648
    %v1187 = vmul.f32 %v1185, 1.442695
    %v1188 = vpow.pop %v1187
    %v1189 = vmul.f32 %v1186, 1.442695
    %v1190 = vpow.pop %v1189
    %v1191 = vadd.f32 %v1188, 1.0
    %v1192 = vadd.f32 %v1190, 1.0
    %v1193 = vrcp.pop %v1191
    %v1194 = vmul.f32 1.0, %v1193
    %v1195 = vrcp.pop %v1192
    %v1196 = vmul.f32 1.0, %v1195
    %v1197 = vmul.f32 %v1194, %v1183
    %v1198 = vadd.f32 %v1181, %v1197
    %v1199 = vtanh.pop %v1198
    %v1200 = vsub.f32 1.0, %v1196
    %v1201 = vmul.f32 %v1200, %v1199
    %v1202 = vmul.f32 %v1196, %v797
    %v1203 = vadd.f32 %v1201, %v1202
    %v1204 = vld [vmem:[#allocation9] sm:$0xff]
    %v1205 = vld [vmem:[#allocation9 + $0x8] sm:$0xff]
    %v1206 = vld [vmem:[#allocation9 + $0x10] sm:$0xff]
    %v1207 = vld [vmem:[#allocation9 + $0x18] sm:$0xff]
    %v1208 = vld [vmem:[#allocation9 + $0x20] sm:$0xff]
    %v1209 = vld [vmem:[#allocation9 + $0x28] sm:$0xff]
    %v1210 = vld [vmem:[#allocation9 + $0x30] sm:$0xff]
    %v1211 = vld [vmem:[#allocation9 + $0x38] sm:$0xff]
    %v1212 = vld [vmem:[#allocation9 + $0x40] sm:$0xff]
    %v1213 = vld [vmem:[#allocation9 + $0x48] sm:$0xff]
    %v1214 = vld [vmem:[#allocation9 + $0x50] sm:$0xff]
    %v1215 = vld [vmem:[#allocation9 + $0x58] sm:$0xff]
    %v1216 = vld [vmem:[#allocation9 + $0x60] sm:$0xff]
    %v1217 = vld [vmem:[#allocation9 + $0x68] sm:$0xff]
    %v1218 = vld [vmem:[#allocation9 + $0x70] sm:$0xff]
    %v1219 = vld [vmem:[#allocation9 + $0x78] sm:$0xff]
    %v1220 = vld [vmem:[%s6] sm:$0x1]
    %1221 = vmatprep.subr.mxu0 0.0
    %1222 = vmatpush1.msra.mxu0 %v1204
    %1223 = vmatprep.subr.mxu0 0.0
    %1224 = vmatpush1.msra.mxu0 %v1205
    %1225 = vmatprep.subr.mxu0 0.0
    %1226 = vmatpush1.msra.mxu0 %v1206
    %1227 = vmatprep.subr.mxu0 0.0
    %1228 = vmatpush1.msra.mxu0 %v1207
    %1229 = vmatprep.subr.mxu0 0.0
    %1230 = vmatpush1.msra.mxu0 %v1208
    %1231 = vmatprep.subr.mxu0 0.0
    %1232 = vmatpush1.msra.mxu0 %v1209
    %1233 = vmatprep.subr.mxu0 0.0
    %1234 = vmatpush1.msra.mxu0 %v1210
    %1235 = vmatprep.subr.mxu0 0.0
    %1236 = vmatpush1.msra.mxu0 %v1211
    %1237 = vmatprep.subr.mxu0 0.0
    %1238 = vmatpush1.msra.mxu0 %v1212
    %1239 = vmatprep.subr.mxu0 0.0
    %1240 = vmatpush1.msra.mxu0 %v1213
    %1241 = vmatprep.subr.mxu0 0.0
    %1242 = vmatpush1.msra.mxu0 %v1214
    %1243 = vmatprep.subr.mxu0 0.0
    %1244 = vmatpush1.msra.mxu0 %v1215
    %1245 = vmatprep.subr.mxu0 0.0
    %1246 = vmatpush1.msra.mxu0 %v1216
    %1247 = vmatprep.subr.mxu0 0.0
    %1248 = vmatpush1.msra.mxu0 %v1217
    %1249 = vmatprep.subr.mxu0 0.0
    %1250 = vmatpush1.msra.mxu0 %v1218
    %1251 = vmatprep.subr.mxu0 0.0
    %1252 = vmatpush1.msra.mxu0 %v1219
    %1253 = vmatprep.subr.mxu0 0.0
    %1254 = vmatpush1.msra.mxu0 0.0
    %1255 = vmatprep.subr.mxu0 0.0
    %1256 = vmatpush1.msra.mxu0 0.0
    %1257 = vmatprep.subr.mxu0 0.0
    %1258 = vmatpush1.msra.mxu0 0.0
    %1259 = vmatprep.subr.mxu0 0.0
    %1260 = vmatpush1.msra.mxu0 0.0
    %1261 = vmatprep.subr.mxu0 0.0
    %1262 = vmatpush1.msra.mxu0 0.0
    %1263 = vmatprep.subr.mxu0 0.0
    %1264 = vmatpush1.msra.mxu0 0.0
    %1265 = vmatprep.subr.mxu0 0.0
    %1266 = vmatpush1.msra.mxu0 0.0
    %1267 = vmatprep.subr.mxu0 0.0
    %1268 = vmatpush1.msra.mxu0 0.0
    %1269 = vmatprep.subr.mxu0 0.0
    %1270 = vmatpush1.msra.mxu0 0.0
    %1271 = vmatprep.subr.mxu0 0.0
    %1272 = vmatpush1.msra.mxu0 0.0
    %1273 = vmatprep.subr.mxu0 0.0
    %1274 = vmatpush1.msra.mxu0 0.0
    %1275 = vmatprep.subr.mxu0 0.0
    %1276 = vmatpush1.msra.mxu0 0.0
    %1277 = vmatprep.subr.mxu0 0.0
    %1278 = vmatpush1.msra.mxu0 0.0
    %1279 = vmatprep.subr.mxu0 0.0
    %1280 = vmatpush1.msra.mxu0 0.0
    %1281 = vmatprep.subr.mxu0 0.0
    %1282 = vmatpush1.msra.mxu0 0.0
    %1283 = vmatprep.subr.mxu0 0.0
    %1284 = vmatpush1.msra.mxu0 0.0
    %1285 = vmatprep.mubr.f32.mxu0 0.0
    %1286 = vmatmul.mubr.f32.gmra.mrb[0].mxu0 %v1203
    %v1287 = vpop.f32.mrb[0].mxu0
    %v1288 = vadd.f32 %v1220, %v1287
    %v1289 = vpop.f32.mrb[0].mxu0
    %1290 = vdwg.mxu0
    %1291 = vst [vmem:[#allocation10 + $0x2] sm:$0x1] %v1288
    %s1292 = sld [smem:[#allocation3 + $0x3]]
    %p1293 = scmp.gt.s32.totalorder %s1292, 0
    %s1294 = scalar_select %p1293, %s1292, 0
    %p1295 = scmp.lt.s32.totalorder %s1294, 63
    %s1296 = scalar_select %p1295, %s1294, 63
    %s1297 = scalar_lea.vmem [#allocation4], %s1296
    %v1298 = vld [vmem:[%s1297] sm:$0x1]
    %v1299 = vld [vmem:[#allocation7] sm:$0xff]
    %v1300 = vld [vmem:[#allocation7 + $0x8] sm:$0xff]
    %v1301 = vld [vmem:[#allocation7 + $0x10] sm:$0xff]
    %v1302 = vld [vmem:[#allocation7 + $0x18] sm:$0xff]
    %v1303 = vld [vmem:[#allocation7 + $0x20] sm:$0xff]
    %v1304 = vld [vmem:[#allocation7 + $0x28] sm:$0xff]
    %v1305 = vld [vmem:[#allocation7 + $0x30] sm:$0xff]
    %v1306 = vld [vmem:[#allocation7 + $0x38] sm:$0xff]
    %v1307 = vld [vmem:[#allocation7 + $0x40] sm:$0xff]
    %v1308 = vld [vmem:[#allocation7 + $0x48] sm:$0xff]
    %v1309 = vld [vmem:[#allocation7 + $0x50] sm:$0xff]
    %v1310 = vld [vmem:[#allocation7 + $0x58] sm:$0xff]
    %v1311 = vld [vmem:[#allocation7 + $0x60] sm:$0xff]
    %v1312 = vld [vmem:[#allocation7 + $0x68] sm:$0xff]
    %v1313 = vld [vmem:[#allocation7 + $0x70] sm:$0xff]
    %v1314 = vld [vmem:[#allocation7 + $0x78] sm:$0xff]
    %v1315 = vld [vmem:[#allocation7 + $0x80] sm:$0xff]
    %v1316 = vld [vmem:[#allocation7 + $0x88] sm:$0xff]
    %v1317 = vld [vmem:[#allocation7 + $0x90] sm:$0xff]
    %v1318 = vld [vmem:[#allocation7 + $0x98] sm:$0xff]
    %v1319 = vld [vmem:[#allocation7 + $0xa0] sm:$0xff]
    %v1320 = vld [vmem:[#allocation7 + $0xa8] sm:$0xff]
    %v1321 = vld [vmem:[#allocation7 + $0xb0] sm:$0xff]
    %v1322 = vld [vmem:[#allocation7 + $0xb8] sm:$0xff]
    %v1323 = vld [vmem:[#allocation7 + $0xc0] sm:$0xff]
    %v1324 = vld [vmem:[#allocation7 + $0xc8] sm:$0xff]
    %v1325 = vld [vmem:[#allocation7 + $0xd0] sm:$0xff]
    %v1326 = vld [vmem:[#allocation7 + $0xd8] sm:$0xff]
    %v1327 = vld [vmem:[#allocation7 + $0xe0] sm:$0xff]
    %v1328 = vld [vmem:[#allocation7 + $0xe8] sm:$0xff]
    %v1329 = vld [vmem:[#allocation7 + $0xf0] sm:$0xff]
    %v1330 = vld [vmem:[#allocation7 + $0xf8] sm:$0xff]
    %v1331 = vld [vmem:[#allocation7 + $0x100] sm:$0xff]
    %v1332 = vld [vmem:[#allocation7 + $0x108] sm:$0xff]
    %v1333 = vld [vmem:[#allocation7 + $0x110] sm:$0xff]
    %v1334 = vld [vmem:[#allocation7 + $0x118] sm:$0xff]
    %v1335 = vld [vmem:[#allocation7 + $0x120] sm:$0xff]
    %v1336 = vld [vmem:[#allocation7 + $0x128] sm:$0xff]
    %v1337 = vld [vmem:[#allocation7 + $0x130] sm:$0xff]
    %v1338 = vld [vmem:[#allocation7 + $0x138] sm:$0xff]
    %v1339 = vld [vmem:[#allocation7 + $0x140] sm:$0xff]
    %v1340 = vld [vmem:[#allocation7 + $0x148] sm:$0xff]
    %v1341 = vld [vmem:[#allocation7 + $0x150] sm:$0xff]
    %v1342 = vld [vmem:[#allocation7 + $0x158] sm:$0xff]
    %v1343 = vld [vmem:[#allocation7 + $0x160] sm:$0xff]
    %v1344 = vld [vmem:[#allocation7 + $0x168] sm:$0xff]
    %v1345 = vld [vmem:[#allocation7 + $0x170] sm:$0xff]
    %v1346 = vld [vmem:[#allocation7 + $0x178] sm:$0xff]
    %v1347 = vld [vmem:[#allocation7 + $0x180] sm:$0xff]
    %v1348 = vld [vmem:[#allocation7 + $0x188] sm:$0xff]
    %v1349 = vld [vmem:[#allocation7 + $0x190] sm:$0xff]
    %v1350 = vld [vmem:[#allocation7 + $0x198] sm:$0xff]
    %v1351 = vld [vmem:[#allocation7 + $0x1a0] sm:$0xff]
    %v1352 = vld [vmem:[#allocation7 + $0x1a8] sm:$0xff]
    %v1353 = vld [vmem:[#allocation7 + $0x1b0] sm:$0xff]
    %v1354 = vld [vmem:[#allocation7 + $0x1b8] sm:$0xff]
    %v1355 = vld [vmem:[#allocation7 + $0x1c0] sm:$0xff]
    %v1356 = vld [vmem:[#allocation7 + $0x1c8] sm:$0xff]
    %v1357 = vld [vmem:[#allocation7 + $0x1d0] sm:$0xff]
    %v1358 = vld [vmem:[#allocation7 + $0x1d8] sm:$0xff]
    %v1359 = vld [vmem:[#allocation7 + $0x1e0] sm:$0xff]
    %v1360 = vld [vmem:[#allocation7 + $0x1e8] sm:$0xff]
    %v1361 = vld [vmem:[#allocation7 + $0x1f0] sm:$0xff]
    %v1362 = vld [vmem:[#allocation7 + $0x1f8] sm:$0xff]
    %v1363 = vld [vmem:[#allocation7 + $0x200] sm:$0xff]
    %v1364 = vld [vmem:[#allocation7 + $0x208] sm:$0xff]
    %v1365 = vld [vmem:[#allocation7 + $0x210] sm:$0xff]
    %v1366 = vld [vmem:[#allocation7 + $0x218] sm:$0xff]
    %v1367 = vld [vmem:[#allocation7 + $0x220] sm:$0xff]
    %v1368 = vld [vmem:[#allocation7 + $0x228] sm:$0xff]
    %v1369 = vld [vmem:[#allocation7 + $0x230] sm:$0xff]
    %v1370 = vld [vmem:[#allocation7 + $0x238] sm:$0xff]
    %v1371 = vld [vmem:[#allocation7 + $0x240] sm:$0xff]
    %v1372 = vld [vmem:[#allocation7 + $0x248] sm:$0xff]
    %v1373 = vld [vmem:[#allocation7 + $0x250] sm:$0xff]
    %v1374 = vld [vmem:[#allocation7 + $0x258] sm:$0xff]
    %v1375 = vld [vmem:[#allocation7 + $0x260] sm:$0xff]
    %v1376 = vld [vmem:[#allocation7 + $0x268] sm:$0xff]
    %v1377 = vld [vmem:[#allocation7 + $0x270] sm:$0xff]
    %v1378 = vld [vmem:[#allocation7 + $0x278] sm:$0xff]
    %v1379 = vld [vmem:[#allocation7 + $0x280] sm:$0xff]
    %v1380 = vld [vmem:[#allocation7 + $0x288] sm:$0xff]
    %v1381 = vld [vmem:[#allocation7 + $0x290] sm:$0xff]
    %v1382 = vld [vmem:[#allocation7 + $0x298] sm:$0xff]
    %v1383 = vld [vmem:[#allocation7 + $0x2a0] sm:$0xff]
    %v1384 = vld [vmem:[#allocation7 + $0x2a8] sm:$0xff]
    %v1385 = vld [vmem:[#allocation7 + $0x2b0] sm:$0xff]
    %v1386 = vld [vmem:[#allocation7 + $0x2b8] sm:$0xff]
    %v1387 = vld [vmem:[#allocation7 + $0x2c0] sm:$0xff]
    %v1388 = vld [vmem:[#allocation7 + $0x2c8] sm:$0xff]
    %v1389 = vld [vmem:[#allocation7 + $0x2d0] sm:$0xff]
    %v1390 = vld [vmem:[#allocation7 + $0x2d8] sm:$0xff]
    %v1391 = vld [vmem:[#allocation7 + $0x2e0] sm:$0xff]
    %v1392 = vld [vmem:[#allocation7 + $0x2e8] sm:$0xff]
    %v1393 = vld [vmem:[#allocation7 + $0x2f0] sm:$0xff]
    %v1394 = vld [vmem:[#allocation7 + $0x2f8] sm:$0xff]
    %v1395 = vld [vmem:[#allocation7 + $0x300] sm:$0xff]
    %v1396 = vld [vmem:[#allocation7 + $0x308] sm:$0xff]
    %v1397 = vld [vmem:[#allocation7 + $0x310] sm:$0xff]
    %v1398 = vld [vmem:[#allocation7 + $0x318] sm:$0xff]
    %v1399 = vld [vmem:[#allocation7 + $0x320] sm:$0xff]
    %v1400 = vld [vmem:[#allocation7 + $0x328] sm:$0xff]
    %v1401 = vld [vmem:[#allocation7 + $0x330] sm:$0xff]
    %v1402 = vld [vmem:[#allocation7 + $0x338] sm:$0xff]
    %v1403 = vld [vmem:[#allocation7 + $0x340] sm:$0xff]
    %v1404 = vld [vmem:[#allocation7 + $0x348] sm:$0xff]
    %v1405 = vld [vmem:[#allocation7 + $0x350] sm:$0xff]
    %v1406 = vld [vmem:[#allocation7 + $0x358] sm:$0xff]
    %v1407 = vld [vmem:[#allocation7 + $0x360] sm:$0xff]
    %v1408 = vld [vmem:[#allocation7 + $0x368] sm:$0xff]
    %v1409 = vld [vmem:[#allocation7 + $0x370] sm:$0xff]
    %v1410 = vld [vmem:[#allocation7 + $0x378] sm:$0xff]
    %v1411 = vld [vmem:[#allocation7 + $0x380] sm:$0xff]
    %v1412 = vld [vmem:[#allocation7 + $0x388] sm:$0xff]
    %v1413 = vld [vmem:[#allocation7 + $0x390] sm:$0xff]
    %v1414 = vld [vmem:[#allocation7 + $0x398] sm:$0xff]
    %v1415 = vld [vmem:[#allocation7 + $0x3a0] sm:$0xff]
    %v1416 = vld [vmem:[#allocation7 + $0x3a8] sm:$0xff]
    %v1417 = vld [vmem:[#allocation7 + $0x3b0] sm:$0xff]
    %v1418 = vld [vmem:[#allocation7 + $0x3b8] sm:$0xff]
    %v1419 = vld [vmem:[#allocation7 + $0x3c0] sm:$0xff]
    %v1420 = vld [vmem:[#allocation7 + $0x3c8] sm:$0xff]
    %v1421 = vld [vmem:[#allocation7 + $0x3d0] sm:$0xff]
    %v1422 = vld [vmem:[#allocation7 + $0x3d8] sm:$0xff]
    %v1423 = vld [vmem:[#allocation7 + $0x3e0] sm:$0xff]
    %v1424 = vld [vmem:[#allocation7 + $0x3e8] sm:$0xff]
    %v1425 = vld [vmem:[#allocation7 + $0x3f0] sm:$0xff]
    %v1426 = vld [vmem:[#allocation7 + $0x3f8] sm:$0xff]
    %v1427 = vld [vmem:[%s4] sm:$0xf]
    %v1429 = vlaneseq
    %v1430 = vshrl.u32 %v1429, 7
    %v1431 = vsub.s32 0, %v1430
    %v1432 = vrot.slane %v1427, %v1431
    %v1433 = vlaneseq
    %v1434 = vshrl.u32 %v1433, 7
    %v1435 = vsub.s32 1, %v1434
    %v1436 = vrot.slane %v1427, %v1435
    %v1437 = vlaneseq
    %v1438 = vshrl.u32 %v1437, 7
    %v1439 = vsub.s32 2, %v1438
    %v1440 = vrot.slane %v1427, %v1439
    %v1441 = vlaneseq
    %v1442 = vshrl.u32 %v1441, 7
    %v1443 = vsub.s32 3, %v1442
    %v1444 = vrot.slane %v1427, %v1443
    %1449 = vmatprep.subr.mxu0 %v1300
    %1450 = vmatpush1.msra.mxu0 %v1299
    %1451 = vmatprep.subr.mxu0 %v1304
    %1452 = vmatpush1.msra.mxu0 %v1303
    %1453 = vmatprep.subr.mxu0 %v1308
    %1454 = vmatpush1.msra.mxu0 %v1307
    %1455 = vmatprep.subr.mxu0 %v1312
    %1456 = vmatpush1.msra.mxu0 %v1311
    %1457 = vmatprep.subr.mxu0 %v1316
    %1458 = vmatpush1.msra.mxu0 %v1315
    %1459 = vmatprep.subr.mxu0 %v1320
    %1460 = vmatpush1.msra.mxu0 %v1319
    %1461 = vmatprep.subr.mxu0 %v1324
    %1462 = vmatpush1.msra.mxu0 %v1323
    %1463 = vmatprep.subr.mxu0 %v1328
    %1464 = vmatpush1.msra.mxu0 %v1327
    %1465 = vmatprep.subr.mxu0 %v1332
    %1466 = vmatpush1.msra.mxu0 %v1331
    %1467 = vmatprep.subr.mxu0 %v1336
    %1468 = vmatpush1.msra.mxu0 %v1335
    %1469 = vmatprep.subr.mxu0 %v1340
    %1470 = vmatpush1.msra.mxu0 %v1339
    %1471 = vmatprep.subr.mxu0 %v1344
    %1472 = vmatpush1.msra.mxu0 %v1343
    %1473 = vmatprep.subr.mxu0 %v1348
    %1474 = vmatpush1.msra.mxu0 %v1347
    %1475 = vmatprep.subr.mxu0 %v1352
    %1476 = vmatpush1.msra.mxu0 %v1351
    %1477 = vmatprep.subr.mxu0 %v1356
    %1478 = vmatpush1.msra.mxu0 %v1355
    %1479 = vmatprep.subr.mxu0 %v1360
    %1480 = vmatpush1.msra.mxu0 %v1359
    %1481 = vmatprep.subr.mxu0 %v1364
    %1482 = vmatpush1.msra.mxu0 %v1363
    %1483 = vmatprep.subr.mxu0 %v1368
    %1484 = vmatpush1.msra.mxu0 %v1367
    %1485 = vmatprep.subr.mxu0 %v1372
    %1486 = vmatpush1.msra.mxu0 %v1371
    %1487 = vmatprep.subr.mxu0 %v1376
    %1488 = vmatpush1.msra.mxu0 %v1375
    %1489 = vmatprep.subr.mxu0 %v1380
    %1490 = vmatpush1.msra.mxu0 %v1379
    %1491 = vmatprep.subr.mxu0 %v1384
    %1492 = vmatpush1.msra.mxu0 %v1383
    %1493 = vmatprep.subr.mxu0 %v1388
    %1494 = vmatpush1.msra.mxu0 %v1387
    %1495 = vmatprep.subr.mxu0 %v1392
    %1496 = vmatpush1.msra.mxu0 %v1391
    %1497 = vmatprep.subr.mxu0 %v1396
    %1498 = vmatpush1.msra.mxu0 %v1395
    %1499 = vmatprep.subr.mxu0 %v1400
    %1500 = vmatpush1.msra.mxu0 %v1399
    %1501 = vmatprep.subr.mxu0 %v1404
    %1502 = vmatpush1.msra.mxu0 %v1403
    %1503 = vmatprep.subr.mxu0 %v1408
    %1504 = vmatpush1.msra.mxu0 %v1407
    %1505 = vmatprep.subr.mxu0 %v1412
    %1506 = vmatpush1.msra.mxu0 %v1411
    %1507 = vmatprep.subr.mxu0 %v1416
    %1508 = vmatpush1.msra.mxu0 %v1415
    %1509 = vmatprep.subr.mxu0 %v1420
    %1510 = vmatpush1.msra.mxu0 %v1419
    %1511 = vmatprep.subr.mxu0 %v1424
    %1512 = vmatpush1.msra.mxu0 %v1423
    %1513 = vmatprep.mubr.f32.mxu0 %v1203
    %1514 = vmatmul.mubr.f32.gmra.mrb[0].mxu0 %v1298
    %v1515 = vpop.f32.mrb[0].mxu0
    %v1516 = vadd.f32 %v1432, %v1515
    %v1517 = vpop.f32.mrb[0].mxu0
    %v1518 = vadd.f32 %v1436, %v1517
    %1519 = vdwg.mxu0
    %1520 = vmatprep.subr.mxu0 %v1302
    %1521 = vmatpush1.msra.mxu0 %v1301
    %1522 = vmatprep.subr.mxu0 %v1306
    %1523 = vmatpush1.msra.mxu0 %v1305
    %1524 = vmatprep.subr.mxu0 %v1310
    %1525 = vmatpush1.msra.mxu0 %v1309
    %1526 = vmatprep.subr.mxu0 %v1314
    %1527 = vmatpush1.msra.mxu0 %v1313
    %1528 = vmatprep.subr.mxu0 %v1318
    %1529 = vmatpush1.msra.mxu0 %v1317
    %1530 = vmatprep.subr.mxu0 %v1322
    %1531 = vmatpush1.msra.mxu0 %v1321
    %1532 = vmatprep.subr.mxu0 %v1326
    %1533 = vmatpush1.msra.mxu0 %v1325
    %1534 = vmatprep.subr.mxu0 %v1330
    %1535 = vmatpush1.msra.mxu0 %v1329
    %1536 = vmatprep.subr.mxu0 %v1334
    %1537 = vmatpush1.msra.mxu0 %v1333
    %1538 = vmatprep.subr.mxu0 %v1338
    %1539 = vmatpush1.msra.mxu0 %v1337
    %1540 = vmatprep.subr.mxu0 %v1342
    %1541 = vmatpush1.msra.mxu0 %v1341
    %1542 = vmatprep.subr.mxu0 %v1346
    %1543 = vmatpush1.msra.mxu0 %v1345
    %1544 = vmatprep.subr.mxu0 %v1350
    %1545 = vmatpush1.msra.mxu0 %v1349
    %1546 = vmatprep.subr.mxu0 %v1354
    %1547 = vmatpush1.msra.mxu0 %v1353
    %1548 = vmatprep.subr.mxu0 %v1358
    %1549 = vmatpush1.msra.mxu0 %v1357
    %1550 = vmatprep.subr.mxu0 %v1362
    %1551 = vmatpush1.msra.mxu0 %v1361
    %1552 = vmatprep.subr.mxu0 %v1366
    %1553 = vmatpush1.msra.mxu0 %v1365
    %1554 = vmatprep.subr.mxu0 %v1370
    %1555 = vmatpush1.msra.mxu0 %v1369
    %1556 = vmatprep.subr.mxu0 %v1374
    %1557 = vmatpush1.msra.mxu0 %v1373
    %1558 = vmatprep.subr.mxu0 %v1378
    %1559 = vmatpush1.msra.mxu0 %v1377
    %1560 = vmatprep.subr.mxu0 %v1382
    %1561 = vmatpush1.msra.mxu0 %v1381
    %1562 = vmatprep.subr.mxu0 %v1386
    %1563 = vmatpush1.msra.mxu0 %v1385
    %1564 = vmatprep.subr.mxu0 %v1390
    %1565 = vmatpush1.msra.mxu0 %v1389
    %1566 = vmatprep.subr.mxu0 %v1394
    %1567 = vmatpush1.msra.mxu0 %v1393
    %1568 = vmatprep.subr.mxu0 %v1398
    %1569 = vmatpush1.msra.mxu0 %v1397
    %1570 = vmatprep.subr.mxu0 %v1402
    %1571 = vmatpush1.msra.mxu0 %v1401
    %1572 = vmatprep.subr.mxu0 %v1406
    %1573 = vmatpush1.msra.mxu0 %v1405
    %1574 = vmatprep.subr.mxu0 %v1410
    %1575 = vmatpush1.msra.mxu0 %v1409
    %1576 = vmatprep.subr.mxu0 %v1414
    %1577 = vmatpush1.msra.mxu0 %v1413
    %1578 = vmatprep.subr.mxu0 %v1418
    %1579 = vmatpush1.msra.mxu0 %v1417
    %1580 = vmatprep.subr.mxu0 %v1422
    %1581 = vmatpush1.msra.mxu0 %v1421
    %1582 = vmatprep.subr.mxu0 %v1426
    %1583 = vmatpush1.msra.mxu0 %v1425
    %1584 = vmatprep.mubr.f32.mxu0 %v1203
    %1585 = vmatmul.mubr.f32.gmra.mrb[0].mxu0 %v1298
    %v1586 = vpop.f32.mrb[0].mxu0
    %v1587 = vadd.f32 %v1440, %v1586
    %v1588 = vpop.f32.mrb[0].mxu0
    %v1589 = vadd.f32 %v1444, %v1588
    %1590 = vdwg.mxu0
    %v1591 = vxor.u32 %v1516, 2147483648
    %v1592 = vxor.u32 %v1518, 2147483648
    %v1593 = vmul.f32 %v1591, 1.442695
    %v1594 = vpow.pop %v1593
    %v1595 = vmul.f32 %v1592, 1.442695
    %v1596 = vpow.pop %v1595
    %v1597 = vadd.f32 %v1594, 1.0
    %v1598 = vadd.f32 %v1596, 1.0
    %v1599 = vrcp.pop %v1597
    %v1600 = vmul.f32 1.0, %v1599
    %v1601 = vrcp.pop %v1598
    %v1602 = vmul.f32 1.0, %v1601
    %v1603 = vmul.f32 %v1600, %v1589
    %v1604 = vadd.f32 %v1587, %v1603
    %v1605 = vtanh.pop %v1604
    %v1606 = vsub.f32 1.0, %v1602
    %v1607 = vmul.f32 %v1606, %v1605
    %v1608 = vmul.f32 %v1602, %v1203
    %v1609 = vadd.f32 %v1607, %v1608
    %v1610 = vld [vmem:[#allocation9] sm:$0xff]
    %v1611 = vld [vmem:[#allocation9 + $0x8] sm:$0xff]
    %v1612 = vld [vmem:[#allocation9 + $0x10] sm:$0xff]
    %v1613 = vld [vmem:[#allocation9 + $0x18] sm:$0xff]
    %v1614 = vld [vmem:[#allocation9 + $0x20] sm:$0xff]
    %v1615 = vld [vmem:[#allocation9 + $0x28] sm:$0xff]
    %v1616 = vld [vmem:[#allocation9 + $0x30] sm:$0xff]
    %v1617 = vld [vmem:[#allocation9 + $0x38] sm:$0xff]
    %v1618 = vld [vmem:[#allocation9 + $0x40] sm:$0xff]
    %v1619 = vld [vmem:[#allocation9 + $0x48] sm:$0xff]
    %v1620 = vld [vmem:[#allocation9 + $0x50] sm:$0xff]
    %v1621 = vld [vmem:[#allocation9 + $0x58] sm:$0xff]
    %v1622 = vld [vmem:[#allocation9 + $0x60] sm:$0xff]
    %v1623 = vld [vmem:[#allocation9 + $0x68] sm:$0xff]
    %v1624 = vld [vmem:[#allocation9 + $0x70] sm:$0xff]
    %v1625 = vld [vmem:[#allocation9 + $0x78] sm:$0xff]
    %v1626 = vld [vmem:[%s6] sm:$0x1]
    %1627 = vmatprep.subr.mxu0 0.0
    %1628 = vmatpush1.msra.mxu0 %v1610
    %1629 = vmatprep.subr.mxu0 0.0
    %1630 = vmatpush1.msra.mxu0 %v1611
    %1631 = vmatprep.subr.mxu0 0.0
    %1632 = vmatpush1.msra.mxu0 %v1612
    %1633 = vmatprep.subr.mxu0 0.0
    %1634 = vmatpush1.msra.mxu0 %v1613
    %1635 = vmatprep.subr.mxu0 0.0
    %1636 = vmatpush1.msra.mxu0 %v1614
    %1637 = vmatprep.subr.mxu0 0.0
    %1638 = vmatpush1.msra.mxu0 %v1615
    %1639 = vmatprep.subr.mxu0 0.0
    %1640 = vmatpush1.msra.mxu0 %v1616
    %1641 = vmatprep.subr.mxu0 0.0
    %1642 = vmatpush1.msra.mxu0 %v1617
    %1643 = vmatprep.subr.mxu0 0.0
    %1644 = vmatpush1.msra.mxu0 %v1618
    %1645 = vmatprep.subr.mxu0 0.0
    %1646 = vmatpush1.msra.mxu0 %v1619
    %1647 = vmatprep.subr.mxu0 0.0
    %1648 = vmatpush1.msra.mxu0 %v1620
    %1649 = vmatprep.subr.mxu0 0.0
    %1650 = vmatpush1.msra.mxu0 %v1621
    %1651 = vmatprep.subr.mxu0 0.0
    %1652 = vmatpush1.msra.mxu0 %v1622
    %1653 = vmatprep.subr.mxu0 0.0
    %1654 = vmatpush1.msra.mxu0 %v1623
    %1655 = vmatprep.subr.mxu0 0.0
    %1656 = vmatpush1.msra.mxu0 %v1624
    %1657 = vmatprep.subr.mxu0 0.0
    %1658 = vmatpush1.msra.mxu0 %v1625
    %1659 = vmatprep.subr.mxu0 0.0
    %1660 = vmatpush1.msra.mxu0 0.0
    %1661 = vmatprep.subr.mxu0 0.0
    %1662 = vmatpush1.msra.mxu0 0.0
    %1663 = vmatprep.subr.mxu0 0.0
    %1664 = vmatpush1.msra.mxu0 0.0
    %1665 = vmatprep.subr.mxu0 0.0
    %1666 = vmatpush1.msra.mxu0 0.0
    %1667 = vmatprep.subr.mxu0 0.0
    %1668 = vmatpush1.msra.mxu0 0.0
    %1669 = vmatprep.subr.mxu0 0.0
    %1670 = vmatpush1.msra.mxu0 0.0
    %1671 = vmatprep.subr.mxu0 0.0
    %1672 = vmatpush1.msra.mxu0 0.0
    %1673 = vmatprep.subr.mxu0 0.0
    %1674 = vmatpush1.msra.mxu0 0.0
    %1675 = vmatprep.subr.mxu0 0.0
    %1676 = vmatpush1.msra.mxu0 0.0
    %1677 = vmatprep.subr.mxu0 0.0
    %1678 = vmatpush1.msra.mxu0 0.0
    %1679 = vmatprep.subr.mxu0 0.0
    %1680 = vmatpush1.msra.mxu0 0.0
    %1681 = vmatprep.subr.mxu0 0.0
    %1682 = vmatpush1.msra.mxu0 0.0
    %1683 = vmatprep.subr.mxu0 0.0
    %1684 = vmatpush1.msra.mxu0 0.0
    %1685 = vmatprep.subr.mxu0 0.0
    %1686 = vmatpush1.msra.mxu0 0.0
    %1687 = vmatprep.subr.mxu0 0.0
    %1688 = vmatpush1.msra.mxu0 0.0
    %1689 = vmatprep.subr.mxu0 0.0
    %1690 = vmatpush1.msra.mxu0 0.0
    %1691 = vmatprep.mubr.f32.mxu0 0.0
    %1692 = vmatmul.mubr.f32.gmra.mrb[0].mxu0 %v1609
    %v1693 = vpop.f32.mrb[0].mxu0
    %v1694 = vadd.f32 %v1626, %v1693
    %v1695 = vpop.f32.mrb[0].mxu0
    %1696 = vdwg.mxu0
    %1697 = vst [vmem:[#allocation10 + $0x3] sm:$0x1] %v1694
    %s1698 = sld [smem:[#allocation3 + $0x4]]
    %p1699 = scmp.gt.s32.totalorder %s1698, 0
    %s1700 = scalar_select %p1699, %s1698, 0
    %p1701 = scmp.lt.s32.totalorder %s1700, 63
    %s1702 = scalar_select %p1701, %s1700, 63
    %s1703 = scalar_lea.vmem [#allocation4], %s1702
    %v1704 = vld [vmem:[%s1703] sm:$0x1]
    %v1705 = vld [vmem:[#allocation7] sm:$0xff]
    %v1706 = vld [vmem:[#allocation7 + $0x8] sm:$0xff]
    %v1707 = vld [vmem:[#allocation7 + $0x10] sm:$0xff]
    %v1708 = vld [vmem:[#allocation7 + $0x18] sm:$0xff]
    %v1709 = vld [vmem:[#allocation7 + $0x20] sm:$0xff]
    %v1710 = vld [vmem:[#allocation7 + $0x28] sm:$0xff]
    %v1711 = vld [vmem:[#allocation7 + $0x30] sm:$0xff]
    %v1712 = vld [vmem:[#allocation7 + $0x38] sm:$0xff]
    %v1713 = vld [vmem:[#allocation7 + $0x40] sm:$0xff]
    %v1714 = vld [vmem:[#allocation7 + $0x48] sm:$0xff]
    %v1715 = vld [vmem:[#allocation7 + $0x50] sm:$0xff]
    %v1716 = vld [vmem:[#allocation7 + $0x58] sm:$0xff]
    %v1717 = vld [vmem:[#allocation7 + $0x60] sm:$0xff]
    %v1718 = vld [vmem:[#allocation7 + $0x68] sm:$0xff]
    %v1719 = vld [vmem:[#allocation7 + $0x70] sm:$0xff]
    %v1720 = vld [vmem:[#allocation7 + $0x78] sm:$0xff]
    %v1721 = vld [vmem:[#allocation7 + $0x80] sm:$0xff]
    %v1722 = vld [vmem:[#allocation7 + $0x88] sm:$0xff]
    %v1723 = vld [vmem:[#allocation7 + $0x90] sm:$0xff]
    %v1724 = vld [vmem:[#allocation7 + $0x98] sm:$0xff]
    %v1725 = vld [vmem:[#allocation7 + $0xa0] sm:$0xff]
    %v1726 = vld [vmem:[#allocation7 + $0xa8] sm:$0xff]
    %v1727 = vld [vmem:[#allocation7 + $0xb0] sm:$0xff]
    %v1728 = vld [vmem:[#allocation7 + $0xb8] sm:$0xff]
    %v1729 = vld [vmem:[#allocation7 + $0xc0] sm:$0xff]
    %v1730 = vld [vmem:[#allocation7 + $0xc8] sm:$0xff]
    %v1731 = vld [vmem:[#allocation7 + $0xd0] sm:$0xff]
    %v1732 = vld [vmem:[#allocation7 + $0xd8] sm:$0xff]
    %v1733 = vld [vmem:[#allocation7 + $0xe0] sm:$0xff]
    %v1734 = vld [vmem:[#allocation7 + $0xe8] sm:$0xff]
    %v1735 = vld [vmem:[#allocation7 + $0xf0] sm:$0xff]
    %v1736 = vld [vmem:[#allocation7 + $0xf8] sm:$0xff]
    %v1737 = vld [vmem:[#allocation7 + $0x100] sm:$0xff]
    %v1738 = vld [vmem:[#allocation7 + $0x108] sm:$0xff]
    %v1739 = vld [vmem:[#allocation7 + $0x110] sm:$0xff]
    %v1740 = vld [vmem:[#allocation7 + $0x118] sm:$0xff]
    %v1741 = vld [vmem:[#allocation7 + $0x120] sm:$0xff]
    %v1742 = vld [vmem:[#allocation7 + $0x128] sm:$0xff]
    %v1743 = vld [vmem:[#allocation7 + $0x130] sm:$0xff]
    %v1744 = vld [vmem:[#allocation7 + $0x138] sm:$0xff]
    %v1745 = vld [vmem:[#allocation7 + $0x140] sm:$0xff]
    %v1746 = vld [vmem:[#allocation7 + $0x148] sm:$0xff]
    %v1747 = vld [vmem:[#allocation7 + $0x150] sm:$0xff]
    %v1748 = vld [vmem:[#allocation7 + $0x158] sm:$0xff]
    %v1749 = vld [vmem:[#allocation7 + $0x160] sm:$0xff]
    %v1750 = vld [vmem:[#allocation7 + $0x168] sm:$0xff]
    %v1751 = vld [vmem:[#allocation7 + $0x170] sm:$0xff]
    %v1752 = vld [vmem:[#allocation7 + $0x178] sm:$0xff]
    %v1753 = vld [vmem:[#allocation7 + $0x180] sm:$0xff]
    %v1754 = vld [vmem:[#allocation7 + $0x188] sm:$0xff]
    %v1755 = vld [vmem:[#allocation7 + $0x190] sm:$0xff]
    %v1756 = vld [vmem:[#allocation7 + $0x198] sm:$0xff]
    %v1757 = vld [vmem:[#allocation7 + $0x1a0] sm:$0xff]
    %v1758 = vld [vmem:[#allocation7 + $0x1a8] sm:$0xff]
    %v1759 = vld [vmem:[#allocation7 + $0x1b0] sm:$0xff]
    %v1760 = vld [vmem:[#allocation7 + $0x1b8] sm:$0xff]
    %v1761 = vld [vmem:[#allocation7 + $0x1c0] sm:$0xff]
    %v1762 = vld [vmem:[#allocation7 + $0x1c8] sm:$0xff]
    %v1763 = vld [vmem:[#allocation7 + $0x1d0] sm:$0xff]
    %v1764 = vld [vmem:[#allocation7 + $0x1d8] sm:$0xff]
    %v1765 = vld [vmem:[#allocation7 + $0x1e0] sm:$0xff]
    %v1766 = vld [vmem:[#allocation7 + $0x1e8] sm:$0xff]
    %v1767 = vld [vmem:[#allocation7 + $0x1f0] sm:$0xff]
    %v1768 = vld [vmem:[#allocation7 + $0x1f8] sm:$0xff]
    %v1769 = vld [vmem:[#allocation7 + $0x200] sm:$0xff]
    %v1770 = vld [vmem:[#allocation7 + $0x208] sm:$0xff]
    %v1771 = vld [vmem:[#allocation7 + $0x210] sm:$0xff]
    %v1772 = vld [vmem:[#allocation7 + $0x218] sm:$0xff]
    %v1773 = vld [vmem:[#allocation7 + $0x220] sm:$0xff]
    %v1774 = vld [vmem:[#allocation7 + $0x228] sm:$0xff]
    %v1775 = vld [vmem:[#allocation7 + $0x230] sm:$0xff]
    %v1776 = vld [vmem:[#allocation7 + $0x238] sm:$0xff]
    %v1777 = vld [vmem:[#allocation7 + $0x240] sm:$0xff]
    %v1778 = vld [vmem:[#allocation7 + $0x248] sm:$0xff]
    %v1779 = vld [vmem:[#allocation7 + $0x250] sm:$0xff]
    %v1780 = vld [vmem:[#allocation7 + $0x258] sm:$0xff]
    %v1781 = vld [vmem:[#allocation7 + $0x260] sm:$0xff]
    %v1782 = vld [vmem:[#allocation7 + $0x268] sm:$0xff]
    %v1783 = vld [vmem:[#allocation7 + $0x270] sm:$0xff]
    %v1784 = vld [vmem:[#allocation7 + $0x278] sm:$0xff]
    %v1785 = vld [vmem:[#allocation7 + $0x280] sm:$0xff]
    %v1786 = vld [vmem:[#allocation7 + $0x288] sm:$0xff]
    %v1787 = vld [vmem:[#allocation7 + $0x290] sm:$0xff]
    %v1788 = vld [vmem:[#allocation7 + $0x298] sm:$0xff]
    %v1789 = vld [vmem:[#allocation7 + $0x2a0] sm:$0xff]
    %v1790 = vld [vmem:[#allocation7 + $0x2a8] sm:$0xff]
    %v1791 = vld [vmem:[#allocation7 + $0x2b0] sm:$0xff]
    %v1792 = vld [vmem:[#allocation7 + $0x2b8] sm:$0xff]
    %v1793 = vld [vmem:[#allocation7 + $0x2c0] sm:$0xff]
    %v1794 = vld [vmem:[#allocation7 + $0x2c8] sm:$0xff]
    %v1795 = vld [vmem:[#allocation7 + $0x2d0] sm:$0xff]
    %v1796 = vld [vmem:[#allocation7 + $0x2d8] sm:$0xff]
    %v1797 = vld [vmem:[#allocation7 + $0x2e0] sm:$0xff]
    %v1798 = vld [vmem:[#allocation7 + $0x2e8] sm:$0xff]
    %v1799 = vld [vmem:[#allocation7 + $0x2f0] sm:$0xff]
    %v1800 = vld [vmem:[#allocation7 + $0x2f8] sm:$0xff]
    %v1801 = vld [vmem:[#allocation7 + $0x300] sm:$0xff]
    %v1802 = vld [vmem:[#allocation7 + $0x308] sm:$0xff]
    %v1803 = vld [vmem:[#allocation7 + $0x310] sm:$0xff]
    %v1804 = vld [vmem:[#allocation7 + $0x318] sm:$0xff]
    %v1805 = vld [vmem:[#allocation7 + $0x320] sm:$0xff]
    %v1806 = vld [vmem:[#allocation7 + $0x328] sm:$0xff]
    %v1807 = vld [vmem:[#allocation7 + $0x330] sm:$0xff]
    %v1808 = vld [vmem:[#allocation7 + $0x338] sm:$0xff]
    %v1809 = vld [vmem:[#allocation7 + $0x340] sm:$0xff]
    %v1810 = vld [vmem:[#allocation7 + $0x348] sm:$0xff]
    %v1811 = vld [vmem:[#allocation7 + $0x350] sm:$0xff]
    %v1812 = vld [vmem:[#allocation7 + $0x358] sm:$0xff]
    %v1813 = vld [vmem:[#allocation7 + $0x360] sm:$0xff]
    %v1814 = vld [vmem:[#allocation7 + $0x368] sm:$0xff]
    %v1815 = vld [vmem:[#allocation7 + $0x370] sm:$0xff]
    %v1816 = vld [vmem:[#allocation7 + $0x378] sm:$0xff]
    %v1817 = vld [vmem:[#allocation7 + $0x380] sm:$0xff]
    %v1818 = vld [vmem:[#allocation7 + $0x388] sm:$0xff]
    %v1819 = vld [vmem:[#allocation7 + $0x390] sm:$0xff]
    %v1820 = vld [vmem:[#allocation7 + $0x398] sm:$0xff]
    %v1821 = vld [vmem:[#allocation7 + $0x3a0] sm:$0xff]
    %v1822 = vld [vmem:[#allocation7 + $0x3a8] sm:$0xff]
    %v1823 = vld [vmem:[#allocation7 + $0x3b0] sm:$0xff]
    %v1824 = vld [vmem:[#allocation7 + $0x3b8] sm:$0xff]
    %v1825 = vld [vmem:[#allocation7 + $0x3c0] sm:$0xff]
    %v1826 = vld [vmem:[#allocation7 + $0x3c8] sm:$0xff]
    %v1827 = vld [vmem:[#allocation7 + $0x3d0] sm:$0xff]
    %v1828 = vld [vmem:[#allocation7 + $0x3d8] sm:$0xff]
    %v1829 = vld [vmem:[#allocation7 + $0x3e0] sm:$0xff]
    %v1830 = vld [vmem:[#allocation7 + $0x3e8] sm:$0xff]
    %v1831 = vld [vmem:[#allocation7 + $0x3f0] sm:$0xff]
    %v1832 = vld [vmem:[#allocation7 + $0x3f8] sm:$0xff]
    %v1833 = vld [vmem:[%s4] sm:$0xf]
    %v1835 = vlaneseq
    %v1836 = vshrl.u32 %v1835, 7
    %v1837 = vsub.s32 0, %v1836
    %v1838 = vrot.slane %v1833, %v1837
    %v1839 = vlaneseq
    %v1840 = vshrl.u32 %v1839, 7
    %v1841 = vsub.s32 1, %v1840
    %v1842 = vrot.slane %v1833, %v1841
    %v1843 = vlaneseq
    %v1844 = vshrl.u32 %v1843, 7
    %v1845 = vsub.s32 2, %v1844
    %v1846 = vrot.slane %v1833, %v1845
    %v1847 = vlaneseq
    %v1848 = vshrl.u32 %v1847, 7
    %v1849 = vsub.s32 3, %v1848
    %v1850 = vrot.slane %v1833, %v1849
    %1855 = vmatprep.subr.mxu0 %v1706
    %1856 = vmatpush1.msra.mxu0 %v1705
    %1857 = vmatprep.subr.mxu0 %v1710
    %1858 = vmatpush1.msra.mxu0 %v1709
    %1859 = vmatprep.subr.mxu0 %v1714
    %1860 = vmatpush1.msra.mxu0 %v1713
    %1861 = vmatprep.subr.mxu0 %v1718
    %1862 = vmatpush1.msra.mxu0 %v1717
    %1863 = vmatprep.subr.mxu0 %v1722
    %1864 = vmatpush1.msra.mxu0 %v1721
    %1865 = vmatprep.subr.mxu0 %v1726
    %1866 = vmatpush1.msra.mxu0 %v1725
    %1867 = vmatprep.subr.mxu0 %v1730
    %1868 = vmatpush1.msra.mxu0 %v1729
    %1869 = vmatprep.subr.mxu0 %v1734
    %1870 = vmatpush1.msra.mxu0 %v1733
    %1871 = vmatprep.subr.mxu0 %v1738
    %1872 = vmatpush1.msra.mxu0 %v1737
    %1873 = vmatprep.subr.mxu0 %v1742
    %1874 = vmatpush1.msra.mxu0 %v1741
    %1875 = vmatprep.subr.mxu0 %v1746
    %1876 = vmatpush1.msra.mxu0 %v1745
    %1877 = vmatprep.subr.mxu0 %v1750
    %1878 = vmatpush1.msra.mxu0 %v1749
    %1879 = vmatprep.subr.mxu0 %v1754
    %1880 = vmatpush1.msra.mxu0 %v1753
    %1881 = vmatprep.subr.mxu0 %v1758
    %1882 = vmatpush1.msra.mxu0 %v1757
    %1883 = vmatprep.subr.mxu0 %v1762
    %1884 = vmatpush1.msra.mxu0 %v1761
    %1885 = vmatprep.subr.mxu0 %v1766
    %1886 = vmatpush1.msra.mxu0 %v1765
    %1887 = vmatprep.subr.mxu0 %v1770
    %1888 = vmatpush1.msra.mxu0 %v1769
    %1889 = vmatprep.subr.mxu0 %v1774
    %1890 = vmatpush1.msra.mxu0 %v1773
    %1891 = vmatprep.subr.mxu0 %v1778
    %1892 = vmatpush1.msra.mxu0 %v1777
    %1893 = vmatprep.subr.mxu0 %v1782
    %1894 = vmatpush1.msra.mxu0 %v1781
    %1895 = vmatprep.subr.mxu0 %v1786
    %1896 = vmatpush1.msra.mxu0 %v1785
    %1897 = vmatprep.subr.mxu0 %v1790
    %1898 = vmatpush1.msra.mxu0 %v1789
    %1899 = vmatprep.subr.mxu0 %v1794
    %1900 = vmatpush1.msra.mxu0 %v1793
    %1901 = vmatprep.subr.mxu0 %v1798
    %1902 = vmatpush1.msra.mxu0 %v1797
    %1903 = vmatprep.subr.mxu0 %v1802
    %1904 = vmatpush1.msra.mxu0 %v1801
    %1905 = vmatprep.subr.mxu0 %v1806
    %1906 = vmatpush1.msra.mxu0 %v1805
    %1907 = vmatprep.subr.mxu0 %v1810
    %1908 = vmatpush1.msra.mxu0 %v1809
    %1909 = vmatprep.subr.mxu0 %v1814
    %1910 = vmatpush1.msra.mxu0 %v1813
    %1911 = vmatprep.subr.mxu0 %v1818
    %1912 = vmatpush1.msra.mxu0 %v1817
    %1913 = vmatprep.subr.mxu0 %v1822
    %1914 = vmatpush1.msra.mxu0 %v1821
    %1915 = vmatprep.subr.mxu0 %v1826
    %1916 = vmatpush1.msra.mxu0 %v1825
    %1917 = vmatprep.subr.mxu0 %v1830
    %1918 = vmatpush1.msra.mxu0 %v1829
    %1919 = vmatprep.mubr.f32.mxu0 %v1609
    %1920 = vmatmul.mubr.f32.gmra.mrb[0].mxu0 %v1704
    %v1921 = vpop.f32.mrb[0].mxu0
    %v1922 = vadd.f32 %v1838, %v1921
    %v1923 = vpop.f32.mrb[0].mxu0
    %v1924 = vadd.f32 %v1842, %v1923
    %1925 = vdwg.mxu0
    %1926 = vmatprep.subr.mxu0 %v1708
    %1927 = vmatpush1.msra.mxu0 %v1707
    %1928 = vmatprep.subr.mxu0 %v1712
    %1929 = vmatpush1.msra.mxu0 %v1711
    %1930 = vmatprep.subr.mxu0 %v1716
    %1931 = vmatpush1.msra.mxu0 %v1715
    %1932 = vmatprep.subr.mxu0 %v1720
    %1933 = vmatpush1.msra.mxu0 %v1719
    %1934 = vmatprep.subr.mxu0 %v1724
    %1935 = vmatpush1.msra.mxu0 %v1723
    %1936 = vmatprep.subr.mxu0 %v1728
    %1937 = vmatpush1.msra.mxu0 %v1727
    %1938 = vmatprep.subr.mxu0 %v1732
    %1939 = vmatpush1.msra.mxu0 %v1731
    %1940 = vmatprep.subr.mxu0 %v1736
    %1941 = vmatpush1.msra.mxu0 %v1735
    %1942 = vmatprep.subr.mxu0 %v1740
    %1943 = vmatpush1.msra.mxu0 %v1739
    %1944 = vmatprep.subr.mxu0 %v1744
    %1945 = vmatpush1.msra.mxu0 %v1743
    %1946 = vmatprep.subr.mxu0 %v1748
    %1947 = vmatpush1.msra.mxu0 %v1747
    %1948 = vmatprep.subr.mxu0 %v1752
    %1949 = vmatpush1.msra.mxu0 %v1751
    %1950 = vmatprep.subr.mxu0 %v1756
    %1951 = vmatpush1.msra.mxu0 %v1755
    %1952 = vmatprep.subr.mxu0 %v1760
    %1953 = vmatpush1.msra.mxu0 %v1759
    %1954 = vmatprep.subr.mxu0 %v1764
    %1955 = vmatpush1.msra.mxu0 %v1763
    %1956 = vmatprep.subr.mxu0 %v1768
    %1957 = vmatpush1.msra.mxu0 %v1767
    %1958 = vmatprep.subr.mxu0 %v1772
    %1959 = vmatpush1.msra.mxu0 %v1771
    %1960 = vmatprep.subr.mxu0 %v1776
    %1961 = vmatpush1.msra.mxu0 %v1775
    %1962 = vmatprep.subr.mxu0 %v1780
    %1963 = vmatpush1.msra.mxu0 %v1779
    %1964 = vmatprep.subr.mxu0 %v1784
    %1965 = vmatpush1.msra.mxu0 %v1783
    %1966 = vmatprep.subr.mxu0 %v1788
    %1967 = vmatpush1.msra.mxu0 %v1787
    %1968 = vmatprep.subr.mxu0 %v1792
    %1969 = vmatpush1.msra.mxu0 %v1791
    %1970 = vmatprep.subr.mxu0 %v1796
    %1971 = vmatpush1.msra.mxu0 %v1795
    %1972 = vmatprep.subr.mxu0 %v1800
    %1973 = vmatpush1.msra.mxu0 %v1799
    %1974 = vmatprep.subr.mxu0 %v1804
    %1975 = vmatpush1.msra.mxu0 %v1803
    %1976 = vmatprep.subr.mxu0 %v1808
    %1977 = vmatpush1.msra.mxu0 %v1807
    %1978 = vmatprep.subr.mxu0 %v1812
    %1979 = vmatpush1.msra.mxu0 %v1811
    %1980 = vmatprep.subr.mxu0 %v1816
    %1981 = vmatpush1.msra.mxu0 %v1815
    %1982 = vmatprep.subr.mxu0 %v1820
    %1983 = vmatpush1.msra.mxu0 %v1819
    %1984 = vmatprep.subr.mxu0 %v1824
    %1985 = vmatpush1.msra.mxu0 %v1823
    %1986 = vmatprep.subr.mxu0 %v1828
    %1987 = vmatpush1.msra.mxu0 %v1827
    %1988 = vmatprep.subr.mxu0 %v1832
    %1989 = vmatpush1.msra.mxu0 %v1831
    %1990 = vmatprep.mubr.f32.mxu0 %v1609
    %1991 = vmatmul.mubr.f32.gmra.mrb[0].mxu0 %v1704
    %v1992 = vpop.f32.mrb[0].mxu0
    %v1993 = vadd.f32 %v1846, %v1992
    %v1994 = vpop.f32.mrb[0].mxu0
    %v1995 = vadd.f32 %v1850, %v1994
    %1996 = vdwg.mxu0
    %v1997 = vxor.u32 %v1922, 2147483648
    %v1998 = vxor.u32 %v1924, 2147483648
    %v1999 = vmul.f32 %v1997, 1.442695
    %v2000 = vpow.pop %v1999
    %v2001 = vmul.f32 %v1998, 1.442695
    %v2002 = vpow.pop %v2001
    %v2003 = vadd.f32 %v2000, 1.0
    %v2004 = vadd.f32 %v2002, 1.0
    %v2005 = vrcp.pop %v2003
    %v2006 = vmul.f32 1.0, %v2005
    %v2007 = vrcp.pop %v2004
    %v2008 = vmul.f32 1.0, %v2007
    %v2009 = vmul.f32 %v2006, %v1995
    %v2010 = vadd.f32 %v1993, %v2009
    %v2011 = vtanh.pop %v2010
    %v2012 = vsub.f32 1.0, %v2008
    %v2013 = vmul.f32 %v2012, %v2011
    %v2014 = vmul.f32 %v2008, %v1609
    %v2015 = vadd.f32 %v2013, %v2014
    %v2016 = vld [vmem:[#allocation9] sm:$0xff]
    %v2017 = vld [vmem:[#allocation9 + $0x8] sm:$0xff]
    %v2018 = vld [vmem:[#allocation9 + $0x10] sm:$0xff]
    %v2019 = vld [vmem:[#allocation9 + $0x18] sm:$0xff]
    %v2020 = vld [vmem:[#allocation9 + $0x20] sm:$0xff]
    %v2021 = vld [vmem:[#allocation9 + $0x28] sm:$0xff]
    %v2022 = vld [vmem:[#allocation9 + $0x30] sm:$0xff]
    %v2023 = vld [vmem:[#allocation9 + $0x38] sm:$0xff]
    %v2024 = vld [vmem:[#allocation9 + $0x40] sm:$0xff]
    %v2025 = vld [vmem:[#allocation9 + $0x48] sm:$0xff]
    %v2026 = vld [vmem:[#allocation9 + $0x50] sm:$0xff]
    %v2027 = vld [vmem:[#allocation9 + $0x58] sm:$0xff]
    %v2028 = vld [vmem:[#allocation9 + $0x60] sm:$0xff]
    %v2029 = vld [vmem:[#allocation9 + $0x68] sm:$0xff]
    %v2030 = vld [vmem:[#allocation9 + $0x70] sm:$0xff]
    %v2031 = vld [vmem:[#allocation9 + $0x78] sm:$0xff]
    %v2032 = vld [vmem:[%s6] sm:$0x1]
    %2033 = vmatprep.subr.mxu0 0.0
    %2034 = vmatpush1.msra.mxu0 %v2016
    %2035 = vmatprep.subr.mxu0 0.0
    %2036 = vmatpush1.msra.mxu0 %v2017
    %2037 = vmatprep.subr.mxu0 0.0
    %2038 = vmatpush1.msra.mxu0 %v2018
    %2039 = vmatprep.subr.mxu0 0.0
    %2040 = vmatpush1.msra.mxu0 %v2019
    %2041 = vmatprep.subr.mxu0 0.0
    %2042 = vmatpush1.msra.mxu0 %v2020
    %2043 = vmatprep.subr.mxu0 0.0
    %2044 = vmatpush1.msra.mxu0 %v2021
    %2045 = vmatprep.subr.mxu0 0.0
    %2046 = vmatpush1.msra.mxu0 %v2022
    %2047 = vmatprep.subr.mxu0 0.0
    %2048 = vmatpush1.msra.mxu0 %v2023
    %2049 = vmatprep.subr.mxu0 0.0
    %2050 = vmatpush1.msra.mxu0 %v2024
    %2051 = vmatprep.subr.mxu0 0.0
    %2052 = vmatpush1.msra.mxu0 %v2025
    %2053 = vmatprep.subr.mxu0 0.0
    %2054 = vmatpush1.msra.mxu0 %v2026
    %2055 = vmatprep.subr.mxu0 0.0
    %2056 = vmatpush1.msra.mxu0 %v2027
    %2057 = vmatprep.subr.mxu0 0.0
    %2058 = vmatpush1.msra.mxu0 %v2028
    %2059 = vmatprep.subr.mxu0 0.0
    %2060 = vmatpush1.msra.mxu0 %v2029
    %2061 = vmatprep.subr.mxu0 0.0
    %2062 = vmatpush1.msra.mxu0 %v2030
    %2063 = vmatprep.subr.mxu0 0.0
    %2064 = vmatpush1.msra.mxu0 %v2031
    %2065 = vmatprep.subr.mxu0 0.0
    %2066 = vmatpush1.msra.mxu0 0.0
    %2067 = vmatprep.subr.mxu0 0.0
    %2068 = vmatpush1.msra.mxu0 0.0
    %2069 = vmatprep.subr.mxu0 0.0
    %2070 = vmatpush1.msra.mxu0 0.0
    %2071 = vmatprep.subr.mxu0 0.0
    %2072 = vmatpush1.msra.mxu0 0.0
    %2073 = vmatprep.subr.mxu0 0.0
    %2074 = vmatpush1.msra.mxu0 0.0
    %2075 = vmatprep.subr.mxu0 0.0
    %2076 = vmatpush1.msra.mxu0 0.0
    %2077 = vmatprep.subr.mxu0 0.0
    %2078 = vmatpush1.msra.mxu0 0.0
    %2079 = vmatprep.subr.mxu0 0.0
    %2080 = vmatpush1.msra.mxu0 0.0
    %2081 = vmatprep.subr.mxu0 0.0
    %2082 = vmatpush1.msra.mxu0 0.0
    %2083 = vmatprep.subr.mxu0 0.0
    %2084 = vmatpush1.msra.mxu0 0.0
    %2085 = vmatprep.subr.mxu0 0.0
    %2086 = vmatpush1.msra.mxu0 0.0
    %2087 = vmatprep.subr.mxu0 0.0
    %2088 = vmatpush1.msra.mxu0 0.0
    %2089 = vmatprep.subr.mxu0 0.0
    %2090 = vmatpush1.msra.mxu0 0.0
    %2091 = vmatprep.subr.mxu0 0.0
    %2092 = vmatpush1.msra.mxu0 0.0
    %2093 = vmatprep.subr.mxu0 0.0
    %2094 = vmatpush1.msra.mxu0 0.0
    %2095 = vmatprep.subr.mxu0 0.0
    %2096 = vmatpush1.msra.mxu0 0.0
    %2097 = vmatprep.mubr.f32.mxu0 0.0
    %2098 = vmatmul.mubr.f32.gmra.mrb[0].mxu0 %v2015
    %v2099 = vpop.f32.mrb[0].mxu0
    %v2100 = vadd.f32 %v2032, %v2099
    %v2101 = vpop.f32.mrb[0].mxu0
    %2102 = vdwg.mxu0
    %2103 = vst [vmem:[#allocation10 + $0x4] sm:$0x1] %v2100
    %s2104 = sld [smem:[#allocation3 + $0x5]]
    %p2105 = scmp.gt.s32.totalorder %s2104, 0
    %s2106 = scalar_select %p2105, %s2104, 0
    %p2107 = scmp.lt.s32.totalorder %s2106, 63
    %s2108 = scalar_select %p2107, %s2106, 63
    %s2109 = scalar_lea.vmem [#allocation4], %s2108
    %v2110 = vld [vmem:[%s2109] sm:$0x1]
    %v2111 = vld [vmem:[#allocation7] sm:$0xff]
    %v2112 = vld [vmem:[#allocation7 + $0x8] sm:$0xff]
    %v2113 = vld [vmem:[#allocation7 + $0x10] sm:$0xff]
    %v2114 = vld [vmem:[#allocation7 + $0x18] sm:$0xff]
    %v2115 = vld [vmem:[#allocation7 + $0x20] sm:$0xff]
    %v2116 = vld [vmem:[#allocation7 + $0x28] sm:$0xff]
    %v2117 = vld [vmem:[#allocation7 + $0x30] sm:$0xff]
    %v2118 = vld [vmem:[#allocation7 + $0x38] sm:$0xff]
    %v2119 = vld [vmem:[#allocation7 + $0x40] sm:$0xff]
    %v2120 = vld [vmem:[#allocation7 + $0x48] sm:$0xff]
    %v2121 = vld [vmem:[#allocation7 + $0x50] sm:$0xff]
    %v2122 = vld [vmem:[#allocation7 + $0x58] sm:$0xff]
    %v2123 = vld [vmem:[#allocation7 + $0x60] sm:$0xff]
    %v2124 = vld [vmem:[#allocation7 + $0x68] sm:$0xff]
    %v2125 = vld [vmem:[#allocation7 + $0x70] sm:$0xff]
    %v2126 = vld [vmem:[#allocation7 + $0x78] sm:$0xff]
    %v2127 = vld [vmem:[#allocation7 + $0x80] sm:$0xff]
    %v2128 = vld [vmem:[#allocation7 + $0x88] sm:$0xff]
    %v2129 = vld [vmem:[#allocation7 + $0x90] sm:$0xff]
    %v2130 = vld [vmem:[#allocation7 + $0x98] sm:$0xff]
    %v2131 = vld [vmem:[#allocation7 + $0xa0] sm:$0xff]
    %v2132 = vld [vmem:[#allocation7 + $0xa8] sm:$0xff]
    %v2133 = vld [vmem:[#allocation7 + $0xb0] sm:$0xff]
    %v2134 = vld [vmem:[#allocation7 + $0xb8] sm:$0xff]
    %v2135 = vld [vmem:[#allocation7 + $0xc0] sm:$0xff]
    %v2136 = vld [vmem:[#allocation7 + $0xc8] sm:$0xff]
    %v2137 = vld [vmem:[#allocation7 + $0xd0] sm:$0xff]
    %v2138 = vld [vmem:[#allocation7 + $0xd8] sm:$0xff]
    %v2139 = vld [vmem:[#allocation7 + $0xe0] sm:$0xff]
    %v2140 = vld [vmem:[#allocation7 + $0xe8] sm:$0xff]
    %v2141 = vld [vmem:[#allocation7 + $0xf0] sm:$0xff]
    %v2142 = vld [vmem:[#allocation7 + $0xf8] sm:$0xff]
    %v2143 = vld [vmem:[#allocation7 + $0x100] sm:$0xff]
    %v2144 = vld [vmem:[#allocation7 + $0x108] sm:$0xff]
    %v2145 = vld [vmem:[#allocation7 + $0x110] sm:$0xff]
    %v2146 = vld [vmem:[#allocation7 + $0x118] sm:$0xff]
    %v2147 = vld [vmem:[#allocation7 + $0x120] sm:$0xff]
    %v2148 = vld [vmem:[#allocation7 + $0x128] sm:$0xff]
    %v2149 = vld [vmem:[#allocation7 + $0x130] sm:$0xff]
    %v2150 = vld [vmem:[#allocation7 + $0x138] sm:$0xff]
    %v2151 = vld [vmem:[#allocation7 + $0x140] sm:$0xff]
    %v2152 = vld [vmem:[#allocation7 + $0x148] sm:$0xff]
    %v2153 = vld [vmem:[#allocation7 + $0x150] sm:$0xff]
    %v2154 = vld [vmem:[#allocation7 + $0x158] sm:$0xff]
    %v2155 = vld [vmem:[#allocation7 + $0x160] sm:$0xff]
    %v2156 = vld [vmem:[#allocation7 + $0x168] sm:$0xff]
    %v2157 = vld [vmem:[#allocation7 + $0x170] sm:$0xff]
    %v2158 = vld [vmem:[#allocation7 + $0x178] sm:$0xff]
    %v2159 = vld [vmem:[#allocation7 + $0x180] sm:$0xff]
    %v2160 = vld [vmem:[#allocation7 + $0x188] sm:$0xff]
    %v2161 = vld [vmem:[#allocation7 + $0x190] sm:$0xff]
    %v2162 = vld [vmem:[#allocation7 + $0x198] sm:$0xff]
    %v2163 = vld [vmem:[#allocation7 + $0x1a0] sm:$0xff]
    %v2164 = vld [vmem:[#allocation7 + $0x1a8] sm:$0xff]
    %v2165 = vld [vmem:[#allocation7 + $0x1b0] sm:$0xff]
    %v2166 = vld [vmem:[#allocation7 + $0x1b8] sm:$0xff]
    %v2167 = vld [vmem:[#allocation7 + $0x1c0] sm:$0xff]
    %v2168 = vld [vmem:[#allocation7 + $0x1c8] sm:$0xff]
    %v2169 = vld [vmem:[#allocation7 + $0x1d0] sm:$0xff]
    %v2170 = vld [vmem:[#allocation7 + $0x1d8] sm:$0xff]
    %v2171 = vld [vmem:[#allocation7 + $0x1e0] sm:$0xff]
    %v2172 = vld [vmem:[#allocation7 + $0x1e8] sm:$0xff]
    %v2173 = vld [vmem:[#allocation7 + $0x1f0] sm:$0xff]
    %v2174 = vld [vmem:[#allocation7 + $0x1f8] sm:$0xff]
    %v2175 = vld [vmem:[#allocation7 + $0x200] sm:$0xff]
    %v2176 = vld [vmem:[#allocation7 + $0x208] sm:$0xff]
    %v2177 = vld [vmem:[#allocation7 + $0x210] sm:$0xff]
    %v2178 = vld [vmem:[#allocation7 + $0x218] sm:$0xff]
    %v2179 = vld [vmem:[#allocation7 + $0x220] sm:$0xff]
    %v2180 = vld [vmem:[#allocation7 + $0x228] sm:$0xff]
    %v2181 = vld [vmem:[#allocation7 + $0x230] sm:$0xff]
    %v2182 = vld [vmem:[#allocation7 + $0x238] sm:$0xff]
    %v2183 = vld [vmem:[#allocation7 + $0x240] sm:$0xff]
    %v2184 = vld [vmem:[#allocation7 + $0x248] sm:$0xff]
    %v2185 = vld [vmem:[#allocation7 + $0x250] sm:$0xff]
    %v2186 = vld [vmem:[#allocation7 + $0x258] sm:$0xff]
    %v2187 = vld [vmem:[#allocation7 + $0x260] sm:$0xff]
    %v2188 = vld [vmem:[#allocation7 + $0x268] sm:$0xff]
    %v2189 = vld [vmem:[#allocation7 + $0x270] sm:$0xff]
    %v2190 = vld [vmem:[#allocation7 + $0x278] sm:$0xff]
    %v2191 = vld [vmem:[#allocation7 + $0x280] sm:$0xff]
    %v2192 = vld [vmem:[#allocation7 + $0x288] sm:$0xff]
    %v2193 = vld [vmem:[#allocation7 + $0x290] sm:$0xff]
    %v2194 = vld [vmem:[#allocation7 + $0x298] sm:$0xff]
    %v2195 = vld [vmem:[#allocation7 + $0x2a0] sm:$0xff]
    %v2196 = vld [vmem:[#allocation7 + $0x2a8] sm:$0xff]
    %v2197 = vld [vmem:[#allocation7 + $0x2b0] sm:$0xff]
    %v2198 = vld [vmem:[#allocation7 + $0x2b8] sm:$0xff]
    %v2199 = vld [vmem:[#allocation7 + $0x2c0] sm:$0xff]
    %v2200 = vld [vmem:[#allocation7 + $0x2c8] sm:$0xff]
    %v2201 = vld [vmem:[#allocation7 + $0x2d0] sm:$0xff]
    %v2202 = vld [vmem:[#allocation7 + $0x2d8] sm:$0xff]
    %v2203 = vld [vmem:[#allocation7 + $0x2e0] sm:$0xff]
    %v2204 = vld [vmem:[#allocation7 + $0x2e8] sm:$0xff]
    %v2205 = vld [vmem:[#allocation7 + $0x2f0] sm:$0xff]
    %v2206 = vld [vmem:[#allocation7 + $0x2f8] sm:$0xff]
    %v2207 = vld [vmem:[#allocation7 + $0x300] sm:$0xff]
    %v2208 = vld [vmem:[#allocation7 + $0x308] sm:$0xff]
    %v2209 = vld [vmem:[#allocation7 + $0x310] sm:$0xff]
    %v2210 = vld [vmem:[#allocation7 + $0x318] sm:$0xff]
    %v2211 = vld [vmem:[#allocation7 + $0x320] sm:$0xff]
    %v2212 = vld [vmem:[#allocation7 + $0x328] sm:$0xff]
    %v2213 = vld [vmem:[#allocation7 + $0x330] sm:$0xff]
    %v2214 = vld [vmem:[#allocation7 + $0x338] sm:$0xff]
    %v2215 = vld [vmem:[#allocation7 + $0x340] sm:$0xff]
    %v2216 = vld [vmem:[#allocation7 + $0x348] sm:$0xff]
    %v2217 = vld [vmem:[#allocation7 + $0x350] sm:$0xff]
    %v2218 = vld [vmem:[#allocation7 + $0x358] sm:$0xff]
    %v2219 = vld [vmem:[#allocation7 + $0x360] sm:$0xff]
    %v2220 = vld [vmem:[#allocation7 + $0x368] sm:$0xff]
    %v2221 = vld [vmem:[#allocation7 + $0x370] sm:$0xff]
    %v2222 = vld [vmem:[#allocation7 + $0x378] sm:$0xff]
    %v2223 = vld [vmem:[#allocation7 + $0x380] sm:$0xff]
    %v2224 = vld [vmem:[#allocation7 + $0x388] sm:$0xff]
    %v2225 = vld [vmem:[#allocation7 + $0x390] sm:$0xff]
    %v2226 = vld [vmem:[#allocation7 + $0x398] sm:$0xff]
    %v2227 = vld [vmem:[#allocation7 + $0x3a0] sm:$0xff]
    %v2228 = vld [vmem:[#allocation7 + $0x3a8] sm:$0xff]
    %v2229 = vld [vmem:[#allocation7 + $0x3b0] sm:$0xff]
    %v2230 = vld [vmem:[#allocation7 + $0x3b8] sm:$0xff]
    %v2231 = vld [vmem:[#allocation7 + $0x3c0] sm:$0xff]
    %v2232 = vld [vmem:[#allocation7 + $0x3c8] sm:$0xff]
    %v2233 = vld [vmem:[#allocation7 + $0x3d0] sm:$0xff]
    %v2234 = vld [vmem:[#allocation7 + $0x3d8] sm:$0xff]
    %v2235 = vld [vmem:[#allocation7 + $0x3e0] sm:$0xff]
    %v2236 = vld [vmem:[#allocation7 + $0x3e8] sm:$0xff]
    %v2237 = vld [vmem:[#allocation7 + $0x3f0] sm:$0xff]
    %v2238 = vld [vmem:[#allocation7 + $0x3f8] sm:$0xff]
    %v2239 = vld [vmem:[%s4] sm:$0xf]
    %v2241 = vlaneseq
    %v2242 = vshrl.u32 %v2241, 7
    %v2243 = vsub.s32 0, %v2242
    %v2244 = vrot.slane %v2239, %v2243
    %v2245 = vlaneseq
    %v2246 = vshrl.u32 %v2245, 7
    %v2247 = vsub.s32 1, %v2246
    %v2248 = vrot.slane %v2239, %v2247
    %v2249 = vlaneseq
    %v2250 = vshrl.u32 %v2249, 7
    %v2251 = vsub.s32 2, %v2250
    %v2252 = vrot.slane %v2239, %v2251
    %v2253 = vlaneseq
    %v2254 = vshrl.u32 %v2253, 7
    %v2255 = vsub.s32 3, %v2254
    %v2256 = vrot.slane %v2239, %v2255
    %2261 = vmatprep.subr.mxu0 %v2112
    %2262 = vmatpush1.msra.mxu0 %v2111
    %2263 = vmatprep.subr.mxu0 %v2116
    %2264 = vmatpush1.msra.mxu0 %v2115
    %2265 = vmatprep.subr.mxu0 %v2120
    %2266 = vmatpush1.msra.mxu0 %v2119
    %2267 = vmatprep.subr.mxu0 %v2124
    %2268 = vmatpush1.msra.mxu0 %v2123
    %2269 = vmatprep.subr.mxu0 %v2128
    %2270 = vmatpush1.msra.mxu0 %v2127
    %2271 = vmatprep.subr.mxu0 %v2132
    %2272 = vmatpush1.msra.mxu0 %v2131
    %2273 = vmatprep.subr.mxu0 %v2136
    %2274 = vmatpush1.msra.mxu0 %v2135
    %2275 = vmatprep.subr.mxu0 %v2140
    %2276 = vmatpush1.msra.mxu0 %v2139
    %2277 = vmatprep.subr.mxu0 %v2144
    %2278 = vmatpush1.msra.mxu0 %v2143
    %2279 = vmatprep.subr.mxu0 %v2148
    %2280 = vmatpush1.msra.mxu0 %v2147
    %2281 = vmatprep.subr.mxu0 %v2152
    %2282 = vmatpush1.msra.mxu0 %v2151
    %2283 = vmatprep.subr.mxu0 %v2156
    %2284 = vmatpush1.msra.mxu0 %v2155
    %2285 = vmatprep.subr.mxu0 %v2160
    %2286 = vmatpush1.msra.mxu0 %v2159
    %2287 = vmatprep.subr.mxu0 %v2164
    %2288 = vmatpush1.msra.mxu0 %v2163
    %2289 = vmatprep.subr.mxu0 %v2168
    %2290 = vmatpush1.msra.mxu0 %v2167
    %2291 = vmatprep.subr.mxu0 %v2172
    %2292 = vmatpush1.msra.mxu0 %v2171
    %2293 = vmatprep.subr.mxu0 %v2176
    %2294 = vmatpush1.msra.mxu0 %v2175
    %2295 = vmatprep.subr.mxu0 %v2180
    %2296 = vmatpush1.msra.mxu0 %v2179
    %2297 = vmatprep.subr.mxu0 %v2184
    %2298 = vmatpush1.msra.mxu0 %v2183
    %2299 = vmatprep.subr.mxu0 %v2188
    %2300 = vmatpush1.msra.mxu0 %v2187
    %2301 = vmatprep.subr.mxu0 %v2192
    %2302 = vmatpush1.msra.mxu0 %v2191
    %2303 = vmatprep.subr.mxu0 %v2196
    %2304 = vmatpush1.msra.mxu0 %v2195
    %2305 = vmatprep.subr.mxu0 %v2200
    %2306 = vmatpush1.msra.mxu0 %v2199
    %2307 = vmatprep.subr.mxu0 %v2204
    %2308 = vmatpush1.msra.mxu0 %v2203
    %2309 = vmatprep.subr.mxu0 %v2208
    %2310 = vmatpush1.msra.mxu0 %v2207
    %2311 = vmatprep.subr.mxu0 %v2212
    %2312 = vmatpush1.msra.mxu0 %v2211
    %2313 = vmatprep.subr.mxu0 %v2216
    %2314 = vmatpush1.msra.mxu0 %v2215
    %2315 = vmatprep.subr.mxu0 %v2220
    %2316 = vmatpush1.msra.mxu0 %v2219
    %2317 = vmatprep.subr.mxu0 %v2224
    %2318 = vmatpush1.msra.mxu0 %v2223
    %2319 = vmatprep.subr.mxu0 %v2228
    %2320 = vmatpush1.msra.mxu0 %v2227
    %2321 = vmatprep.subr.mxu0 %v2232
    %2322 = vmatpush1.msra.mxu0 %v2231
    %2323 = vmatprep.subr.mxu0 %v2236
    %2324 = vmatpush1.msra.mxu0 %v2235
    %2325 = vmatprep.mubr.f32.mxu0 %v2015
    %2326 = vmatmul.mubr.f32.gmra.mrb[0].mxu0 %v2110
    %v2327 = vpop.f32.mrb[0].mxu0
    %v2328 = vadd.f32 %v2244, %v2327
    %v2329 = vpop.f32.mrb[0].mxu0
    %v2330 = vadd.f32 %v2248, %v2329
    %2331 = vdwg.mxu0
    %2332 = vmatprep.subr.mxu0 %v2114
    %2333 = vmatpush1.msra.mxu0 %v2113
    %2334 = vmatprep.subr.mxu0 %v2118
    %2335 = vmatpush1.msra.mxu0 %v2117
    %2336 = vmatprep.subr.mxu0 %v2122
    %2337 = vmatpush1.msra.mxu0 %v2121
    %2338 = vmatprep.subr.mxu0 %v2126
    %2339 = vmatpush1.msra.mxu0 %v2125
    %2340 = vmatprep.subr.mxu0 %v2130
    %2341 = vmatpush1.msra.mxu0 %v2129
    %2342 = vmatprep.subr.mxu0 %v2134
    %2343 = vmatpush1.msra.mxu0 %v2133
    %2344 = vmatprep.subr.mxu0 %v2138
    %2345 = vmatpush1.msra.mxu0 %v2137
    %2346 = vmatprep.subr.mxu0 %v2142
    %2347 = vmatpush1.msra.mxu0 %v2141
    %2348 = vmatprep.subr.mxu0 %v2146
    %2349 = vmatpush1.msra.mxu0 %v2145
    %2350 = vmatprep.subr.mxu0 %v2150
    %2351 = vmatpush1.msra.mxu0 %v2149
    %2352 = vmatprep.subr.mxu0 %v2154
    %2353 = vmatpush1.msra.mxu0 %v2153
    %2354 = vmatprep.subr.mxu0 %v2158
    %2355 = vmatpush1.msra.mxu0 %v2157
    %2356 = vmatprep.subr.mxu0 %v2162
    %2357 = vmatpush1.msra.mxu0 %v2161
    %2358 = vmatprep.subr.mxu0 %v2166
    %2359 = vmatpush1.msra.mxu0 %v2165
    %2360 = vmatprep.subr.mxu0 %v2170
    %2361 = vmatpush1.msra.mxu0 %v2169
    %2362 = vmatprep.subr.mxu0 %v2174
    %2363 = vmatpush1.msra.mxu0 %v2173
    %2364 = vmatprep.subr.mxu0 %v2178
    %2365 = vmatpush1.msra.mxu0 %v2177
    %2366 = vmatprep.subr.mxu0 %v2182
    %2367 = vmatpush1.msra.mxu0 %v2181
    %2368 = vmatprep.subr.mxu0 %v2186
    %2369 = vmatpush1.msra.mxu0 %v2185
    %2370 = vmatprep.subr.mxu0 %v2190
    %2371 = vmatpush1.msra.mxu0 %v2189
    %2372 = vmatprep.subr.mxu0 %v2194
    %2373 = vmatpush1.msra.mxu0 %v2193
    %2374 = vmatprep.subr.mxu0 %v2198
    %2375 = vmatpush1.msra.mxu0 %v2197
    %2376 = vmatprep.subr.mxu0 %v2202
    %2377 = vmatpush1.msra.mxu0 %v2201
    %2378 = vmatprep.subr.mxu0 %v2206
    %2379 = vmatpush1.msra.mxu0 %v2205
    %2380 = vmatprep.subr.mxu0 %v2210
    %2381 = vmatpush1.msra.mxu0 %v2209
    %2382 = vmatprep.subr.mxu0 %v2214
    %2383 = vmatpush1.msra.mxu0 %v2213
    %2384 = vmatprep.subr.mxu0 %v2218
    %2385 = vmatpush1.msra.mxu0 %v2217
    %2386 = vmatprep.subr.mxu0 %v2222
    %2387 = vmatpush1.msra.mxu0 %v2221
    %2388 = vmatprep.subr.mxu0 %v2226
    %2389 = vmatpush1.msra.mxu0 %v2225
    %2390 = vmatprep.subr.mxu0 %v2230
    %2391 = vmatpush1.msra.mxu0 %v2229
    %2392 = vmatprep.subr.mxu0 %v2234
    %2393 = vmatpush1.msra.mxu0 %v2233
    %2394 = vmatprep.subr.mxu0 %v2238
    %2395 = vmatpush1.msra.mxu0 %v2237
    %2396 = vmatprep.mubr.f32.mxu0 %v2015
    %2397 = vmatmul.mubr.f32.gmra.mrb[0].mxu0 %v2110
    %v2398 = vpop.f32.mrb[0].mxu0
    %v2399 = vadd.f32 %v2252, %v2398
    %v2400 = vpop.f32.mrb[0].mxu0
    %v2401 = vadd.f32 %v2256, %v2400
    %2402 = vdwg.mxu0
    %v2403 = vxor.u32 %v2328, 2147483648
    %v2404 = vxor.u32 %v2330, 2147483648
    %v2405 = vmul.f32 %v2403, 1.442695
    %v2406 = vpow.pop %v2405
    %v2407 = vmul.f32 %v2404, 1.442695
    %v2408 = vpow.pop %v2407
    %v2409 = vadd.f32 %v2406, 1.0
    %v2410 = vadd.f32 %v2408, 1.0
    %v2411 = vrcp.pop %v2409
    %v2412 = vmul.f32 1.0, %v2411
    %v2413 = vrcp.pop %v2410
    %v2414 = vmul.f32 1.0, %v2413
    %v2415 = vmul.f32 %v2412, %v2401
    %v2416 = vadd.f32 %v2399, %v2415
    %v2417 = vtanh.pop %v2416
    %v2418 = vsub.f32 1.0, %v2414
    %v2419 = vmul.f32 %v2418, %v2417
    %v2420 = vmul.f32 %v2414, %v2015
    %v2421 = vadd.f32 %v2419, %v2420
    %v2422 = vld [vmem:[#allocation9] sm:$0xff]
    %v2423 = vld [vmem:[#allocation9 + $0x8] sm:$0xff]
    %v2424 = vld [vmem:[#allocation9 + $0x10] sm:$0xff]
    %v2425 = vld [vmem:[#allocation9 + $0x18] sm:$0xff]
    %v2426 = vld [vmem:[#allocation9 + $0x20] sm:$0xff]
    %v2427 = vld [vmem:[#allocation9 + $0x28] sm:$0xff]
    %v2428 = vld [vmem:[#allocation9 + $0x30] sm:$0xff]
    %v2429 = vld [vmem:[#allocation9 + $0x38] sm:$0xff]
    %v2430 = vld [vmem:[#allocation9 + $0x40] sm:$0xff]
    %v2431 = vld [vmem:[#allocation9 + $0x48] sm:$0xff]
    %v2432 = vld [vmem:[#allocation9 + $0x50] sm:$0xff]
    %v2433 = vld [vmem:[#allocation9 + $0x58] sm:$0xff]
    %v2434 = vld [vmem:[#allocation9 + $0x60] sm:$0xff]
    %v2435 = vld [vmem:[#allocation9 + $0x68] sm:$0xff]
    %v2436 = vld [vmem:[#allocation9 + $0x70] sm:$0xff]
    %v2437 = vld [vmem:[#allocation9 + $0x78] sm:$0xff]
    %v2438 = vld [vmem:[%s6] sm:$0x1]
    %2439 = vmatprep.subr.mxu0 0.0
    %2440 = vmatpush1.msra.mxu0 %v2422
    %2441 = vmatprep.subr.mxu0 0.0
    %2442 = vmatpush1.msra.mxu0 %v2423
    %2443 = vmatprep.subr.mxu0 0.0
    %2444 = vmatpush1.msra.mxu0 %v2424
    %2445 = vmatprep.subr.mxu0 0.0
    %2446 = vmatpush1.msra.mxu0 %v2425
    %2447 = vmatprep.subr.mxu0 0.0
    %2448 = vmatpush1.msra.mxu0 %v2426
    %2449 = vmatprep.subr.mxu0 0.0
    %2450 = vmatpush1.msra.mxu0 %v2427
    %2451 = vmatprep.subr.mxu0 0.0
    %2452 = vmatpush1.msra.mxu0 %v2428
    %2453 = vmatprep.subr.mxu0 0.0
    %2454 = vmatpush1.msra.mxu0 %v2429
    %2455 = vmatprep.subr.mxu0 0.0
    %2456 = vmatpush1.msra.mxu0 %v2430
    %2457 = vmatprep.subr.mxu0 0.0
    %2458 = vmatpush1.msra.mxu0 %v2431
    %2459 = vmatprep.subr.mxu0 0.0
    %2460 = vmatpush1.msra.mxu0 %v2432
    %2461 = vmatprep.subr.mxu0 0.0
    %2462 = vmatpush1.msra.mxu0 %v2433
    %2463 = vmatprep.subr.mxu0 0.0
    %2464 = vmatpush1.msra.mxu0 %v2434
    %2465 = vmatprep.subr.mxu0 0.0
    %2466 = vmatpush1.msra.mxu0 %v2435
    %2467 = vmatprep.subr.mxu0 0.0
    %2468 = vmatpush1.msra.mxu0 %v2436
    %2469 = vmatprep.subr.mxu0 0.0
    %2470 = vmatpush1.msra.mxu0 %v2437
    %2471 = vmatprep.subr.mxu0 0.0
    %2472 = vmatpush1.msra.mxu0 0.0
    %2473 = vmatprep.subr.mxu0 0.0
    %2474 = vmatpush1.msra.mxu0 0.0
    %2475 = vmatprep.subr.mxu0 0.0
    %2476 = vmatpush1.msra.mxu0 0.0
    %2477 = vmatprep.subr.mxu0 0.0
    %2478 = vmatpush1.msra.mxu0 0.0
    %2479 = vmatprep.subr.mxu0 0.0
    %2480 = vmatpush1.msra.mxu0 0.0
    %2481 = vmatprep.subr.mxu0 0.0
    %2482 = vmatpush1.msra.mxu0 0.0
    %2483 = vmatprep.subr.mxu0 0.0
    %2484 = vmatpush1.msra.mxu0 0.0
    %2485 = vmatprep.subr.mxu0 0.0
    %2486 = vmatpush1.msra.mxu0 0.0
    %2487 = vmatprep.subr.mxu0 0.0
    %2488 = vmatpush1.msra.mxu0 0.0
    %2489 = vmatprep.subr.mxu0 0.0
    %2490 = vmatpush1.msra.mxu0 0.0
    %2491 = vmatprep.subr.mxu0 0.0
    %2492 = vmatpush1.msra.mxu0 0.0
    %2493 = vmatprep.subr.mxu0 0.0
    %2494 = vmatpush1.msra.mxu0 0.0
    %2495 = vmatprep.subr.mxu0 0.0
    %2496 = vmatpush1.msra.mxu0 0.0
    %2497 = vmatprep.subr.mxu0 0.0
    %2498 = vmatpush1.msra.mxu0 0.0
    %2499 = vmatprep.subr.mxu0 0.0
    %2500 = vmatpush1.msra.mxu0 0.0
    %2501 = vmatprep.subr.mxu0 0.0
    %2502 = vmatpush1.msra.mxu0 0.0
    %2503 = vmatprep.mubr.f32.mxu0 0.0
    %2504 = vmatmul.mubr.f32.gmra.mrb[0].mxu0 %v2421
    %v2505 = vpop.f32.mrb[0].mxu0
    %v2506 = vadd.f32 %v2438, %v2505
    %v2507 = vpop.f32.mrb[0].mxu0
    %2508 = vdwg.mxu0
    %2509 = vst [vmem:[#allocation10 + $0x5] sm:$0x1] %v2506
    %s2510 = sld [smem:[#allocation3 + $0x6]]
    %p2511 = scmp.gt.s32.totalorder %s2510, 0
    %s2512 = scalar_select %p2511, %s2510, 0
    %p2513 = scmp.lt.s32.totalorder %s2512, 63
    %s2514 = scalar_select %p2513, %s2512, 63
    %s2515 = scalar_lea.vmem [#allocation4], %s2514
    %v2516 = vld [vmem:[%s2515] sm:$0x1]
    %v2517 = vld [vmem:[#allocation7] sm:$0xff]
    %v2518 = vld [vmem:[#allocation7 + $0x8] sm:$0xff]
    %v2519 = vld [vmem:[#allocation7 + $0x10] sm:$0xff]
    %v2520 = vld [vmem:[#allocation7 + $0x18] sm:$0xff]
    %v2521 = vld [vmem:[#allocation7 + $0x20] sm:$0xff]
    %v2522 = vld [vmem:[#allocation7 + $0x28] sm:$0xff]
    %v2523 = vld [vmem:[#allocation7 + $0x30] sm:$0xff]
    %v2524 = vld [vmem:[#allocation7 + $0x38] sm:$0xff]
    %v2525 = vld [vmem:[#allocation7 + $0x40] sm:$0xff]
    %v2526 = vld [vmem:[#allocation7 + $0x48] sm:$0xff]
    %v2527 = vld [vmem:[#allocation7 + $0x50] sm:$0xff]
    %v2528 = vld [vmem:[#allocation7 + $0x58] sm:$0xff]
    %v2529 = vld [vmem:[#allocation7 + $0x60] sm:$0xff]
    %v2530 = vld [vmem:[#allocation7 + $0x68] sm:$0xff]
    %v2531 = vld [vmem:[#allocation7 + $0x70] sm:$0xff]
    %v2532 = vld [vmem:[#allocation7 + $0x78] sm:$0xff]
    %v2533 = vld [vmem:[#allocation7 + $0x80] sm:$0xff]
    %v2534 = vld [vmem:[#allocation7 + $0x88] sm:$0xff]
    %v2535 = vld [vmem:[#allocation7 + $0x90] sm:$0xff]
    %v2536 = vld [vmem:[#allocation7 + $0x98] sm:$0xff]
    %v2537 = vld [vmem:[#allocation7 + $0xa0] sm:$0xff]
    %v2538 = vld [vmem:[#allocation7 + $0xa8] sm:$0xff]
    %v2539 = vld [vmem:[#allocation7 + $0xb0] sm:$0xff]
    %v2540 = vld [vmem:[#allocation7 + $0xb8] sm:$0xff]
    %v2541 = vld [vmem:[#allocation7 + $0xc0] sm:$0xff]
    %v2542 = vld [vmem:[#allocation7 + $0xc8] sm:$0xff]
    %v2543 = vld [vmem:[#allocation7 + $0xd0] sm:$0xff]
    %v2544 = vld [vmem:[#allocation7 + $0xd8] sm:$0xff]
    %v2545 = vld [vmem:[#allocation7 + $0xe0] sm:$0xff]
    %v2546 = vld [vmem:[#allocation7 + $0xe8] sm:$0xff]
    %v2547 = vld [vmem:[#allocation7 + $0xf0] sm:$0xff]
    %v2548 = vld [vmem:[#allocation7 + $0xf8] sm:$0xff]
    %v2549 = vld [vmem:[#allocation7 + $0x100] sm:$0xff]
    %v2550 = vld [vmem:[#allocation7 + $0x108] sm:$0xff]
    %v2551 = vld [vmem:[#allocation7 + $0x110] sm:$0xff]
    %v2552 = vld [vmem:[#allocation7 + $0x118] sm:$0xff]
    %v2553 = vld [vmem:[#allocation7 + $0x120] sm:$0xff]
    %v2554 = vld [vmem:[#allocation7 + $0x128] sm:$0xff]
    %v2555 = vld [vmem:[#allocation7 + $0x130] sm:$0xff]
    %v2556 = vld [vmem:[#allocation7 + $0x138] sm:$0xff]
    %v2557 = vld [vmem:[#allocation7 + $0x140] sm:$0xff]
    %v2558 = vld [vmem:[#allocation7 + $0x148] sm:$0xff]
    %v2559 = vld [vmem:[#allocation7 + $0x150] sm:$0xff]
    %v2560 = vld [vmem:[#allocation7 + $0x158] sm:$0xff]
    %v2561 = vld [vmem:[#allocation7 + $0x160] sm:$0xff]
    %v2562 = vld [vmem:[#allocation7 + $0x168] sm:$0xff]
    %v2563 = vld [vmem:[#allocation7 + $0x170] sm:$0xff]
    %v2564 = vld [vmem:[#allocation7 + $0x178] sm:$0xff]
    %v2565 = vld [vmem:[#allocation7 + $0x180] sm:$0xff]
    %v2566 = vld [vmem:[#allocation7 + $0x188] sm:$0xff]
    %v2567 = vld [vmem:[#allocation7 + $0x190] sm:$0xff]
    %v2568 = vld [vmem:[#allocation7 + $0x198] sm:$0xff]
    %v2569 = vld [vmem:[#allocation7 + $0x1a0] sm:$0xff]
    %v2570 = vld [vmem:[#allocation7 + $0x1a8] sm:$0xff]
    %v2571 = vld [vmem:[#allocation7 + $0x1b0] sm:$0xff]
    %v2572 = vld [vmem:[#allocation7 + $0x1b8] sm:$0xff]
    %v2573 = vld [vmem:[#allocation7 + $0x1c0] sm:$0xff]
    %v2574 = vld [vmem:[#allocation7 + $0x1c8] sm:$0xff]
    %v2575 = vld [vmem:[#allocation7 + $0x1d0] sm:$0xff]
    %v2576 = vld [vmem:[#allocation7 + $0x1d8] sm:$0xff]
    %v2577 = vld [vmem:[#allocation7 + $0x1e0] sm:$0xff]
    %v2578 = vld [vmem:[#allocation7 + $0x1e8] sm:$0xff]
    %v2579 = vld [vmem:[#allocation7 + $0x1f0] sm:$0xff]
    %v2580 = vld [vmem:[#allocation7 + $0x1f8] sm:$0xff]
    %v2581 = vld [vmem:[#allocation7 + $0x200] sm:$0xff]
    %v2582 = vld [vmem:[#allocation7 + $0x208] sm:$0xff]
    %v2583 = vld [vmem:[#allocation7 + $0x210] sm:$0xff]
    %v2584 = vld [vmem:[#allocation7 + $0x218] sm:$0xff]
    %v2585 = vld [vmem:[#allocation7 + $0x220] sm:$0xff]
    %v2586 = vld [vmem:[#allocation7 + $0x228] sm:$0xff]
    %v2587 = vld [vmem:[#allocation7 + $0x230] sm:$0xff]
    %v2588 = vld [vmem:[#allocation7 + $0x238] sm:$0xff]
    %v2589 = vld [vmem:[#allocation7 + $0x240] sm:$0xff]
    %v2590 = vld [vmem:[#allocation7 + $0x248] sm:$0xff]
    %v2591 = vld [vmem:[#allocation7 + $0x250] sm:$0xff]
    %v2592 = vld [vmem:[#allocation7 + $0x258] sm:$0xff]
    %v2593 = vld [vmem:[#allocation7 + $0x260] sm:$0xff]
    %v2594 = vld [vmem:[#allocation7 + $0x268] sm:$0xff]
    %v2595 = vld [vmem:[#allocation7 + $0x270] sm:$0xff]
    %v2596 = vld [vmem:[#allocation7 + $0x278] sm:$0xff]
    %v2597 = vld [vmem:[#allocation7 + $0x280] sm:$0xff]
    %v2598 = vld [vmem:[#allocation7 + $0x288] sm:$0xff]
    %v2599 = vld [vmem:[#allocation7 + $0x290] sm:$0xff]
    %v2600 = vld [vmem:[#allocation7 + $0x298] sm:$0xff]
    %v2601 = vld [vmem:[#allocation7 + $0x2a0] sm:$0xff]
    %v2602 = vld [vmem:[#allocation7 + $0x2a8] sm:$0xff]
    %v2603 = vld [vmem:[#allocation7 + $0x2b0] sm:$0xff]
    %v2604 = vld [vmem:[#allocation7 + $0x2b8] sm:$0xff]
    %v2605 = vld [vmem:[#allocation7 + $0x2c0] sm:$0xff]
    %v2606 = vld [vmem:[#allocation7 + $0x2c8] sm:$0xff]
    %v2607 = vld [vmem:[#allocation7 + $0x2d0] sm:$0xff]
    %v2608 = vld [vmem:[#allocation7 + $0x2d8] sm:$0xff]
    %v2609 = vld [vmem:[#allocation7 + $0x2e0] sm:$0xff]
    %v2610 = vld [vmem:[#allocation7 + $0x2e8] sm:$0xff]
    %v2611 = vld [vmem:[#allocation7 + $0x2f0] sm:$0xff]
    %v2612 = vld [vmem:[#allocation7 + $0x2f8] sm:$0xff]
    %v2613 = vld [vmem:[#allocation7 + $0x300] sm:$0xff]
    %v2614 = vld [vmem:[#allocation7 + $0x308] sm:$0xff]
    %v2615 = vld [vmem:[#allocation7 + $0x310] sm:$0xff]
    %v2616 = vld [vmem:[#allocation7 + $0x318] sm:$0xff]
    %v2617 = vld [vmem:[#allocation7 + $0x320] sm:$0xff]
    %v2618 = vld [vmem:[#allocation7 + $0x328] sm:$0xff]
    %v2619 = vld [vmem:[#allocation7 + $0x330] sm:$0xff]
    %v2620 = vld [vmem:[#allocation7 + $0x338] sm:$0xff]
    %v2621 = vld [vmem:[#allocation7 + $0x340] sm:$0xff]
    %v2622 = vld [vmem:[#allocation7 + $0x348] sm:$0xff]
    %v2623 = vld [vmem:[#allocation7 + $0x350] sm:$0xff]
    %v2624 = vld [vmem:[#allocation7 + $0x358] sm:$0xff]
    %v2625 = vld [vmem:[#allocation7 + $0x360] sm:$0xff]
    %v2626 = vld [vmem:[#allocation7 + $0x368] sm:$0xff]
    %v2627 = vld [vmem:[#allocation7 + $0x370] sm:$0xff]
    %v2628 = vld [vmem:[#allocation7 + $0x378] sm:$0xff]
    %v2629 = vld [vmem:[#allocation7 + $0x380] sm:$0xff]
    %v2630 = vld [vmem:[#allocation7 + $0x388] sm:$0xff]
    %v2631 = vld [vmem:[#allocation7 + $0x390] sm:$0xff]
    %v2632 = vld [vmem:[#allocation7 + $0x398] sm:$0xff]
    %v2633 = vld [vmem:[#allocation7 + $0x3a0] sm:$0xff]
    %v2634 = vld [vmem:[#allocation7 + $0x3a8] sm:$0xff]
    %v2635 = vld [vmem:[#allocation7 + $0x3b0] sm:$0xff]
    %v2636 = vld [vmem:[#allocation7 + $0x3b8] sm:$0xff]
    %v2637 = vld [vmem:[#allocation7 + $0x3c0] sm:$0xff]
    %v2638 = vld [vmem:[#allocation7 + $0x3c8] sm:$0xff]
    %v2639 = vld [vmem:[#allocation7 + $0x3d0] sm:$0xff]
    %v2640 = vld [vmem:[#allocation7 + $0x3d8] sm:$0xff]
    %v2641 = vld [vmem:[#allocation7 + $0x3e0] sm:$0xff]
    %v2642 = vld [vmem:[#allocation7 + $0x3e8] sm:$0xff]
    %v2643 = vld [vmem:[#allocation7 + $0x3f0] sm:$0xff]
    %v2644 = vld [vmem:[#allocation7 + $0x3f8] sm:$0xff]
    %v2645 = vld [vmem:[%s4] sm:$0xf]
    %v2647 = vlaneseq
    %v2648 = vshrl.u32 %v2647, 7
    %v2649 = vsub.s32 0, %v2648
    %v2650 = vrot.slane %v2645, %v2649
    %v2651 = vlaneseq
    %v2652 = vshrl.u32 %v2651, 7
    %v2653 = vsub.s32 1, %v2652
    %v2654 = vrot.slane %v2645, %v2653
    %v2655 = vlaneseq
    %v2656 = vshrl.u32 %v2655, 7
    %v2657 = vsub.s32 2, %v2656
    %v2658 = vrot.slane %v2645, %v2657
    %v2659 = vlaneseq
    %v2660 = vshrl.u32 %v2659, 7
    %v2661 = vsub.s32 3, %v2660
    %v2662 = vrot.slane %v2645, %v2661
    %2667 = vmatprep.subr.mxu0 %v2518
    %2668 = vmatpush1.msra.mxu0 %v2517
    %2669 = vmatprep.subr.mxu0 %v2522
    %2670 = vmatpush1.msra.mxu0 %v2521
    %2671 = vmatprep.subr.mxu0 %v2526
    %2672 = vmatpush1.msra.mxu0 %v2525
    %2673 = vmatprep.subr.mxu0 %v2530
    %2674 = vmatpush1.msra.mxu0 %v2529
    %2675 = vmatprep.subr.mxu0 %v2534
    %2676 = vmatpush1.msra.mxu0 %v2533
    %2677 = vmatprep.subr.mxu0 %v2538
    %2678 = vmatpush1.msra.mxu0 %v2537
    %2679 = vmatprep.subr.mxu0 %v2542
    %2680 = vmatpush1.msra.mxu0 %v2541
    %2681 = vmatprep.subr.mxu0 %v2546
    %2682 = vmatpush1.msra.mxu0 %v2545
    %2683 = vmatprep.subr.mxu0 %v2550
    %2684 = vmatpush1.msra.mxu0 %v2549
    %2685 = vmatprep.subr.mxu0 %v2554
    %2686 = vmatpush1.msra.mxu0 %v2553
    %2687 = vmatprep.subr.mxu0 %v2558
    %2688 = vmatpush1.msra.mxu0 %v2557
    %2689 = vmatprep.subr.mxu0 %v2562
    %2690 = vmatpush1.msra.mxu0 %v2561
    %2691 = vmatprep.subr.mxu0 %v2566
    %2692 = vmatpush1.msra.mxu0 %v2565
    %2693 = vmatprep.subr.mxu0 %v2570
    %2694 = vmatpush1.msra.mxu0 %v2569
    %2695 = vmatprep.subr.mxu0 %v2574
    %2696 = vmatpush1.msra.mxu0 %v2573
    %2697 = vmatprep.subr.mxu0 %v2578
    %2698 = vmatpush1.msra.mxu0 %v2577
    %2699 = vmatprep.subr.mxu0 %v2582
    %2700 = vmatpush1.msra.mxu0 %v2581
    %2701 = vmatprep.subr.mxu0 %v2586
    %2702 = vmatpush1.msra.mxu0 %v2585
    %2703 = vmatprep.subr.mxu0 %v2590
    %2704 = vmatpush1.msra.mxu0 %v2589
    %2705 = vmatprep.subr.mxu0 %v2594
    %2706 = vmatpush1.msra.mxu0 %v2593
    %2707 = vmatprep.subr.mxu0 %v2598
    %2708 = vmatpush1.msra.mxu0 %v2597
    %2709 = vmatprep.subr.mxu0 %v2602
    %2710 = vmatpush1.msra.mxu0 %v2601
    %2711 = vmatprep.subr.mxu0 %v2606
    %2712 = vmatpush1.msra.mxu0 %v2605
    %2713 = vmatprep.subr.mxu0 %v2610
    %2714 = vmatpush1.msra.mxu0 %v2609
    %2715 = vmatprep.subr.mxu0 %v2614
    %2716 = vmatpush1.msra.mxu0 %v2613
    %2717 = vmatprep.subr.mxu0 %v2618
    %2718 = vmatpush1.msra.mxu0 %v2617
    %2719 = vmatprep.subr.mxu0 %v2622
    %2720 = vmatpush1.msra.mxu0 %v2621
    %2721 = vmatprep.subr.mxu0 %v2626
    %2722 = vmatpush1.msra.mxu0 %v2625
    %2723 = vmatprep.subr.mxu0 %v2630
    %2724 = vmatpush1.msra.mxu0 %v2629
    %2725 = vmatprep.subr.mxu0 %v2634
    %2726 = vmatpush1.msra.mxu0 %v2633
    %2727 = vmatprep.subr.mxu0 %v2638
    %2728 = vmatpush1.msra.mxu0 %v2637
    %2729 = vmatprep.subr.mxu0 %v2642
    %2730 = vmatpush1.msra.mxu0 %v2641
    %2731 = vmatprep.mubr.f32.mxu0 %v2421
    %2732 = vmatmul.mubr.f32.gmra.mrb[0].mxu0 %v2516
    %v2733 = vpop.f32.mrb[0].mxu0
    %v2734 = vadd.f32 %v2650, %v2733
    %v2735 = vpop.f32.mrb[0].mxu0
    %v2736 = vadd.f32 %v2654, %v2735
    %2737 = vdwg.mxu0
    %2738 = vmatprep.subr.mxu0 %v2520
    %2739 = vmatpush1.msra.mxu0 %v2519
    %2740 = vmatprep.subr.mxu0 %v2524
    %2741 = vmatpush1.msra.mxu0 %v2523
    %2742 = vmatprep.subr.mxu0 %v2528
    %2743 = vmatpush1.msra.mxu0 %v2527
    %2744 = vmatprep.subr.mxu0 %v2532
    %2745 = vmatpush1.msra.mxu0 %v2531
    %2746 = vmatprep.subr.mxu0 %v2536
    %2747 = vmatpush1.msra.mxu0 %v2535
    %2748 = vmatprep.subr.mxu0 %v2540
    %2749 = vmatpush1.msra.mxu0 %v2539
    %2750 = vmatprep.subr.mxu0 %v2544
    %2751 = vmatpush1.msra.mxu0 %v2543
    %2752 = vmatprep.subr.mxu0 %v2548
    %2753 = vmatpush1.msra.mxu0 %v2547
    %2754 = vmatprep.subr.mxu0 %v2552
    %2755 = vmatpush1.msra.mxu0 %v2551
    %2756 = vmatprep.subr.mxu0 %v2556
    %2757 = vmatpush1.msra.mxu0 %v2555
    %2758 = vmatprep.subr.mxu0 %v2560
    %2759 = vmatpush1.msra.mxu0 %v2559
    %2760 = vmatprep.subr.mxu0 %v2564
    %2761 = vmatpush1.msra.mxu0 %v2563
    %2762 = vmatprep.subr.mxu0 %v2568
    %2763 = vmatpush1.msra.mxu0 %v2567
    %2764 = vmatprep.subr.mxu0 %v2572
    %2765 = vmatpush1.msra.mxu0 %v2571
    %2766 = vmatprep.subr.mxu0 %v2576
    %2767 = vmatpush1.msra.mxu0 %v2575
    %2768 = vmatprep.subr.mxu0 %v2580
    %2769 = vmatpush1.msra.mxu0 %v2579
    %2770 = vmatprep.subr.mxu0 %v2584
    %2771 = vmatpush1.msra.mxu0 %v2583
    %2772 = vmatprep.subr.mxu0 %v2588
    %2773 = vmatpush1.msra.mxu0 %v2587
    %2774 = vmatprep.subr.mxu0 %v2592
    %2775 = vmatpush1.msra.mxu0 %v2591
    %2776 = vmatprep.subr.mxu0 %v2596
    %2777 = vmatpush1.msra.mxu0 %v2595
    %2778 = vmatprep.subr.mxu0 %v2600
    %2779 = vmatpush1.msra.mxu0 %v2599
    %2780 = vmatprep.subr.mxu0 %v2604
    %2781 = vmatpush1.msra.mxu0 %v2603
    %2782 = vmatprep.subr.mxu0 %v2608
    %2783 = vmatpush1.msra.mxu0 %v2607
    %2784 = vmatprep.subr.mxu0 %v2612
    %2785 = vmatpush1.msra.mxu0 %v2611
    %2786 = vmatprep.subr.mxu0 %v2616
    %2787 = vmatpush1.msra.mxu0 %v2615
    %2788 = vmatprep.subr.mxu0 %v2620
    %2789 = vmatpush1.msra.mxu0 %v2619
    %2790 = vmatprep.subr.mxu0 %v2624
    %2791 = vmatpush1.msra.mxu0 %v2623
    %2792 = vmatprep.subr.mxu0 %v2628
    %2793 = vmatpush1.msra.mxu0 %v2627
    %2794 = vmatprep.subr.mxu0 %v2632
    %2795 = vmatpush1.msra.mxu0 %v2631
    %2796 = vmatprep.subr.mxu0 %v2636
    %2797 = vmatpush1.msra.mxu0 %v2635
    %2798 = vmatprep.subr.mxu0 %v2640
    %2799 = vmatpush1.msra.mxu0 %v2639
    %2800 = vmatprep.subr.mxu0 %v2644
    %2801 = vmatpush1.msra.mxu0 %v2643
    %2802 = vmatprep.mubr.f32.mxu0 %v2421
    %2803 = vmatmul.mubr.f32.gmra.mrb[0].mxu0 %v2516
    %v2804 = vpop.f32.mrb[0].mxu0
    %v2805 = vadd.f32 %v2658, %v2804
    %v2806 = vpop.f32.mrb[0].mxu0
    %v2807 = vadd.f32 %v2662, %v2806
    %2808 = vdwg.mxu0
    %v2809 = vxor.u32 %v2734, 2147483648
    %v2810 = vxor.u32 %v2736, 2147483648
    %v2811 = vmul.f32 %v2809, 1.442695
    %v2812 = vpow.pop %v2811
    %v2813 = vmul.f32 %v2810, 1.442695
    %v2814 = vpow.pop %v2813
    %v2815 = vadd.f32 %v2812, 1.0
    %v2816 = vadd.f32 %v2814, 1.0
    %v2817 = vrcp.pop %v2815
    %v2818 = vmul.f32 1.0, %v2817
    %v2819 = vrcp.pop %v2816
    %v2820 = vmul.f32 1.0, %v2819
    %v2821 = vmul.f32 %v2818, %v2807
    %v2822 = vadd.f32 %v2805, %v2821
    %v2823 = vtanh.pop %v2822
    %v2824 = vsub.f32 1.0, %v2820
    %v2825 = vmul.f32 %v2824, %v2823
    %v2826 = vmul.f32 %v2820, %v2421
    %v2827 = vadd.f32 %v2825, %v2826
    %v2828 = vld [vmem:[#allocation9] sm:$0xff]
    %v2829 = vld [vmem:[#allocation9 + $0x8] sm:$0xff]
    %v2830 = vld [vmem:[#allocation9 + $0x10] sm:$0xff]
    %v2831 = vld [vmem:[#allocation9 + $0x18] sm:$0xff]
    %v2832 = vld [vmem:[#allocation9 + $0x20] sm:$0xff]
    %v2833 = vld [vmem:[#allocation9 + $0x28] sm:$0xff]
    %v2834 = vld [vmem:[#allocation9 + $0x30] sm:$0xff]
    %v2835 = vld [vmem:[#allocation9 + $0x38] sm:$0xff]
    %v2836 = vld [vmem:[#allocation9 + $0x40] sm:$0xff]
    %v2837 = vld [vmem:[#allocation9 + $0x48] sm:$0xff]
    %v2838 = vld [vmem:[#allocation9 + $0x50] sm:$0xff]
    %v2839 = vld [vmem:[#allocation9 + $0x58] sm:$0xff]
    %v2840 = vld [vmem:[#allocation9 + $0x60] sm:$0xff]
    %v2841 = vld [vmem:[#allocation9 + $0x68] sm:$0xff]
    %v2842 = vld [vmem:[#allocation9 + $0x70] sm:$0xff]
    %v2843 = vld [vmem:[#allocation9 + $0x78] sm:$0xff]
    %v2844 = vld [vmem:[%s6] sm:$0x1]
    %2845 = vmatprep.subr.mxu0 0.0
    %2846 = vmatpush1.msra.mxu0 %v2828
    %2847 = vmatprep.subr.mxu0 0.0
    %2848 = vmatpush1.msra.mxu0 %v2829
    %2849 = vmatprep.subr.mxu0 0.0
    %2850 = vmatpush1.msra.mxu0 %v2830
    %2851 = vmatprep.subr.mxu0 0.0
    %2852 = vmatpush1.msra.mxu0 %v2831
    %2853 = vmatprep.subr.mxu0 0.0
    %2854 = vmatpush1.msra.mxu0 %v2832
    %2855 = vmatprep.subr.mxu0 0.0
    %2856 = vmatpush1.msra.mxu0 %v2833
    %2857 = vmatprep.subr.mxu0 0.0
    %2858 = vmatpush1.msra.mxu0 %v2834
    %2859 = vmatprep.subr.mxu0 0.0
    %2860 = vmatpush1.msra.mxu0 %v2835
    %2861 = vmatprep.subr.mxu0 0.0
    %2862 = vmatpush1.msra.mxu0 %v2836
    %2863 = vmatprep.subr.mxu0 0.0
    %2864 = vmatpush1.msra.mxu0 %v2837
    %2865 = vmatprep.subr.mxu0 0.0
    %2866 = vmatpush1.msra.mxu0 %v2838
    %2867 = vmatprep.subr.mxu0 0.0
    %2868 = vmatpush1.msra.mxu0 %v2839
    %2869 = vmatprep.subr.mxu0 0.0
    %2870 = vmatpush1.msra.mxu0 %v2840
    %2871 = vmatprep.subr.mxu0 0.0
    %2872 = vmatpush1.msra.mxu0 %v2841
    %2873 = vmatprep.subr.mxu0 0.0
    %2874 = vmatpush1.msra.mxu0 %v2842
    %2875 = vmatprep.subr.mxu0 0.0
    %2876 = vmatpush1.msra.mxu0 %v2843
    %2877 = vmatprep.subr.mxu0 0.0
    %2878 = vmatpush1.msra.mxu0 0.0
    %2879 = vmatprep.subr.mxu0 0.0
    %2880 = vmatpush1.msra.mxu0 0.0
    %2881 = vmatprep.subr.mxu0 0.0
    %2882 = vmatpush1.msra.mxu0 0.0
    %2883 = vmatprep.subr.mxu0 0.0
    %2884 = vmatpush1.msra.mxu0 0.0
    %2885 = vmatprep.subr.mxu0 0.0
    %2886 = vmatpush1.msra.mxu0 0.0
    %2887 = vmatprep.subr.mxu0 0.0
    %2888 = vmatpush1.msra.mxu0 0.0
    %2889 = vmatprep.subr.mxu0 0.0
    %2890 = vmatpush1.msra.mxu0 0.0
    %2891 = vmatprep.subr.mxu0 0.0
    %2892 = vmatpush1.msra.mxu0 0.0
    %2893 = vmatprep.subr.mxu0 0.0
    %2894 = vmatpush1.msra.mxu0 0.0
    %2895 = vmatprep.subr.mxu0 0.0
    %2896 = vmatpush1.msra.mxu0 0.0
    %2897 = vmatprep.subr.mxu0 0.0
    %2898 = vmatpush1.msra.mxu0 0.0
    %2899 = vmatprep.subr.mxu0 0.0
    %2900 = vmatpush1.msra.mxu0 0.0
    %2901 = vmatprep.subr.mxu0 0.0
    %2902 = vmatpush1.msra.mxu0 0.0
    %2903 = vmatprep.subr.mxu0 0.0
    %2904 = vmatpush1.msra.mxu0 0.0
    %2905 = vmatprep.subr.mxu0 0.0
    %2906 = vmatpush1.msra.mxu0 0.0
    %2907 = vmatprep.subr.mxu0 0.0
    %2908 = vmatpush1.msra.mxu0 0.0
    %2909 = vmatprep.mubr.f32.mxu0 0.0
    %2910 = vmatmul.mubr.f32.gmra.mrb[0].mxu0 %v2827
    %v2911 = vpop.f32.mrb[0].mxu0
    %v2912 = vadd.f32 %v2844, %v2911
    %v2913 = vpop.f32.mrb[0].mxu0
    %2914 = vdwg.mxu0
    %2915 = vst [vmem:[#allocation10 + $0x6] sm:$0x1] %v2912
    %s2916 = sld [smem:[#allocation3 + $0x7]]
    %p2917 = scmp.gt.s32.totalorder %s2916, 0
    %s2918 = scalar_select %p2917, %s2916, 0
    %p2919 = scmp.lt.s32.totalorder %s2918, 63
    %s2920 = scalar_select %p2919, %s2918, 63
    %s2921 = scalar_lea.vmem [#allocation4], %s2920
    %v2922 = vld [vmem:[%s2921] sm:$0x1]
    %v2923 = vld [vmem:[#allocation7] sm:$0xff]
    %v2924 = vld [vmem:[#allocation7 + $0x8] sm:$0xff]
    %v2925 = vld [vmem:[#allocation7 + $0x10] sm:$0xff]
    %v2926 = vld [vmem:[#allocation7 + $0x18] sm:$0xff]
    %v2927 = vld [vmem:[#allocation7 + $0x20] sm:$0xff]
    %v2928 = vld [vmem:[#allocation7 + $0x28] sm:$0xff]
    %v2929 = vld [vmem:[#allocation7 + $0x30] sm:$0xff]
    %v2930 = vld [vmem:[#allocation7 + $0x38] sm:$0xff]
    %v2931 = vld [vmem:[#allocation7 + $0x40] sm:$0xff]
    %v2932 = vld [vmem:[#allocation7 + $0x48] sm:$0xff]
    %v2933 = vld [vmem:[#allocation7 + $0x50] sm:$0xff]
    %v2934 = vld [vmem:[#allocation7 + $0x58] sm:$0xff]
    %v2935 = vld [vmem:[#allocation7 + $0x60] sm:$0xff]
    %v2936 = vld [vmem:[#allocation7 + $0x68] sm:$0xff]
    %v2937 = vld [vmem:[#allocation7 + $0x70] sm:$0xff]
    %v2938 = vld [vmem:[#allocation7 + $0x78] sm:$0xff]
    %v2939 = vld [vmem:[#allocation7 + $0x80] sm:$0xff]
    %v2940 = vld [vmem:[#allocation7 + $0x88] sm:$0xff]
    %v2941 = vld [vmem:[#allocation7 + $0x90] sm:$0xff]
    %v2942 = vld [vmem:[#allocation7 + $0x98] sm:$0xff]
    %v2943 = vld [vmem:[#allocation7 + $0xa0] sm:$0xff]
    %v2944 = vld [vmem:[#allocation7 + $0xa8] sm:$0xff]
    %v2945 = vld [vmem:[#allocation7 + $0xb0] sm:$0xff]
    %v2946 = vld [vmem:[#allocation7 + $0xb8] sm:$0xff]
    %v2947 = vld [vmem:[#allocation7 + $0xc0] sm:$0xff]
    %v2948 = vld [vmem:[#allocation7 + $0xc8] sm:$0xff]
    %v2949 = vld [vmem:[#allocation7 + $0xd0] sm:$0xff]
    %v2950 = vld [vmem:[#allocation7 + $0xd8] sm:$0xff]
    %v2951 = vld [vmem:[#allocation7 + $0xe0] sm:$0xff]
    %v2952 = vld [vmem:[#allocation7 + $0xe8] sm:$0xff]
    %v2953 = vld [vmem:[#allocation7 + $0xf0] sm:$0xff]
    %v2954 = vld [vmem:[#allocation7 + $0xf8] sm:$0xff]
    %v2955 = vld [vmem:[#allocation7 + $0x100] sm:$0xff]
    %v2956 = vld [vmem:[#allocation7 + $0x108] sm:$0xff]
    %v2957 = vld [vmem:[#allocation7 + $0x110] sm:$0xff]
    %v2958 = vld [vmem:[#allocation7 + $0x118] sm:$0xff]
    %v2959 = vld [vmem:[#allocation7 + $0x120] sm:$0xff]
    %v2960 = vld [vmem:[#allocation7 + $0x128] sm:$0xff]
    %v2961 = vld [vmem:[#allocation7 + $0x130] sm:$0xff]
    %v2962 = vld [vmem:[#allocation7 + $0x138] sm:$0xff]
    %v2963 = vld [vmem:[#allocation7 + $0x140] sm:$0xff]
    %v2964 = vld [vmem:[#allocation7 + $0x148] sm:$0xff]
    %v2965 = vld [vmem:[#allocation7 + $0x150] sm:$0xff]
    %v2966 = vld [vmem:[#allocation7 + $0x158] sm:$0xff]
    %v2967 = vld [vmem:[#allocation7 + $0x160] sm:$0xff]
    %v2968 = vld [vmem:[#allocation7 + $0x168] sm:$0xff]
    %v2969 = vld [vmem:[#allocation7 + $0x170] sm:$0xff]
    %v2970 = vld [vmem:[#allocation7 + $0x178] sm:$0xff]
    %v2971 = vld [vmem:[#allocation7 + $0x180] sm:$0xff]
    %v2972 = vld [vmem:[#allocation7 + $0x188] sm:$0xff]
    %v2973 = vld [vmem:[#allocation7 + $0x190] sm:$0xff]
    %v2974 = vld [vmem:[#allocation7 + $0x198] sm:$0xff]
    %v2975 = vld [vmem:[#allocation7 + $0x1a0] sm:$0xff]
    %v2976 = vld [vmem:[#allocation7 + $0x1a8] sm:$0xff]
    %v2977 = vld [vmem:[#allocation7 + $0x1b0] sm:$0xff]
    %v2978 = vld [vmem:[#allocation7 + $0x1b8] sm:$0xff]
    %v2979 = vld [vmem:[#allocation7 + $0x1c0] sm:$0xff]
    %v2980 = vld [vmem:[#allocation7 + $0x1c8] sm:$0xff]
    %v2981 = vld [vmem:[#allocation7 + $0x1d0] sm:$0xff]
    %v2982 = vld [vmem:[#allocation7 + $0x1d8] sm:$0xff]
    %v2983 = vld [vmem:[#allocation7 + $0x1e0] sm:$0xff]
    %v2984 = vld [vmem:[#allocation7 + $0x1e8] sm:$0xff]
    %v2985 = vld [vmem:[#allocation7 + $0x1f0] sm:$0xff]
    %v2986 = vld [vmem:[#allocation7 + $0x1f8] sm:$0xff]
    %v2987 = vld [vmem:[#allocation7 + $0x200] sm:$0xff]
    %v2988 = vld [vmem:[#allocation7 + $0x208] sm:$0xff]
    %v2989 = vld [vmem:[#allocation7 + $0x210] sm:$0xff]
    %v2990 = vld [vmem:[#allocation7 + $0x218] sm:$0xff]
    %v2991 = vld [vmem:[#allocation7 + $0x220] sm:$0xff]
    %v2992 = vld [vmem:[#allocation7 + $0x228] sm:$0xff]
    %v2993 = vld [vmem:[#allocation7 + $0x230] sm:$0xff]
    %v2994 = vld [vmem:[#allocation7 + $0x238] sm:$0xff]
    %v2995 = vld [vmem:[#allocation7 + $0x240] sm:$0xff]
    %v2996 = vld [vmem:[#allocation7 + $0x248] sm:$0xff]
    %v2997 = vld [vmem:[#allocation7 + $0x250] sm:$0xff]
    %v2998 = vld [vmem:[#allocation7 + $0x258] sm:$0xff]
    %v2999 = vld [vmem:[#allocation7 + $0x260] sm:$0xff]
    %v3000 = vld [vmem:[#allocation7 + $0x268] sm:$0xff]
    %v3001 = vld [vmem:[#allocation7 + $0x270] sm:$0xff]
    %v3002 = vld [vmem:[#allocation7 + $0x278] sm:$0xff]
    %v3003 = vld [vmem:[#allocation7 + $0x280] sm:$0xff]
    %v3004 = vld [vmem:[#allocation7 + $0x288] sm:$0xff]
    %v3005 = vld [vmem:[#allocation7 + $0x290] sm:$0xff]
    %v3006 = vld [vmem:[#allocation7 + $0x298] sm:$0xff]
    %v3007 = vld [vmem:[#allocation7 + $0x2a0] sm:$0xff]
    %v3008 = vld [vmem:[#allocation7 + $0x2a8] sm:$0xff]
    %v3009 = vld [vmem:[#allocation7 + $0x2b0] sm:$0xff]
    %v3010 = vld [vmem:[#allocation7 + $0x2b8] sm:$0xff]
    %v3011 = vld [vmem:[#allocation7 + $0x2c0] sm:$0xff]
    %v3012 = vld [vmem:[#allocation7 + $0x2c8] sm:$0xff]
    %v3013 = vld [vmem:[#allocation7 + $0x2d0] sm:$0xff]
    %v3014 = vld [vmem:[#allocation7 + $0x2d8] sm:$0xff]
    %v3015 = vld [vmem:[#allocation7 + $0x2e0] sm:$0xff]
    %v3016 = vld [vmem:[#allocation7 + $0x2e8] sm:$0xff]
    %v3017 = vld [vmem:[#allocation7 + $0x2f0] sm:$0xff]
    %v3018 = vld [vmem:[#allocation7 + $0x2f8] sm:$0xff]
    %v3019 = vld [vmem:[#allocation7 + $0x300] sm:$0xff]
    %v3020 = vld [vmem:[#allocation7 + $0x308] sm:$0xff]
    %v3021 = vld [vmem:[#allocation7 + $0x310] sm:$0xff]
    %v3022 = vld [vmem:[#allocation7 + $0x318] sm:$0xff]
    %v3023 = vld [vmem:[#allocation7 + $0x320] sm:$0xff]
    %v3024 = vld [vmem:[#allocation7 + $0x328] sm:$0xff]
    %v3025 = vld [vmem:[#allocation7 + $0x330] sm:$0xff]
    %v3026 = vld [vmem:[#allocation7 + $0x338] sm:$0xff]
    %v3027 = vld [vmem:[#allocation7 + $0x340] sm:$0xff]
    %v3028 = vld [vmem:[#allocation7 + $0x348] sm:$0xff]
    %v3029 = vld [vmem:[#allocation7 + $0x350] sm:$0xff]
    %v3030 = vld [vmem:[#allocation7 + $0x358] sm:$0xff]
    %v3031 = vld [vmem:[#allocation7 + $0x360] sm:$0xff]
    %v3032 = vld [vmem:[#allocation7 + $0x368] sm:$0xff]
    %v3033 = vld [vmem:[#allocation7 + $0x370] sm:$0xff]
    %v3034 = vld [vmem:[#allocation7 + $0x378] sm:$0xff]
    %v3035 = vld [vmem:[#allocation7 + $0x380] sm:$0xff]
    %v3036 = vld [vmem:[#allocation7 + $0x388] sm:$0xff]
    %v3037 = vld [vmem:[#allocation7 + $0x390] sm:$0xff]
    %v3038 = vld [vmem:[#allocation7 + $0x398] sm:$0xff]
    %v3039 = vld [vmem:[#allocation7 + $0x3a0] sm:$0xff]
    %v3040 = vld [vmem:[#allocation7 + $0x3a8] sm:$0xff]
    %v3041 = vld [vmem:[#allocation7 + $0x3b0] sm:$0xff]
    %v3042 = vld [vmem:[#allocation7 + $0x3b8] sm:$0xff]
    %v3043 = vld [vmem:[#allocation7 + $0x3c0] sm:$0xff]
    %v3044 = vld [vmem:[#allocation7 + $0x3c8] sm:$0xff]
    %v3045 = vld [vmem:[#allocation7 + $0x3d0] sm:$0xff]
    %v3046 = vld [vmem:[#allocation7 + $0x3d8] sm:$0xff]
    %v3047 = vld [vmem:[#allocation7 + $0x3e0] sm:$0xff]
    %v3048 = vld [vmem:[#allocation7 + $0x3e8] sm:$0xff]
    %v3049 = vld [vmem:[#allocation7 + $0x3f0] sm:$0xff]
    %v3050 = vld [vmem:[#allocation7 + $0x3f8] sm:$0xff]
    %v3051 = vld [vmem:[%s4] sm:$0xf]
    %v3053 = vlaneseq
    %v3054 = vshrl.u32 %v3053, 7
    %v3055 = vsub.s32 0, %v3054
    %v3056 = vrot.slane %v3051, %v3055
    %v3057 = vlaneseq
    %v3058 = vshrl.u32 %v3057, 7
    %v3059 = vsub.s32 1, %v3058
    %v3060 = vrot.slane %v3051, %v3059
    %v3061 = vlaneseq
    %v3062 = vshrl.u32 %v3061, 7
    %v3063 = vsub.s32 2, %v3062
    %v3064 = vrot.slane %v3051, %v3063
    %v3065 = vlaneseq
    %v3066 = vshrl.u32 %v3065, 7
    %v3067 = vsub.s32 3, %v3066
    %v3068 = vrot.slane %v3051, %v3067
    %3073 = vmatprep.subr.mxu0 %v2924
    %3074 = vmatpush1.msra.mxu0 %v2923
    %3075 = vmatprep.subr.mxu0 %v2928
    %3076 = vmatpush1.msra.mxu0 %v2927
    %3077 = vmatprep.subr.mxu0 %v2932
    %3078 = vmatpush1.msra.mxu0 %v2931
    %3079 = vmatprep.subr.mxu0 %v2936
    %3080 = vmatpush1.msra.mxu0 %v2935
    %3081 = vmatprep.subr.mxu0 %v2940
    %3082 = vmatpush1.msra.mxu0 %v2939
    %3083 = vmatprep.subr.mxu0 %v2944
    %3084 = vmatpush1.msra.mxu0 %v2943
    %3085 = vmatprep.subr.mxu0 %v2948
    %3086 = vmatpush1.msra.mxu0 %v2947
    %3087 = vmatprep.subr.mxu0 %v2952
    %3088 = vmatpush1.msra.mxu0 %v2951
    %3089 = vmatprep.subr.mxu0 %v2956
    %3090 = vmatpush1.msra.mxu0 %v2955
    %3091 = vmatprep.subr.mxu0 %v2960
    %3092 = vmatpush1.msra.mxu0 %v2959
    %3093 = vmatprep.subr.mxu0 %v2964
    %3094 = vmatpush1.msra.mxu0 %v2963
    %3095 = vmatprep.subr.mxu0 %v2968
    %3096 = vmatpush1.msra.mxu0 %v2967
    %3097 = vmatprep.subr.mxu0 %v2972
    %3098 = vmatpush1.msra.mxu0 %v2971
    %3099 = vmatprep.subr.mxu0 %v2976
    %3100 = vmatpush1.msra.mxu0 %v2975
    %3101 = vmatprep.subr.mxu0 %v2980
    %3102 = vmatpush1.msra.mxu0 %v2979
    %3103 = vmatprep.subr.mxu0 %v2984
    %3104 = vmatpush1.msra.mxu0 %v2983
    %3105 = vmatprep.subr.mxu0 %v2988
    %3106 = vmatpush1.msra.mxu0 %v2987
    %3107 = vmatprep.subr.mxu0 %v2992
    %3108 = vmatpush1.msra.mxu0 %v2991
    %3109 = vmatprep.subr.mxu0 %v2996
    %3110 = vmatpush1.msra.mxu0 %v2995
    %3111 = vmatprep.subr.mxu0 %v3000
    %3112 = vmatpush1.msra.mxu0 %v2999
    %3113 = vmatprep.subr.mxu0 %v3004
    %3114 = vmatpush1.msra.mxu0 %v3003
    %3115 = vmatprep.subr.mxu0 %v3008
    %3116 = vmatpush1.msra.mxu0 %v3007
    %3117 = vmatprep.subr.mxu0 %v3012
    %3118 = vmatpush1.msra.mxu0 %v3011
    %3119 = vmatprep.subr.mxu0 %v3016
    %3120 = vmatpush1.msra.mxu0 %v3015
    %3121 = vmatprep.subr.mxu0 %v3020
    %3122 = vmatpush1.msra.mxu0 %v3019
    %3123 = vmatprep.subr.mxu0 %v3024
    %3124 = vmatpush1.msra.mxu0 %v3023
    %3125 = vmatprep.subr.mxu0 %v3028
    %3126 = vmatpush1.msra.mxu0 %v3027
    %3127 = vmatprep.subr.mxu0 %v3032
    %3128 = vmatpush1.msra.mxu0 %v3031
    %3129 = vmatprep.subr.mxu0 %v3036
    %3130 = vmatpush1.msra.mxu0 %v3035
    %3131 = vmatprep.subr.mxu0 %v3040
    %3132 = vmatpush1.msra.mxu0 %v3039
    %3133 = vmatprep.subr.mxu0 %v3044
    %3134 = vmatpush1.msra.mxu0 %v3043
    %3135 = vmatprep.subr.mxu0 %v3048
    %3136 = vmatpush1.msra.mxu0 %v3047
    %3137 = vmatprep.mubr.f32.mxu0 %v2827
    %3138 = vmatmul.mubr.f32.gmra.mrb[0].mxu0 %v2922
    %v3139 = vpop.f32.mrb[0].mxu0
    %v3140 = vadd.f32 %v3056, %v3139
    %v3141 = vpop.f32.mrb[0].mxu0
    %v3142 = vadd.f32 %v3060, %v3141
    %3143 = vdwg.mxu0
    %3144 = vmatprep.subr.mxu0 %v2926
    %3145 = vmatpush1.msra.mxu0 %v2925
    %3146 = vmatprep.subr.mxu0 %v2930
    %3147 = vmatpush1.msra.mxu0 %v2929
    %3148 = vmatprep.subr.mxu0 %v2934
    %3149 = vmatpush1.msra.mxu0 %v2933
    %3150 = vmatprep.subr.mxu0 %v2938
    %3151 = vmatpush1.msra.mxu0 %v2937
    %3152 = vmatprep.subr.mxu0 %v2942
    %3153 = vmatpush1.msra.mxu0 %v2941
    %3154 = vmatprep.subr.mxu0 %v2946
    %3155 = vmatpush1.msra.mxu0 %v2945
    %3156 = vmatprep.subr.mxu0 %v2950
    %3157 = vmatpush1.msra.mxu0 %v2949
    %3158 = vmatprep.subr.mxu0 %v2954
    %3159 = vmatpush1.msra.mxu0 %v2953
    %3160 = vmatprep.subr.mxu0 %v2958
    %3161 = vmatpush1.msra.mxu0 %v2957
    %3162 = vmatprep.subr.mxu0 %v2962
    %3163 = vmatpush1.msra.mxu0 %v2961
    %3164 = vmatprep.subr.mxu0 %v2966
    %3165 = vmatpush1.msra.mxu0 %v2965
    %3166 = vmatprep.subr.mxu0 %v2970
    %3167 = vmatpush1.msra.mxu0 %v2969
    %3168 = vmatprep.subr.mxu0 %v2974
    %3169 = vmatpush1.msra.mxu0 %v2973
    %3170 = vmatprep.subr.mxu0 %v2978
    %3171 = vmatpush1.msra.mxu0 %v2977
    %3172 = vmatprep.subr.mxu0 %v2982
    %3173 = vmatpush1.msra.mxu0 %v2981
    %3174 = vmatprep.subr.mxu0 %v2986
    %3175 = vmatpush1.msra.mxu0 %v2985
    %3176 = vmatprep.subr.mxu0 %v2990
    %3177 = vmatpush1.msra.mxu0 %v2989
    %3178 = vmatprep.subr.mxu0 %v2994
    %3179 = vmatpush1.msra.mxu0 %v2993
    %3180 = vmatprep.subr.mxu0 %v2998
    %3181 = vmatpush1.msra.mxu0 %v2997
    %3182 = vmatprep.subr.mxu0 %v3002
    %3183 = vmatpush1.msra.mxu0 %v3001
    %3184 = vmatprep.subr.mxu0 %v3006
    %3185 = vmatpush1.msra.mxu0 %v3005
    %3186 = vmatprep.subr.mxu0 %v3010
    %3187 = vmatpush1.msra.mxu0 %v3009
    %3188 = vmatprep.subr.mxu0 %v3014
    %3189 = vmatpush1.msra.mxu0 %v3013
    %3190 = vmatprep.subr.mxu0 %v3018
    %3191 = vmatpush1.msra.mxu0 %v3017
    %3192 = vmatprep.subr.mxu0 %v3022
    %3193 = vmatpush1.msra.mxu0 %v3021
    %3194 = vmatprep.subr.mxu0 %v3026
    %3195 = vmatpush1.msra.mxu0 %v3025
    %3196 = vmatprep.subr.mxu0 %v3030
    %3197 = vmatpush1.msra.mxu0 %v3029
    %3198 = vmatprep.subr.mxu0 %v3034
    %3199 = vmatpush1.msra.mxu0 %v3033
    %3200 = vmatprep.subr.mxu0 %v3038
    %3201 = vmatpush1.msra.mxu0 %v3037
    %3202 = vmatprep.subr.mxu0 %v3042
    %3203 = vmatpush1.msra.mxu0 %v3041
    %3204 = vmatprep.subr.mxu0 %v3046
    %3205 = vmatpush1.msra.mxu0 %v3045
    %3206 = vmatprep.subr.mxu0 %v3050
    %3207 = vmatpush1.msra.mxu0 %v3049
    %3208 = vmatprep.mubr.f32.mxu0 %v2827
    %3209 = vmatmul.mubr.f32.gmra.mrb[0].mxu0 %v2922
    %v3210 = vpop.f32.mrb[0].mxu0
    %v3211 = vadd.f32 %v3064, %v3210
    %v3212 = vpop.f32.mrb[0].mxu0
    %v3213 = vadd.f32 %v3068, %v3212
    %3214 = vdwg.mxu0
    %v3215 = vxor.u32 %v3140, 2147483648
    %v3216 = vxor.u32 %v3142, 2147483648
    %v3217 = vmul.f32 %v3215, 1.442695
    %v3218 = vpow.pop %v3217
    %v3219 = vmul.f32 %v3216, 1.442695
    %v3220 = vpow.pop %v3219
    %v3221 = vadd.f32 %v3218, 1.0
    %v3222 = vadd.f32 %v3220, 1.0
    %v3223 = vrcp.pop %v3221
    %v3224 = vmul.f32 1.0, %v3223
    %v3225 = vrcp.pop %v3222
    %v3226 = vmul.f32 1.0, %v3225
    %v3227 = vmul.f32 %v3224, %v3213
    %v3228 = vadd.f32 %v3211, %v3227
    %v3229 = vtanh.pop %v3228
    %v3230 = vsub.f32 1.0, %v3226
    %v3231 = vmul.f32 %v3230, %v3229
    %v3232 = vmul.f32 %v3226, %v2827
    %v3233 = vadd.f32 %v3231, %v3232
    %v3234 = vld [vmem:[#allocation9] sm:$0xff]
    %v3235 = vld [vmem:[#allocation9 + $0x8] sm:$0xff]
    %v3236 = vld [vmem:[#allocation9 + $0x10] sm:$0xff]
    %v3237 = vld [vmem:[#allocation9 + $0x18] sm:$0xff]
    %v3238 = vld [vmem:[#allocation9 + $0x20] sm:$0xff]
    %v3239 = vld [vmem:[#allocation9 + $0x28] sm:$0xff]
    %v3240 = vld [vmem:[#allocation9 + $0x30] sm:$0xff]
    %v3241 = vld [vmem:[#allocation9 + $0x38] sm:$0xff]
    %v3242 = vld [vmem:[#allocation9 + $0x40] sm:$0xff]
    %v3243 = vld [vmem:[#allocation9 + $0x48] sm:$0xff]
    %v3244 = vld [vmem:[#allocation9 + $0x50] sm:$0xff]
    %v3245 = vld [vmem:[#allocation9 + $0x58] sm:$0xff]
    %v3246 = vld [vmem:[#allocation9 + $0x60] sm:$0xff]
    %v3247 = vld [vmem:[#allocation9 + $0x68] sm:$0xff]
    %v3248 = vld [vmem:[#allocation9 + $0x70] sm:$0xff]
    %v3249 = vld [vmem:[#allocation9 + $0x78] sm:$0xff]
    %v3250 = vld [vmem:[%s6] sm:$0x1]
    %3251 = vmatprep.subr.mxu0 0.0
    %3252 = vmatpush1.msra.mxu0 %v3234
    %3253 = vmatprep.subr.mxu0 0.0
    %3254 = vmatpush1.msra.mxu0 %v3235
    %3255 = vmatprep.subr.mxu0 0.0
    %3256 = vmatpush1.msra.mxu0 %v3236
    %3257 = vmatprep.subr.mxu0 0.0
    %3258 = vmatpush1.msra.mxu0 %v3237
    %3259 = vmatprep.subr.mxu0 0.0
    %3260 = vmatpush1.msra.mxu0 %v3238
    %3261 = vmatprep.subr.mxu0 0.0
    %3262 = vmatpush1.msra.mxu0 %v3239
    %3263 = vmatprep.subr.mxu0 0.0
    %3264 = vmatpush1.msra.mxu0 %v3240
    %3265 = vmatprep.subr.mxu0 0.0
    %3266 = vmatpush1.msra.mxu0 %v3241
    %3267 = vmatprep.subr.mxu0 0.0
    %3268 = vmatpush1.msra.mxu0 %v3242
    %3269 = vmatprep.subr.mxu0 0.0
    %3270 = vmatpush1.msra.mxu0 %v3243
    %3271 = vmatprep.subr.mxu0 0.0
    %3272 = vmatpush1.msra.mxu0 %v3244
    %3273 = vmatprep.subr.mxu0 0.0
    %3274 = vmatpush1.msra.mxu0 %v3245
    %3275 = vmatprep.subr.mxu0 0.0
    %3276 = vmatpush1.msra.mxu0 %v3246
    %3277 = vmatprep.subr.mxu0 0.0
    %3278 = vmatpush1.msra.mxu0 %v3247
    %3279 = vmatprep.subr.mxu0 0.0
    %3280 = vmatpush1.msra.mxu0 %v3248
    %3281 = vmatprep.subr.mxu0 0.0
    %3282 = vmatpush1.msra.mxu0 %v3249
    %3283 = vmatprep.subr.mxu0 0.0
    %3284 = vmatpush1.msra.mxu0 0.0
    %3285 = vmatprep.subr.mxu0 0.0
    %3286 = vmatpush1.msra.mxu0 0.0
    %3287 = vmatprep.subr.mxu0 0.0
    %3288 = vmatpush1.msra.mxu0 0.0
    %3289 = vmatprep.subr.mxu0 0.0
    %3290 = vmatpush1.msra.mxu0 0.0
    %3291 = vmatprep.subr.mxu0 0.0
    %3292 = vmatpush1.msra.mxu0 0.0
    %3293 = vmatprep.subr.mxu0 0.0
    %3294 = vmatpush1.msra.mxu0 0.0
    %3295 = vmatprep.subr.mxu0 0.0
    %3296 = vmatpush1.msra.mxu0 0.0
    %3297 = vmatprep.subr.mxu0 0.0
    %3298 = vmatpush1.msra.mxu0 0.0
    %3299 = vmatprep.subr.mxu0 0.0
    %3300 = vmatpush1.msra.mxu0 0.0
    %3301 = vmatprep.subr.mxu0 0.0
    %3302 = vmatpush1.msra.mxu0 0.0
    %3303 = vmatprep.subr.mxu0 0.0
    %3304 = vmatpush1.msra.mxu0 0.0
    %3305 = vmatprep.subr.mxu0 0.0
    %3306 = vmatpush1.msra.mxu0 0.0
    %3307 = vmatprep.subr.mxu0 0.0
    %3308 = vmatpush1.msra.mxu0 0.0
    %3309 = vmatprep.subr.mxu0 0.0
    %3310 = vmatpush1.msra.mxu0 0.0
    %3311 = vmatprep.subr.mxu0 0.0
    %3312 = vmatpush1.msra.mxu0 0.0
    %3313 = vmatprep.subr.mxu0 0.0
    %3314 = vmatpush1.msra.mxu0 0.0
    %3315 = vmatprep.mubr.f32.mxu0 0.0
    %3316 = vmatmul.mubr.f32.gmra.mrb[0].mxu0 %v3233
    %v3317 = vpop.f32.mrb[0].mxu0
    %v3318 = vadd.f32 %v3250, %v3317
    %v3319 = vpop.f32.mrb[0].mxu0
    %3320 = vdwg.mxu0
    %3321 = vst [vmem:[#allocation10 + $0x7] sm:$0x1] %v3318
    %3322 = vst [vmem:[#allocation11] sm:$0x1] %v3233
    // Predicated region
    $region38: #{tpu_custom_call.1} parent=1 // pred_check
      _
    $region39: #{tpu_custom_call.1} parent=1 // pred_check_branch
      %3324 = sbr.rel (0) target = $region41
    $region40: #{tpu_custom_call.1} parent=1 // pred_region
      %s3326 = ssub.s32 128, 128
      %3327 = vsyncadd [#allocation6], %s3326
      %s3329 = sshll.u32 [#allocation10], 4
      %s3330 = int_to_ptr.vmem [resolvable:$true] %s3329
      %3332 = dma.vmem_to_hbm [thread:$0]  %s3330, 128, %s7, [#allocation6]
    $region41: #{tpu_custom_call.1} parent=1 // pred_fallthru
      _
    // Predicated region
    $region42: #{tpu_custom_call.1} parent=1 // pred_check
      _
    $region43: #{tpu_custom_call.1} parent=1 // pred_check_branch
      %3334 = sbr.rel (0) target = $region45
    $region44: #{tpu_custom_call.1} parent=1 // pred_region
      %s3336 = ssub.s32 16, 16
      %3337 = vsyncadd [#allocation12], %s3336
      %s3339 = sshll.u32 [#allocation11], 4
      %s3340 = int_to_ptr.vmem [resolvable:$true] %s3339
      %3342 = dma.vmem_to_hbm [thread:$0]  %s3340, 16, %s8, [#allocation12]
    $region45: #{tpu_custom_call.1} parent=1 // pred_fallthru
      _
    // Predicated region
    $region46: #{tpu_custom_call.1} parent=1 // pred_check
      _
    $region47: #{tpu_custom_call.1} parent=1 // pred_check_branch
      %3344 = sbr.rel (0) target = $region49
    $region48: #{tpu_custom_call.1} parent=1 // pred_region
      %3345 = dma.done [#allocation6], 128
    $region49: #{tpu_custom_call.1} parent=1 // pred_fallthru
      _
    // Predicated region
    $region50: #{tpu_custom_call.1} parent=1 // pred_check
      _
    $region51: #{tpu_custom_call.1} parent=1 // pred_check_branch
      %3347 = sbr.rel (0) target = $region53
    $region52: #{tpu_custom_call.1} parent=1 // pred_region
      %3348 = dma.done [#allocation12], 16
    $region53: #{tpu_custom_call.1} parent=1 // pred_fallthru
      _
    %3349 = vsyncpa [#allocation5], 1
    %3350 = vsyncpa [#allocation8], 1
    %3351 = vsyncpa [#allocation6], 1
    %3352 = vsyncpa [#allocation12], 1

</llo_original>
